<compile_context>
chip_gen: v7x
topology: tpu7x:2x2x1
jax: 0.10.0
libtpu: 0.0.40
codegen_flags: <defaults>
</compile_context>

<pallas_src>
import functools

import jax
import jax.numpy as jnp
import numpy as np
from jax import lax
from jax.experimental import pallas as pl
from jax.experimental.pallas import tpu as pltpu

F32 = jnp.float32
BF16 = jnp.bfloat16
_LN_EPS = 1e-5
_L2_EPS = 1e-12
_LEAKY_SLOPE = 0.01
LANE = 128
SUB = 8


# ---------------------------------------------------------------------------
# Fused Pallas kernel: MLP + GraphwiseLayerNorm (x2) + 3x SAGEConv + readout
# ---------------------------------------------------------------------------

def fused_forward_kernel(
    x_ref, adj_ref, invdeg_ref, seg_ref, segt_ref, inv1_ref, inv2_ref,
    w1_ref, b1_ref, g1_ref, be1_ref,
    w2_ref, b2_ref, g2_ref, be2_ref,
    swlr_ref, sbl_ref,
    fw_ref, fb_ref,
    out_ref,
    *, d_exp, d_gs_in, n_real, num_layers, normalize):
    """Whole forward (post-embedding) on VMEM-resident tensors.

    x:      [Np, Dp]   padded node features (pad lanes / pad rows are zero)
    adj:    [Np, Np]   bf16 edge counts A[dst, src] (exact small integers)
    invdeg: [Np, 1]    f32 1/max(in_degree, 1)   (mean aggregation)
    seg:    [Np, Gp]   one-hot graph membership (padded rows/cols are zero)
    segt:   [Gp, Np]   transposed membership
    inv*:   [Gp, 1]    1 / (n_g * D_logical) for the two LayerNorm stages
    swlr:   [L, 2*Dp, Dp] bf16 stacked [wl; wr] per SAGE layer
    """
    seg = seg_ref[...]
    segt = segt_ref[...]
    np_rows, dp = x_ref.shape
    gp = seg.shape[1]

    # --- masks hoisted out of graph_ln (built once, closed over) ----------
    lane = lax.broadcasted_iota(jnp.int32, (1, dp), 1)
    mask_exp = (lane < d_exp).astype(F32)
    mask_gs = (lane < d_gs_in).astype(F32)
    row = lax.broadcasted_iota(jnp.int32, (np_rows, 1), 0)
    row_mask = (row < n_real).astype(F32)

    def leaky(y):
        return jnp.where(y > 0, y, _LEAKY_SLOPE * y)

    def graph_ln(x, inv, gamma, beta, mask):
        # Two-pass per-graph-segment layer norm (mean, then centered variance).
        # Broadcast-back is done lane-dense: per-graph scalars are widened to
        # [Gp, Dp] before the seg @ (.) MXU pass so the result is [Np, Dp].
        s1 = jnp.dot(segt, x, preferred_element_type=F32)               # [Gp, Dp]
        mean_g = jnp.sum(s1, axis=1, keepdims=True) * inv                # [Gp, 1]
        mean_n = jnp.dot(seg, jnp.broadcast_to(mean_g, (gp, dp)),
                         preferred_element_type=F32)                     # [Np, Dp]
        c = (x - mean_n) * mask                                          # pad lanes -> 0
        s2 = jnp.dot(segt, c * c, preferred_element_type=F32)            # [Gp, Dp]
        var_g = jnp.sum(s2, axis=1, keepdims=True) * inv                 # [Gp, 1]
        var_n = jnp.dot(seg, jnp.broadcast_to(var_g, (gp, dp)),
                        preferred_element_type=F32)                      # [Np, Dp]
        return c * lax.rsqrt(var_n + _LN_EPS) * gamma + beta

    # --- node-feature MLP: Linear + LeakyReLU + GraphwiseLayerNorm (x2) ---
    x = x_ref[...]
    x = jnp.dot(x.astype(BF16), w1_ref[...], preferred_element_type=F32) + b1_ref[...]
    x = leaky(x) * row_mask
    x = graph_ln(x, inv1_ref[...], g1_ref[...], be1_ref[...], mask_exp)
    x = jnp.dot(x.astype(BF16), w2_ref[...], preferred_element_type=F32) + b2_ref[...]
    x = leaky(x) * row_mask
    x = graph_ln(x, inv2_ref[...], g2_ref[...], be2_ref[...], mask_gs)
    x = x * row_mask                       # keep pad rows exactly zero downstream

    # --- GraphSAGE encoder: adjacency loaded once (bf16 counts), reused 3x ---
    adj = adj_ref[...]                     # [Np, Np] bf16
    inv_deg = invdeg_ref[...]              # [Np, 1]  f32
    for l in range(num_layers):
        x_bf = x.astype(BF16)              # single cast, reused by both dots
        # exact mean aggregation: bf16 counts on MXU, f32 1/deg on VPU
        neigh = jnp.dot(adj, x_bf, preferred_element_type=F32) * inv_deg
        h = jnp.concatenate([neigh.astype(BF16), x_bf], axis=1)          # [Np, 2*Dp]
        out = jnp.dot(h, swlr_ref[l], preferred_element_type=F32) + sbl_ref[l]
        if normalize:
            ss = jnp.sum(out * out, axis=1, keepdims=True)
            out = out * lax.rsqrt(jnp.maximum(ss, _L2_EPS * _L2_EPS))
        if l < num_layers - 1:
            out = jnp.maximum(out, 0.0)    # inter-layer ReLU
        x = out

    # --- per-graph node-sum readout + final Linear(hidden, 1) ---
    # Final linear (output width 1) done as VPU broadcast-multiply + lane
    # reduction; output stored lane-dense (result replicated across 128 lanes).
    agg = jnp.dot(segt, x, preferred_element_type=F32)                   # [Gp, Dp]
    res = jnp.sum(agg * fw_ref[...], axis=1, keepdims=True) + fb_ref[...]
    out_ref[...] = jnp.broadcast_to(res, out_ref.shape)


def _vmem_limit_bytes(resident_bytes):
    """Per-generation VMEM limit derived from the actual resident footprint."""
    phys = 64 * 1024 * 1024                     # conservative default (v7x per-TC)
    try:
        phys = int(pltpu.get_tpu_info().vmem_capacity_bytes)
    except Exception:
        pass
    want = 4 * int(resident_bytes) + 8 * 1024 * 1024   # slack for compiler scratch
    limit = min(want, phys - 16 * 1024 * 1024)
    limit = max(limit, min(32 * 1024 * 1024, phys // 2))
    return int(limit)


def _fused_call(kernel, out_shape, args):
    # Gridless call: every input is a single whole-array VMEM buffer, so
    # nothing is pipelined / double-buffered (single-buffering by construction).
    resident = sum(int(a.size) * a.dtype.itemsize for a in args)
    resident += int(np.prod(out_shape.shape)) * 4
    in_specs = [pl.BlockSpec(memory_space=pltpu.MemorySpace.VMEM) for _ in args]
    out_specs = pl.BlockSpec(memory_space=pltpu.MemorySpace.VMEM)
    return pl.pallas_call(
        kernel,
        out_shape=out_shape,
        in_specs=in_specs,
        out_specs=out_specs,
        compiler_params=pltpu.CompilerParams(
            vmem_limit_bytes=_vmem_limit_bytes(resident),
        ),
    )(*args)


# ---------------------------------------------------------------------------
# Model configuration / parameters
# ---------------------------------------------------------------------------

class Args:
    num_opcodes = 16
    opcode_dim = 8
    embeddings_size = 7
    embeddings_dim = 4
    categorical_cols_start = 10
    n_cat_node_cols = 3          # categorical columns inside node_features
    n_cat_cfg_cols = 2           # columns of node_config_features
    node_feature_expand = 2
    graphsage_in = 32
    graphsage_hidden = 64
    graphsage_layers = 3
    graphsage_normalize = True
    project_after_graph_encoder = False
    return_positive_values = False

    @property
    def node_feature_dim(self):
        return (self.categorical_cols_start
                + self.embeddings_dim * (self.n_cat_node_cols + self.n_cat_cfg_cols)
                + self.opcode_dim)


def init_params(key, args):
    def dense(k, shape, scale=0.1):
        return (scale * jax.random.normal(k, shape)).astype(F32)

    ks = jax.random.split(key, 16)
    d_in = args.node_feature_dim
    d_exp = d_in * args.node_feature_expand
    p = {
        "opcode_emb": dense(ks[0], (args.num_opcodes, args.opcode_dim), 1.0),
        "cat_emb": dense(ks[1], (args.embeddings_size, args.embeddings_dim), 1.0),
        "mlp_w1": dense(ks[2], (d_in, d_exp)),
        "mlp_b1": dense(ks[3], (1, d_exp)),
        "ln1_gamma": jnp.ones((1, d_exp), F32),
        "ln1_beta": jnp.zeros((1, d_exp), F32),
        "mlp_w2": dense(ks[4], (d_exp, args.graphsage_in)),
        "mlp_b2": dense(ks[5], (1, args.graphsage_in)),
        "ln2_gamma": jnp.ones((1, args.graphsage_in), F32),
        "ln2_beta": jnp.zeros((1, args.graphsage_in), F32),
        "final_w": dense(ks[6], (args.graphsage_hidden, 1)),
        "final_b": dense(ks[7], (1, 1)),
    }
    dims = [args.graphsage_in] + [args.graphsage_hidden] * args.graphsage_layers
    sk = jax.random.split(ks[8], 3 * args.graphsage_layers)
    sage = []
    for l in range(args.graphsage_layers):
        sage.append({
            "wl": dense(sk[3 * l + 0], (dims[l], dims[l + 1])),
            "bl": dense(sk[3 * l + 1], (1, dims[l + 1])),
            "wr": dense(sk[3 * l + 2], (dims[l], dims[l + 1])),
        })
    p["sage"] = sage
    return p


# ---------------------------------------------------------------------------
# Forward pass (glue in JAX, compute in one fused Pallas kernel)
# ---------------------------------------------------------------------------

def _round_up(x, m):
    return (x + m - 1) // m * m


def _pad2d(a, rows, cols):
    r, c = a.shape
    return jnp.pad(a.astype(F32), ((0, rows - r), (0, cols - c)))


def layout_graph_model_forward(params, args, node_features, node_config_features,
                               node_separation, node_ops, edges, batches):
    N = node_features.shape[0]
    ccs = args.categorical_cols_start
    d_in = args.node_feature_dim
    d_exp = d_in * args.node_feature_expand
    d_gs_in = args.graphsage_in
    d_hidden = args.graphsage_hidden
    L = args.graphsage_layers

    # Unified lane padding so every stage's activations share one 128-aligned
    # slab (all logical dims here are <= 128).
    d_pad = _round_up(max(d_in, d_exp, d_gs_in, d_hidden), LANE)
    n_pad = _round_up(N, LANE)

    # --- embedding lookups (glue) ---------------------------------------
    opcode_embed = jnp.take(params["opcode_emb"], node_ops, axis=0)          # [N, op_dim]
    cat_nf_idx = node_features[:, ccs:].astype(jnp.int32)
    categorical_nf = jnp.take(params["cat_emb"], cat_nf_idx, axis=0).reshape(N, -1)
    categorical_cf = jnp.take(
        params["cat_emb"], node_config_features.astype(jnp.int32), axis=0
    ).reshape(N, -1)
    numeric_nf = node_features[:, :ccs]
    x0 = jnp.concatenate(
        [categorical_nf, categorical_cf, numeric_nf, opcode_embed], axis=1
    ).astype(F32)                                                            # [N, d_in]
    x0 = _pad2d(x0, n_pad, d_pad)

    # --- graph-segment membership (glue) --------------------------------
    node_sep = jnp.asarray(node_separation, jnp.int32)
    G = node_sep.shape[0]
    g_pad = _round_up(G, SUB)
    seg_ids = jnp.searchsorted(node_sep, jnp.arange(N, dtype=jnp.int32), side="right")
    seg = (seg_ids[:, None] == jnp.arange(G)[None, :]).astype(F32)           # [N, G]
    seg = _pad2d(seg, n_pad, g_pad)                                          # [Np, Gp]
    segt = seg.T                                                             # [Gp, Np]
    counts = jnp.sum(seg, axis=0)[:, None]                                   # [Gp, 1]
    inv1 = (1.0 / jnp.maximum(counts * d_exp, 1.0)).astype(F32)
    inv2 = (1.0 / jnp.maximum(counts * d_gs_in, 1.0)).astype(F32)

    # --- adjacency: exact bf16 edge counts + f32 1/deg (mean aggregation) ---
    # A[dst, src] = multiplicity of edge (src -> dst); duplicates counted.
    src = edges[0].astype(jnp.int32)
    dst = edges[1].astype(jnp.int32)
    adj = jnp.zeros((n_pad, n_pad), BF16).at[dst, src].add(1.0)              # one N^2 pass
    deg = jnp.bincount(dst, length=n_pad).astype(F32)
    inv_deg = (1.0 / jnp.maximum(deg, 1.0)).reshape(n_pad, 1)                # [Np, 1]

    # --- pad parameters; weights go to bf16 (MXU path), the rest stays f32 ---
    w1 = _pad2d(params["mlp_w1"], d_pad, d_pad).astype(BF16)
    b1 = _pad2d(params["mlp_b1"], 1, d_pad)
    g1 = _pad2d(params["ln1_gamma"], 1, d_pad)      # pad lanes -> gamma 0
    be1 = _pad2d(params["ln1_beta"], 1, d_pad)      # pad lanes -> beta 0
    w2 = _pad2d(params["mlp_w2"], d_pad, d_pad).astype(BF16)
    b2 = _pad2d(params["mlp_b2"], 1, d_pad)
    g2 = _pad2d(params["ln2_gamma"], 1, d_pad)
    be2 = _pad2d(params["ln2_beta"], 1, d_pad)
    # Fused lin_l / lin_r weights: [L, 2*Dp, Dp] so K=2*Dp fills the MXU depth.
    swlr = jnp.stack([
        jnp.concatenate([_pad2d(lyr["wl"], d_pad, d_pad),
                         _pad2d(lyr["wr"], d_pad, d_pad)], axis=0)
        for lyr in params["sage"]
    ]).astype(BF16)                                                           # [L, 2Dp, Dp]
    sbl = jnp.stack([_pad2d(lyr["bl"], 1, d_pad) for lyr in params["sage"]])  # [L, 1, Dp]
    fw = _pad2d(params["final_w"].T, 1, d_pad)      # [1, Dp] row vector (f32 readout)
    fb = params["final_b"].reshape(1, 1).astype(F32)

    kern = functools.partial(
        fused_forward_kernel,
        d_exp=d_exp, d_gs_in=d_gs_in, n_real=N,
        num_layers=L, normalize=args.graphsage_normalize,
    )
    out_pad = _fused_call(
        kern, jax.ShapeDtypeStruct((g_pad, d_pad), F32),
        (x0, adj, inv_deg, seg, segt, inv1, inv2,
         w1, b1, g1, be1, w2, b2, g2, be2,
         swlr, sbl, fw, fb),
    )
    per_graph = out_pad[:G, 0]                                               # [G]

    # group graphs by batch id (host-side glue, same ordering as the PyTorch loop)
    batches_np = np.asarray(batches)
    uniq = np.unique(batches_np)
    rows = [per_graph[jnp.asarray(np.where(batches_np == b)[0])] for b in uniq]
    out = jnp.stack(rows, axis=0)                                            # [B, S]
    return out


# ---------------------------------------------------------------------------
# Main
# ---------------------------------------------------------------------------

if __name__ == "__main__":
    args = Args()
    key = jax.random.PRNGKey(0)
    k_params, k_nf, k_cat, k_cfg, k_ops, k_edges = jax.random.split(key, 6)

    params = init_params(k_params, args)

    # 4 graphs, 2 batches, 16 nodes total
    nodes_per_graph = [3, 5, 4, 4]
    N = sum(nodes_per_graph)
    node_separation = np.cumsum(nodes_per_graph).astype(np.int32)            # [3, 8, 12, 16]
    batches = np.array([0, 0, 1, 1], dtype=np.int32)

    numeric = jax.random.normal(k_nf, (N, args.categorical_cols_start), F32)
    cat_cols = jax.random.randint(
        k_cat, (N, args.n_cat_node_cols), 0, args.embeddings_size
    ).astype(F32)
    node_features = jnp.concatenate([numeric, cat_cols], axis=1)             # [N, 13]

    node_config_features = jax.random.randint(
        k_cfg, (N, args.n_cat_cfg_cols), 0, args.embeddings_size
    ).astype(jnp.int32)
    node_ops = jax.random.randint(k_ops, (N,), 0, args.num_opcodes).astype(jnp.int32)

    E = 32
    edges = jax.random.randint(k_edges, (2, E), 0, N).astype(jnp.int32)      # [2, E]

    out = layout_graph_model_forward(
        params, args, node_features, node_config_features,
        node_separation, node_ops, edges, batches
    )
    out = jax.block_until_ready(out)
    assert out.shape == (2, 2), out.shape
    assert bool(jnp.all(jnp.isfinite(out)))
    print("KERNEL_OK")
</pallas_src>

<mosaic_0001>
module attributes {stable_mosaic.version = 11 : i64} {
  func.func @fused_forward_kernel(%arg0: memref<128x128xf32, #tpu.memory_space<vmem>>, %arg1: memref<128x128xbf16, #tpu.memory_space<vmem>>, %arg2: memref<128x1xf32, #tpu.memory_space<vmem>>, %arg3: memref<128x8xf32, #tpu.memory_space<vmem>>, %arg4: memref<8x128xf32, #tpu.memory_space<vmem>>, %arg5: memref<8x1xf32, #tpu.memory_space<vmem>>, %arg6: memref<8x1xf32, #tpu.memory_space<vmem>>, %arg7: memref<128x128xbf16, #tpu.memory_space<vmem>>, %arg8: memref<1x128xf32, #tpu.memory_space<vmem>>, %arg9: memref<1x128xf32, #tpu.memory_space<vmem>>, %arg10: memref<1x128xf32, #tpu.memory_space<vmem>>, %arg11: memref<128x128xbf16, #tpu.memory_space<vmem>>, %arg12: memref<1x128xf32, #tpu.memory_space<vmem>>, %arg13: memref<1x128xf32, #tpu.memory_space<vmem>>, %arg14: memref<1x128xf32, #tpu.memory_space<vmem>>, %arg15: memref<3x256x128xbf16, #tpu.memory_space<vmem>>, %arg16: memref<3x1x128xf32, #tpu.memory_space<vmem>>, %arg17: memref<1x128xf32, #tpu.memory_space<vmem>>, %arg18: memref<1x1xf32, #tpu.memory_space<vmem>>, %arg19: memref<8x128xf32, #tpu.memory_space<vmem>>) attributes {dimension_semantics = [], scalar_prefetch = 0 : i64, scratch_operands = 0 : i64, tpu.core_type = #tpu.core_type<tc>} {
    %c0 = arith.constant 0 : index
    %c0_0 = arith.constant 0 : index
    %0 = vector.load %arg3[%c0, %c0_0] : memref<128x8xf32, #tpu.memory_space<vmem>>, vector<128x8xf32>
    %c0_1 = arith.constant 0 : index
    %c0_2 = arith.constant 0 : index
    %1 = vector.load %arg4[%c0_1, %c0_2] : memref<8x128xf32, #tpu.memory_space<vmem>>, vector<8x128xf32>
    %2 = tpu.iota {dimensions = array<i32: 1>} : vector<1x128xi32>
    %c76_i32 = arith.constant 76 : i32
    %3 = vector.broadcast %c76_i32 : i32 to vector<1x128xi32>
    %4 = arith.cmpi slt, %2, %3 : vector<1x128xi32>
    %5 = arith.extui %4 : vector<1x128xi1> to vector<1x128xi32>
    %6 = arith.sitofp %5 : vector<1x128xi32> to vector<1x128xf32>
    %c32_i32 = arith.constant 32 : i32
    %7 = vector.broadcast %c32_i32 : i32 to vector<1x128xi32>
    %8 = arith.cmpi slt, %2, %7 : vector<1x128xi32>
    %9 = arith.extui %8 : vector<1x128xi1> to vector<1x128xi32>
    %10 = arith.sitofp %9 : vector<1x128xi32> to vector<1x128xf32>
    %11 = tpu.iota {dimensions = array<i32: 0>} : vector<128x1xi32>
    %c16_i32 = arith.constant 16 : i32
    %12 = vector.broadcast %c16_i32 : i32 to vector<128x1xi32>
    %13 = arith.cmpi slt, %11, %12 : vector<128x1xi32>
    %14 = arith.extui %13 : vector<128x1xi1> to vector<128x1xi32>
    %15 = arith.sitofp %14 : vector<128x1xi32> to vector<128x1xf32>
    %c0_3 = arith.constant 0 : index
    %c0_4 = arith.constant 0 : index
    %16 = vector.load %arg0[%c0_3, %c0_4] : memref<128x128xf32, #tpu.memory_space<vmem>>, vector<128x128xf32>
    %17 = arith.truncf %16 : vector<128x128xf32> to vector<128x128xbf16>
    %c0_5 = arith.constant 0 : index
    %c0_6 = arith.constant 0 : index
    %18 = vector.load %arg7[%c0_5, %c0_6] : memref<128x128xbf16, #tpu.memory_space<vmem>>, vector<128x128xbf16>
    %cst = arith.constant dense<0.000000e+00> : vector<128x128xf32>
    %19 = tpu.matmul %17, %18, %cst {dimension_numbers = #tpu.dot_dimension_numbers<[1], [0], [0], [1], [0, 0, 1, 1], [], []>} : vector<128x128xbf16>, vector<128x128xbf16>, vector<128x128xf32> -> vector<128x128xf32>
    %c0_7 = arith.constant 0 : index
    %c0_8 = arith.constant 0 : index
    %20 = vector.load %arg8[%c0_7, %c0_8] : memref<1x128xf32, #tpu.memory_space<vmem>>, vector<1x128xf32>
    %21 = vector.broadcast %20 : vector<1x128xf32> to vector<128x128xf32>
    %22 = arith.addf %19, %21 : vector<128x128xf32>
    %cst_9 = arith.constant 0.000000e+00 : f32
    %23 = vector.broadcast %cst_9 : f32 to vector<128x128xf32>
    %24 = arith.cmpf ogt, %22, %23 : vector<128x128xf32>
    %cst_10 = arith.constant 0.00999999977 : f32
    %25 = vector.broadcast %cst_10 : f32 to vector<128x128xf32>
    %26 = arith.mulf %25, %22 : vector<128x128xf32>
    %27 = arith.select %24, %22, %26 : vector<128x128xi1>, vector<128x128xf32>
    %28 = vector.broadcast %15 : vector<128x1xf32> to vector<128x128xf32>
    %29 = arith.mulf %27, %28 : vector<128x128xf32>
    %c0_11 = arith.constant 0 : index
    %c0_12 = arith.constant 0 : index
    %30 = vector.load %arg5[%c0_11, %c0_12] : memref<8x1xf32, #tpu.memory_space<vmem>>, vector<8x1xf32>
    %c0_13 = arith.constant 0 : index
    %c0_14 = arith.constant 0 : index
    %31 = vector.load %arg9[%c0_13, %c0_14] : memref<1x128xf32, #tpu.memory_space<vmem>>, vector<1x128xf32>
    %c0_15 = arith.constant 0 : index
    %c0_16 = arith.constant 0 : index
    %32 = vector.load %arg10[%c0_15, %c0_16] : memref<1x128xf32, #tpu.memory_space<vmem>>, vector<1x128xf32>
    %cst_17 = arith.constant dense<0.000000e+00> : vector<8x128xf32>
    %33 = tpu.matmul %1, %29, %cst_17 {dimension_numbers = #tpu.dot_dimension_numbers<[1], [0], [0], [1], [0, 0, 1, 1], [], []>} : vector<8x128xf32>, vector<128x128xf32>, vector<8x128xf32> -> vector<8x128xf32>
    %cst_18 = arith.constant dense<0.000000e+00> : vector<8xf32>
    %34 = vector.multi_reduction <add>, %33, %cst_18 [1] : vector<8x128xf32> to vector<8xf32>
    %35 = vector.shape_cast %34 : vector<8xf32> to vector<8x1xf32>
    %36 = arith.mulf %35, %30 : vector<8x1xf32>
    %37 = vector.shape_cast %36 : vector<8x1xf32> to vector<8x1xf32>
    %38 = vector.broadcast %37 : vector<8x1xf32> to vector<8x128xf32>
    %cst_19 = arith.constant dense<0.000000e+00> : vector<128x128xf32>
    %39 = tpu.matmul %0, %38, %cst_19 {dimension_numbers = #tpu.dot_dimension_numbers<[1], [0], [0], [1], [0, 0, 1, 1], [], []>} : vector<128x8xf32>, vector<8x128xf32>, vector<128x128xf32> -> vector<128x128xf32>
    %40 = arith.subf %29, %39 : vector<128x128xf32>
    %41 = vector.broadcast %6 : vector<1x128xf32> to vector<128x128xf32>
    %42 = arith.mulf %40, %41 : vector<128x128xf32>
    %43 = arith.mulf %42, %42 : vector<128x128xf32>
    %cst_20 = arith.constant dense<0.000000e+00> : vector<8x128xf32>
    %44 = tpu.matmul %1, %43, %cst_20 {dimension_numbers = #tpu.dot_dimension_numbers<[1], [0], [0], [1], [0, 0, 1, 1], [], []>} : vector<8x128xf32>, vector<128x128xf32>, vector<8x128xf32> -> vector<8x128xf32>
    %cst_21 = arith.constant dense<0.000000e+00> : vector<8xf32>
    %45 = vector.multi_reduction <add>, %44, %cst_21 [1] : vector<8x128xf32> to vector<8xf32>
    %46 = vector.shape_cast %45 : vector<8xf32> to vector<8x1xf32>
    %47 = arith.mulf %46, %30 : vector<8x1xf32>
    %48 = vector.shape_cast %47 : vector<8x1xf32> to vector<8x1xf32>
    %49 = vector.broadcast %48 : vector<8x1xf32> to vector<8x128xf32>
    %cst_22 = arith.constant dense<0.000000e+00> : vector<128x128xf32>
    %50 = tpu.matmul %0, %49, %cst_22 {dimension_numbers = #tpu.dot_dimension_numbers<[1], [0], [0], [1], [0, 0, 1, 1], [], []>} : vector<128x8xf32>, vector<8x128xf32>, vector<128x128xf32> -> vector<128x128xf32>
    %cst_23 = arith.constant 9.99999974E-6 : f32
    %51 = vector.broadcast %cst_23 : f32 to vector<128x128xf32>
    %52 = arith.addf %50, %51 : vector<128x128xf32>
    %53 = math.rsqrt %52 : vector<128x128xf32>
    %54 = arith.mulf %42, %53 : vector<128x128xf32>
    %55 = vector.broadcast %31 : vector<1x128xf32> to vector<128x128xf32>
    %56 = arith.mulf %54, %55 : vector<128x128xf32>
    %57 = vector.broadcast %32 : vector<1x128xf32> to vector<128x128xf32>
    %58 = arith.addf %56, %57 : vector<128x128xf32>
    %59 = arith.truncf %58 : vector<128x128xf32> to vector<128x128xbf16>
    %c0_24 = arith.constant 0 : index
    %c0_25 = arith.constant 0 : index
    %60 = vector.load %arg11[%c0_24, %c0_25] : memref<128x128xbf16, #tpu.memory_space<vmem>>, vector<128x128xbf16>
    %cst_26 = arith.constant dense<0.000000e+00> : vector<128x128xf32>
    %61 = tpu.matmul %59, %60, %cst_26 {dimension_numbers = #tpu.dot_dimension_numbers<[1], [0], [0], [1], [0, 0, 1, 1], [], []>} : vector<128x128xbf16>, vector<128x128xbf16>, vector<128x128xf32> -> vector<128x128xf32>
    %c0_27 = arith.constant 0 : index
    %c0_28 = arith.constant 0 : index
    %62 = vector.load %arg12[%c0_27, %c0_28] : memref<1x128xf32, #tpu.memory_space<vmem>>, vector<1x128xf32>
    %63 = vector.broadcast %62 : vector<1x128xf32> to vector<128x128xf32>
    %64 = arith.addf %61, %63 : vector<128x128xf32>
    %cst_29 = arith.constant 0.000000e+00 : f32
    %65 = vector.broadcast %cst_29 : f32 to vector<128x128xf32>
    %66 = arith.cmpf ogt, %64, %65 : vector<128x128xf32>
    %cst_30 = arith.constant 0.00999999977 : f32
    %67 = vector.broadcast %cst_30 : f32 to vector<128x128xf32>
    %68 = arith.mulf %67, %64 : vector<128x128xf32>
    %69 = arith.select %66, %64, %68 : vector<128x128xi1>, vector<128x128xf32>
    %70 = vector.broadcast %15 : vector<128x1xf32> to vector<128x128xf32>
    %71 = arith.mulf %69, %70 : vector<128x128xf32>
    %c0_31 = arith.constant 0 : index
    %c0_32 = arith.constant 0 : index
    %72 = vector.load %arg6[%c0_31, %c0_32] : memref<8x1xf32, #tpu.memory_space<vmem>>, vector<8x1xf32>
    %c0_33 = arith.constant 0 : index
    %c0_34 = arith.constant 0 : index
    %73 = vector.load %arg13[%c0_33, %c0_34] : memref<1x128xf32, #tpu.memory_space<vmem>>, vector<1x128xf32>
    %c0_35 = arith.constant 0 : index
    %c0_36 = arith.constant 0 : index
    %74 = vector.load %arg14[%c0_35, %c0_36] : memref<1x128xf32, #tpu.memory_space<vmem>>, vector<1x128xf32>
    %cst_37 = arith.constant dense<0.000000e+00> : vector<8x128xf32>
    %75 = tpu.matmul %1, %71, %cst_37 {dimension_numbers = #tpu.dot_dimension_numbers<[1], [0], [0], [1], [0, 0, 1, 1], [], []>} : vector<8x128xf32>, vector<128x128xf32>, vector<8x128xf32> -> vector<8x128xf32>
    %cst_38 = arith.constant dense<0.000000e+00> : vector<8xf32>
    %76 = vector.multi_reduction <add>, %75, %cst_38 [1] : vector<8x128xf32> to vector<8xf32>
    %77 = vector.shape_cast %76 : vector<8xf32> to vector<8x1xf32>
    %78 = arith.mulf %77, %72 : vector<8x1xf32>
    %79 = vector.shape_cast %78 : vector<8x1xf32> to vector<8x1xf32>
    %80 = vector.broadcast %79 : vector<8x1xf32> to vector<8x128xf32>
    %cst_39 = arith.constant dense<0.000000e+00> : vector<128x128xf32>
    %81 = tpu.matmul %0, %80, %cst_39 {dimension_numbers = #tpu.dot_dimension_numbers<[1], [0], [0], [1], [0, 0, 1, 1], [], []>} : vector<128x8xf32>, vector<8x128xf32>, vector<128x128xf32> -> vector<128x128xf32>
    %82 = arith.subf %71, %81 : vector<128x128xf32>
    %83 = vector.broadcast %10 : vector<1x128xf32> to vector<128x128xf32>
    %84 = arith.mulf %82, %83 : vector<128x128xf32>
    %85 = arith.mulf %84, %84 : vector<128x128xf32>
    %cst_40 = arith.constant dense<0.000000e+00> : vector<8x128xf32>
    %86 = tpu.matmul %1, %85, %cst_40 {dimension_numbers = #tpu.dot_dimension_numbers<[1], [0], [0], [1], [0, 0, 1, 1], [], []>} : vector<8x128xf32>, vector<128x128xf32>, vector<8x128xf32> -> vector<8x128xf32>
    %cst_41 = arith.constant dense<0.000000e+00> : vector<8xf32>
    %87 = vector.multi_reduction <add>, %86, %cst_41 [1] : vector<8x128xf32> to vector<8xf32>
    %88 = vector.shape_cast %87 : vector<8xf32> to vector<8x1xf32>
    %89 = arith.mulf %88, %72 : vector<8x1xf32>
    %90 = vector.shape_cast %89 : vector<8x1xf32> to vector<8x1xf32>
    %91 = vector.broadcast %90 : vector<8x1xf32> to vector<8x128xf32>
    %cst_42 = arith.constant dense<0.000000e+00> : vector<128x128xf32>
    %92 = tpu.matmul %0, %91, %cst_42 {dimension_numbers = #tpu.dot_dimension_numbers<[1], [0], [0], [1], [0, 0, 1, 1], [], []>} : vector<128x8xf32>, vector<8x128xf32>, vector<128x128xf32> -> vector<128x128xf32>
    %cst_43 = arith.constant 9.99999974E-6 : f32
    %93 = vector.broadcast %cst_43 : f32 to vector<128x128xf32>
    %94 = arith.addf %92, %93 : vector<128x128xf32>
    %95 = math.rsqrt %94 : vector<128x128xf32>
    %96 = arith.mulf %84, %95 : vector<128x128xf32>
    %97 = vector.broadcast %73 : vector<1x128xf32> to vector<128x128xf32>
    %98 = arith.mulf %96, %97 : vector<128x128xf32>
    %99 = vector.broadcast %74 : vector<1x128xf32> to vector<128x128xf32>
    %100 = arith.addf %98, %99 : vector<128x128xf32>
    %101 = vector.broadcast %15 : vector<128x1xf32> to vector<128x128xf32>
    %102 = arith.mulf %100, %101 : vector<128x128xf32>
    %c0_44 = arith.constant 0 : index
    %c0_45 = arith.constant 0 : index
    %103 = vector.load %arg1[%c0_44, %c0_45] : memref<128x128xbf16, #tpu.memory_space<vmem>>, vector<128x128xbf16>
    %c0_46 = arith.constant 0 : index
    %c0_47 = arith.constant 0 : index
    %104 = vector.load %arg2[%c0_46, %c0_47] : memref<128x1xf32, #tpu.memory_space<vmem>>, vector<128x1xf32>
    %105 = arith.truncf %102 : vector<128x128xf32> to vector<128x128xbf16>
    %cst_48 = arith.constant dense<0.000000e+00> : vector<128x128xf32>
    %106 = tpu.matmul %103, %105, %cst_48 {dimension_numbers = #tpu.dot_dimension_numbers<[1], [0], [0], [1], [0, 0, 1, 1], [], []>} : vector<128x128xbf16>, vector<128x128xbf16>, vector<128x128xf32> -> vector<128x128xf32>
    %107 = vector.broadcast %104 : vector<128x1xf32> to vector<128x128xf32>
    %108 = arith.mulf %106, %107 : vector<128x128xf32>
    %109 = arith.truncf %108 : vector<128x128xf32> to vector<128x128xbf16>
    %110 = tpu.concatenate %109, %105 in 1 : vector<128x128xbf16>, vector<128x128xbf16> -> vector<128x256xbf16>
    %c0_49 = arith.constant 0 : index
    %c0_50 = arith.constant 0 : index
    %c0_51 = arith.constant 0 : index
    %111 = vector.load %arg15[%c0_49, %c0_50, %c0_51] : memref<3x256x128xbf16, #tpu.memory_space<vmem>>, vector<1x256x128xbf16>
    %112 = vector.shape_cast %111 : vector<1x256x128xbf16> to vector<256x128xbf16>
    %cst_52 = arith.constant dense<0.000000e+00> : vector<128x128xf32>
    %113 = tpu.matmul %110, %112, %cst_52 {dimension_numbers = #tpu.dot_dimension_numbers<[1], [0], [0], [1], [0, 0, 1, 1], [], []>} : vector<128x256xbf16>, vector<256x128xbf16>, vector<128x128xf32> -> vector<128x128xf32>
    %c0_53 = arith.constant 0 : index
    %c0_54 = arith.constant 0 : index
    %c0_55 = arith.constant 0 : index
    %114 = vector.load %arg16[%c0_53, %c0_54, %c0_55] : memref<3x1x128xf32, #tpu.memory_space<vmem>>, vector<1x1x128xf32>
    %115 = vector.shape_cast %114 : vector<1x1x128xf32> to vector<1x128xf32>
    %116 = vector.broadcast %115 : vector<1x128xf32> to vector<128x128xf32>
    %117 = arith.addf %113, %116 : vector<128x128xf32>
    %118 = arith.mulf %117, %117 : vector<128x128xf32>
    %cst_56 = arith.constant dense<0.000000e+00> : vector<128xf32>
    %119 = vector.multi_reduction <add>, %118, %cst_56 [1] : vector<128x128xf32> to vector<128xf32>
    %120 = vector.shape_cast %119 : vector<128xf32> to vector<128x1xf32>
    %cst_57 = arith.constant 1.000000e-24 : f32
    %121 = vector.broadcast %cst_57 : f32 to vector<128x1xf32>
    %122 = arith.maximumf %120, %121 : vector<128x1xf32>
    %123 = math.rsqrt %122 : vector<128x1xf32>
    %124 = vector.broadcast %123 : vector<128x1xf32> to vector<128x128xf32>
    %125 = arith.mulf %117, %124 : vector<128x128xf32>
    %cst_58 = arith.constant 0.000000e+00 : f32
    %126 = vector.broadcast %cst_58 : f32 to vector<128x128xf32>
    %127 = arith.maximumf %125, %126 : vector<128x128xf32>
    %128 = arith.truncf %127 : vector<128x128xf32> to vector<128x128xbf16>
    %cst_59 = arith.constant dense<0.000000e+00> : vector<128x128xf32>
    %129 = tpu.matmul %103, %128, %cst_59 {dimension_numbers = #tpu.dot_dimension_numbers<[1], [0], [0], [1], [0, 0, 1, 1], [], []>} : vector<128x128xbf16>, vector<128x128xbf16>, vector<128x128xf32> -> vector<128x128xf32>
    %130 = vector.broadcast %104 : vector<128x1xf32> to vector<128x128xf32>
    %131 = arith.mulf %129, %130 : vector<128x128xf32>
    %132 = arith.truncf %131 : vector<128x128xf32> to vector<128x128xbf16>
    %133 = tpu.concatenate %132, %128 in 1 : vector<128x128xbf16>, vector<128x128xbf16> -> vector<128x256xbf16>
    %c1 = arith.constant 1 : index
    %c0_60 = arith.constant 0 : index
    %c0_61 = arith.constant 0 : index
    %134 = vector.load %arg15[%c1, %c0_60, %c0_61] : memref<3x256x128xbf16, #tpu.memory_space<vmem>>, vector<1x256x128xbf16>
    %135 = vector.shape_cast %134 : vector<1x256x128xbf16> to vector<256x128xbf16>
    %cst_62 = arith.constant dense<0.000000e+00> : vector<128x128xf32>
    %136 = tpu.matmul %133, %135, %cst_62 {dimension_numbers = #tpu.dot_dimension_numbers<[1], [0], [0], [1], [0, 0, 1, 1], [], []>} : vector<128x256xbf16>, vector<256x128xbf16>, vector<128x128xf32> -> vector<128x128xf32>
    %c1_63 = arith.constant 1 : index
    %c0_64 = arith.constant 0 : index
    %c0_65 = arith.constant 0 : index
    %137 = vector.load %arg16[%c1_63, %c0_64, %c0_65] : memref<3x1x128xf32, #tpu.memory_space<vmem>>, vector<1x1x128xf32>
    %138 = vector.shape_cast %137 : vector<1x1x128xf32> to vector<1x128xf32>
    %139 = vector.broadcast %138 : vector<1x128xf32> to vector<128x128xf32>
    %140 = arith.addf %136, %139 : vector<128x128xf32>
    %141 = arith.mulf %140, %140 : vector<128x128xf32>
    %cst_66 = arith.constant dense<0.000000e+00> : vector<128xf32>
    %142 = vector.multi_reduction <add>, %141, %cst_66 [1] : vector<128x128xf32> to vector<128xf32>
    %143 = vector.shape_cast %142 : vector<128xf32> to vector<128x1xf32>
    %cst_67 = arith.constant 1.000000e-24 : f32
    %144 = vector.broadcast %cst_67 : f32 to vector<128x1xf32>
    %145 = arith.maximumf %143, %144 : vector<128x1xf32>
    %146 = math.rsqrt %145 : vector<128x1xf32>
    %147 = vector.broadcast %146 : vector<128x1xf32> to vector<128x128xf32>
    %148 = arith.mulf %140, %147 : vector<128x128xf32>
    %cst_68 = arith.constant 0.000000e+00 : f32
    %149 = vector.broadcast %cst_68 : f32 to vector<128x128xf32>
    %150 = arith.maximumf %148, %149 : vector<128x128xf32>
    %151 = arith.truncf %150 : vector<128x128xf32> to vector<128x128xbf16>
    %cst_69 = arith.constant dense<0.000000e+00> : vector<128x128xf32>
    %152 = tpu.matmul %103, %151, %cst_69 {dimension_numbers = #tpu.dot_dimension_numbers<[1], [0], [0], [1], [0, 0, 1, 1], [], []>} : vector<128x128xbf16>, vector<128x128xbf16>, vector<128x128xf32> -> vector<128x128xf32>
    %153 = vector.broadcast %104 : vector<128x1xf32> to vector<128x128xf32>
    %154 = arith.mulf %152, %153 : vector<128x128xf32>
    %155 = arith.truncf %154 : vector<128x128xf32> to vector<128x128xbf16>
    %156 = tpu.concatenate %155, %151 in 1 : vector<128x128xbf16>, vector<128x128xbf16> -> vector<128x256xbf16>
    %c2 = arith.constant 2 : index
    %c0_70 = arith.constant 0 : index
    %c0_71 = arith.constant 0 : index
    %157 = vector.load %arg15[%c2, %c0_70, %c0_71] : memref<3x256x128xbf16, #tpu.memory_space<vmem>>, vector<1x256x128xbf16>
    %158 = vector.shape_cast %157 : vector<1x256x128xbf16> to vector<256x128xbf16>
    %cst_72 = arith.constant dense<0.000000e+00> : vector<128x128xf32>
    %159 = tpu.matmul %156, %158, %cst_72 {dimension_numbers = #tpu.dot_dimension_numbers<[1], [0], [0], [1], [0, 0, 1, 1], [], []>} : vector<128x256xbf16>, vector<256x128xbf16>, vector<128x128xf32> -> vector<128x128xf32>
    %c2_73 = arith.constant 2 : index
    %c0_74 = arith.constant 0 : index
    %c0_75 = arith.constant 0 : index
    %160 = vector.load %arg16[%c2_73, %c0_74, %c0_75] : memref<3x1x128xf32, #tpu.memory_space<vmem>>, vector<1x1x128xf32>
    %161 = vector.shape_cast %160 : vector<1x1x128xf32> to vector<1x128xf32>
    %162 = vector.broadcast %161 : vector<1x128xf32> to vector<128x128xf32>
    %163 = arith.addf %159, %162 : vector<128x128xf32>
    %164 = arith.mulf %163, %163 : vector<128x128xf32>
    %cst_76 = arith.constant dense<0.000000e+00> : vector<128xf32>
    %165 = vector.multi_reduction <add>, %164, %cst_76 [1] : vector<128x128xf32> to vector<128xf32>
    %166 = vector.shape_cast %165 : vector<128xf32> to vector<128x1xf32>
    %cst_77 = arith.constant 1.000000e-24 : f32
    %167 = vector.broadcast %cst_77 : f32 to vector<128x1xf32>
    %168 = arith.maximumf %166, %167 : vector<128x1xf32>
    %169 = math.rsqrt %168 : vector<128x1xf32>
    %170 = vector.broadcast %169 : vector<128x1xf32> to vector<128x128xf32>
    %171 = arith.mulf %163, %170 : vector<128x128xf32>
    %cst_78 = arith.constant dense<0.000000e+00> : vector<8x128xf32>
    %172 = tpu.matmul %1, %171, %cst_78 {dimension_numbers = #tpu.dot_dimension_numbers<[1], [0], [0], [1], [0, 0, 1, 1], [], []>} : vector<8x128xf32>, vector<128x128xf32>, vector<8x128xf32> -> vector<8x128xf32>
    %c0_79 = arith.constant 0 : index
    %c0_80 = arith.constant 0 : index
    %173 = vector.load %arg17[%c0_79, %c0_80] : memref<1x128xf32, #tpu.memory_space<vmem>>, vector<1x128xf32>
    %174 = vector.broadcast %173 : vector<1x128xf32> to vector<8x128xf32>
    %175 = arith.mulf %172, %174 : vector<8x128xf32>
    %cst_81 = arith.constant dense<0.000000e+00> : vector<8xf32>
    %176 = vector.multi_reduction <add>, %175, %cst_81 [1] : vector<8x128xf32> to vector<8xf32>
    %177 = vector.shape_cast %176 : vector<8xf32> to vector<8x1xf32>
    %c0_82 = arith.constant 0 : index
    %c0_83 = arith.constant 0 : index
    %178 = vector.load %arg18[%c0_82, %c0_83] : memref<1x1xf32, #tpu.memory_space<vmem>>, vector<1x1xf32>
    %179 = vector.broadcast %178 : vector<1x1xf32> to vector<8x1xf32>
    %180 = arith.addf %177, %179 : vector<8x1xf32>
    %181 = vector.shape_cast %180 : vector<8x1xf32> to vector<8x1xf32>
    %182 = vector.broadcast %181 : vector<8x1xf32> to vector<8x128xf32>
    %c0_84 = arith.constant 0 : index
    %c0_85 = arith.constant 0 : index
    %183 = vector.load %arg19[%c0_84, %c0_85] : memref<8x128xf32, #tpu.memory_space<vmem>>, vector<8x128xf32>
    tpu.vector_store %arg19[%c0_84, %c0_85], %182 {strides = array<i32>} : memref<8x128xf32, #tpu.memory_space<vmem>>, vector<8x128xf32>,
    return
  }
}

</mosaic_0001>

<llo_original>
// kernel: tpu_custom_call.1
$region0: #{tpu_custom_call.1}
  #allocation0 [shape = 'u32[]', space=smem, size = 0x4, offset = 0x4, fixed_abs, tag = 'smem constant byte address 0x4 - core index']
  #allocation1 [shape = 'u32[144,128]{1,0:T(1,128)}', space=vmem, size = 0x12000, scoped, tag = 'internal scratch']
  #allocation2 [shape = 'f32[1,1]{1,0:T(1,128)S(1)}', space=vmem, size = 0x200, scoped, tag = 'scoped memory for tpu_custom_call.1']
  %s0 = inlined_call_operand.vmem [shape: f32[128,128], index: 0, kind: input, shape index: {}]
  %s1 = inlined_call_operand.vmem [shape: bf16[128,128], index: 1, kind: input, shape index: {}]
  %s2 = inlined_call_operand.vmem [shape: f32[128,1], index: 2, kind: input, shape index: {}]
  %s3 = inlined_call_operand.vmem [shape: f32[128,8], index: 3, kind: input, shape index: {}]
  %s4 = inlined_call_operand.hbm [shape: f32[8,128], index: 4, kind: input, shape index: {}]
  %s5 = inlined_call_operand.vmem [shape: f32[8,1], index: 5, kind: input, shape index: {}]
  %s6 = inlined_call_operand.vmem [shape: f32[8,1], index: 6, kind: input, shape index: {}]
  %s7 = inlined_call_operand.vmem [shape: bf16[128,128], index: 7, kind: input, shape index: {}]
  %s8 = inlined_call_operand.hbm [shape: f32[1,128], index: 8, kind: input, shape index: {}]
  %s9 = inlined_call_operand.hbm [shape: f32[1,128], index: 9, kind: input, shape index: {}]
  %s10 = inlined_call_operand.vmem [shape: f32[1,128], index: 10, kind: input, shape index: {}]
  %s11 = inlined_call_operand.vmem [shape: bf16[128,128], index: 11, kind: input, shape index: {}]
  %s12 = inlined_call_operand.vmem [shape: f32[1,128], index: 12, kind: input, shape index: {}]
  %s13 = inlined_call_operand.vmem [shape: f32[1,128], index: 13, kind: input, shape index: {}]
  %s14 = inlined_call_operand.vmem [shape: f32[1,128], index: 14, kind: input, shape index: {}]
  %s15 = inlined_call_operand.hbm [shape: bf16[3,256,128], index: 15, kind: input, shape index: {}]
  %s16 = inlined_call_operand.vmem [shape: f32[3,1,128], index: 16, kind: input, shape index: {}]
  %s17 = inlined_call_operand.vmem [shape: f32[1,128], index: 17, kind: input, shape index: {}]
  %s18 = inlined_call_operand.<no memory space> [shape: f32[1,1], index: 18, kind: input, shape index: {}]
  %s19 = inlined_call_operand.hbm [shape: f32[8,128], index: 19, kind: output, shape index: {}]
  %s20 = sld [smem:[#allocation0]]
  $region102: #{tpu_custom_call.1} parent=0
    _
  %s22 = ssub.s32 1, %s20
  %s23 = scalar_select 0, %s22, %s20
  %v24 = vstv %s18
  %25 = vst [vmem:[#allocation2] sm:$0x1] %v24
  $region1: #{tpu_custom_call.1} parent=0
    #allocation3 [shape = 'u8[4096]{0}', space=vmem, size = 0x1000, scoped, tag = 'input window, operand 4, single buffered']
    #allocation4 [shape = 's32[1]{0}', space=sflag, size = 0x4, scoped, tag = 'scoped memory for tpu_custom_call.1']
    #allocation5 [shape = 's32[1]{0}', space=sflag, size = 0x4, scoped, tag = 'scoped memory for tpu_custom_call.1']
    #allocation6 [shape = 'u8[512]{0}', space=vmem, size = 0x400, scoped, tag = 'input window, operand 8, single buffered']
    #allocation7 [shape = 's32[1]{0}', space=sflag, size = 0x4, scoped, tag = 'scoped memory for tpu_custom_call.1']
    #allocation8 [shape = 'u8[512]{0}', space=vmem, size = 0x400, scoped, tag = 'input window, operand 9, single buffered']
    #allocation9 [shape = 'u8[196608]{0}', space=vmem, size = 0x30000, scoped, tag = 'input window, operand 15, single buffered']
    #allocation10 [shape = 's32[1]{0}', space=sflag, size = 0x4, scoped, tag = 'scoped memory for tpu_custom_call.1']
    #allocation11 [shape = 'u8[4096]{0}', space=vmem, size = 0x1000, scoped, tag = 'output window, operand 0, single buffered']
    %26 = vsyncpa [#allocation4], 0
    %27 = vsyncpa [#allocation7], 0
    %28 = vsyncpa [#allocation10], 0
    %29 = vsyncpa [#allocation5], 0
    // Predicated region
    $region2: #{tpu_custom_call.1} parent=1 // pred_check
      _
    $region3: #{tpu_custom_call.1} parent=1 // pred_check_branch
      %31 = sbr.rel (0) target = $region5
    $region4: #{tpu_custom_call.1} parent=1 // pred_region
      _
    $region5: #{tpu_custom_call.1} parent=1 // pred_fallthru
      _
    // Predicated region
    $region6: #{tpu_custom_call.1} parent=1 // pred_check
      _
    $region7: #{tpu_custom_call.1} parent=1 // pred_check_branch
      %33 = sbr.rel (0) target = $region9
    $region8: #{tpu_custom_call.1} parent=1 // pred_region
      _
    $region9: #{tpu_custom_call.1} parent=1 // pred_fallthru
      _
    // Predicated region
    $region10: #{tpu_custom_call.1} parent=1 // pred_check
      _
    $region11: #{tpu_custom_call.1} parent=1 // pred_check_branch
      %35 = sbr.rel (0) target = $region13
    $region12: #{tpu_custom_call.1} parent=1 // pred_region
      _
    $region13: #{tpu_custom_call.1} parent=1 // pred_fallthru
      _
    // Predicated region
    $region14: #{tpu_custom_call.1} parent=1 // pred_check
      _
    $region15: #{tpu_custom_call.1} parent=1 // pred_check_branch
      %37 = sbr.rel (0) target = $region17
    $region16: #{tpu_custom_call.1} parent=1 // pred_region
      _
    $region17: #{tpu_custom_call.1} parent=1 // pred_fallthru
      _
    // Predicated region
    $region18: #{tpu_custom_call.1} parent=1 // pred_check
      _
    $region19: #{tpu_custom_call.1} parent=1 // pred_check_branch
      %39 = sbr.rel (0) target = $region21
    $region20: #{tpu_custom_call.1} parent=1 // pred_region
      %s41 = ssub.s32 128, 128
      %42 = vsyncadd [#allocation4], %s41
      %s44 = sshll.u32 [#allocation3], 4
      %s45 = int_to_ptr.vmem [resolvable:$true] %s44
      %47 = dma.hbm_to_vmem [thread:$0]  %s4, 128, %s45, [#allocation4]
    $region21: #{tpu_custom_call.1} parent=1 // pred_fallthru
      _
    // Predicated region
    $region22: #{tpu_custom_call.1} parent=1 // pred_check
      _
    $region23: #{tpu_custom_call.1} parent=1 // pred_check_branch
      %49 = sbr.rel (0) target = $region25
    $region24: #{tpu_custom_call.1} parent=1 // pred_region
      _
    $region25: #{tpu_custom_call.1} parent=1 // pred_fallthru
      _
    // Predicated region
    $region26: #{tpu_custom_call.1} parent=1 // pred_check
      _
    $region27: #{tpu_custom_call.1} parent=1 // pred_check_branch
      %51 = sbr.rel (0) target = $region29
    $region28: #{tpu_custom_call.1} parent=1 // pred_region
      _
    $region29: #{tpu_custom_call.1} parent=1 // pred_fallthru
      _
    // Predicated region
    $region30: #{tpu_custom_call.1} parent=1 // pred_check
      _
    $region31: #{tpu_custom_call.1} parent=1 // pred_check_branch
      %53 = sbr.rel (0) target = $region33
    $region32: #{tpu_custom_call.1} parent=1 // pred_region
      _
    $region33: #{tpu_custom_call.1} parent=1 // pred_fallthru
      _
    // Predicated region
    $region34: #{tpu_custom_call.1} parent=1 // pred_check
      _
    $region35: #{tpu_custom_call.1} parent=1 // pred_check_branch
      %55 = sbr.rel (0) target = $region37
    $region36: #{tpu_custom_call.1} parent=1 // pred_region
      %s57 = ssub.s32 16, 16
      %58 = vsyncadd [#allocation7], %s57
      %s60 = sshll.u32 [#allocation6], 4
      %s61 = int_to_ptr.vmem [resolvable:$true] %s60
      %63 = dma.hbm_to_vmem [thread:$0]  %s8, 16, %s61, [#allocation7]
    $region37: #{tpu_custom_call.1} parent=1 // pred_fallthru
      _
    // Predicated region
    $region38: #{tpu_custom_call.1} parent=1 // pred_check
      _
    $region39: #{tpu_custom_call.1} parent=1 // pred_check_branch
      %65 = sbr.rel (0) target = $region41
    $region40: #{tpu_custom_call.1} parent=1 // pred_region
      %s67 = ssub.s32 16, 16
      %68 = vsyncadd [#allocation7], %s67
      %s70 = sshll.u32 [#allocation8], 4
      %s71 = int_to_ptr.vmem [resolvable:$true] %s70
      %73 = dma.hbm_to_vmem [thread:$0]  %s9, 16, %s71, [#allocation7]
    $region41: #{tpu_custom_call.1} parent=1 // pred_fallthru
      _
    // Predicated region
    $region42: #{tpu_custom_call.1} parent=1 // pred_check
      _
    $region43: #{tpu_custom_call.1} parent=1 // pred_check_branch
      %75 = sbr.rel (0) target = $region45
    $region44: #{tpu_custom_call.1} parent=1 // pred_region
      _
    $region45: #{tpu_custom_call.1} parent=1 // pred_fallthru
      _
    // Predicated region
    $region46: #{tpu_custom_call.1} parent=1 // pred_check
      _
    $region47: #{tpu_custom_call.1} parent=1 // pred_check_branch
      %77 = sbr.rel (0) target = $region49
    $region48: #{tpu_custom_call.1} parent=1 // pred_region
      _
    $region49: #{tpu_custom_call.1} parent=1 // pred_fallthru
      _
    // Predicated region
    $region50: #{tpu_custom_call.1} parent=1 // pred_check
      _
    $region51: #{tpu_custom_call.1} parent=1 // pred_check_branch
      %79 = sbr.rel (0) target = $region53
    $region52: #{tpu_custom_call.1} parent=1 // pred_region
      _
    $region53: #{tpu_custom_call.1} parent=1 // pred_fallthru
      _
    // Predicated region
    $region54: #{tpu_custom_call.1} parent=1 // pred_check
      _
    $region55: #{tpu_custom_call.1} parent=1 // pred_check_branch
      %81 = sbr.rel (0) target = $region57
    $region56: #{tpu_custom_call.1} parent=1 // pred_region
      _
    $region57: #{tpu_custom_call.1} parent=1 // pred_fallthru
      _
    // Predicated region
    $region58: #{tpu_custom_call.1} parent=1 // pred_check
      _
    $region59: #{tpu_custom_call.1} parent=1 // pred_check_branch
      %83 = sbr.rel (0) target = $region61
    $region60: #{tpu_custom_call.1} parent=1 // pred_region
      _
    $region61: #{tpu_custom_call.1} parent=1 // pred_fallthru
      _
    // Predicated region
    $region62: #{tpu_custom_call.1} parent=1 // pred_check
      _
    $region63: #{tpu_custom_call.1} parent=1 // pred_check_branch
      %85 = sbr.rel (0) target = $region65
    $region64: #{tpu_custom_call.1} parent=1 // pred_region
      %s87 = ssub.s32 6144, 6144
      %88 = vsyncadd [#allocation10], %s87
      %s89 = sshll.u32 [#allocation9], 4
      %s90 = int_to_ptr.vmem [resolvable:$true] %s89
      %95 = dma.hbm_to_vmem [thread:$0]  %s15, 6144, %s90, [#allocation10], 64, 64, 4
    $region65: #{tpu_custom_call.1} parent=1 // pred_fallthru
      _
    // Predicated region
    $region66: #{tpu_custom_call.1} parent=1 // pred_check
      _
    $region67: #{tpu_custom_call.1} parent=1 // pred_check_branch
      %97 = sbr.rel (0) target = $region69
    $region68: #{tpu_custom_call.1} parent=1 // pred_region
      _
    $region69: #{tpu_custom_call.1} parent=1 // pred_fallthru
      _
    // Predicated region
    $region70: #{tpu_custom_call.1} parent=1 // pred_check
      _
    $region71: #{tpu_custom_call.1} parent=1 // pred_check_branch
      %99 = sbr.rel (0) target = $region73
    $region72: #{tpu_custom_call.1} parent=1 // pred_region
      _
    $region73: #{tpu_custom_call.1} parent=1 // pred_fallthru
      _
    // Predicated region
    $region74: #{tpu_custom_call.1} parent=1 // pred_check
      _
    $region75: #{tpu_custom_call.1} parent=1 // pred_check_branch
      %101 = sbr.rel (0) target = $region77
    $region76: #{tpu_custom_call.1} parent=1 // pred_region
      _
    $region77: #{tpu_custom_call.1} parent=1 // pred_fallthru
      _
    // Predicated region
    $region78: #{tpu_custom_call.1} parent=1 // pred_check
      _
    $region79: #{tpu_custom_call.1} parent=1 // pred_check_branch
      %103 = sbr.rel (0) target = $region81
    $region80: #{tpu_custom_call.1} parent=1 // pred_region
      %104 = dma.done [#allocation4], 128
    $region81: #{tpu_custom_call.1} parent=1 // pred_fallthru
      _
    // Predicated region
    $region82: #{tpu_custom_call.1} parent=1 // pred_check
      _
    $region83: #{tpu_custom_call.1} parent=1 // pred_check_branch
      %106 = sbr.rel (0) target = $region85
    $region84: #{tpu_custom_call.1} parent=1 // pred_region
      %107 = dma.done [#allocation7], 16
    $region85: #{tpu_custom_call.1} parent=1 // pred_fallthru
      _
    // Predicated region
    $region86: #{tpu_custom_call.1} parent=1 // pred_check
      _
    $region87: #{tpu_custom_call.1} parent=1 // pred_check_branch
      %109 = sbr.rel (0) target = $region89
    $region88: #{tpu_custom_call.1} parent=1 // pred_region
      %110 = dma.done [#allocation7], 16
    $region89: #{tpu_custom_call.1} parent=1 // pred_fallthru
      _
    // Predicated region
    $region90: #{tpu_custom_call.1} parent=1 // pred_check
      _
    $region91: #{tpu_custom_call.1} parent=1 // pred_check_branch
      %112 = sbr.rel (0) target = $region93
    $region92: #{tpu_custom_call.1} parent=1 // pred_region
      %113 = dma.done [#allocation10], 6144
    $region93: #{tpu_custom_call.1} parent=1 // pred_fallthru
      _
    %v115 = vld [vmem:[%s3] sm:$0xff]
    %v116 = vld [vmem:[%s3 + $0x8] sm:$0xff]
    %v117 = vld [vmem:[%s3 + $0x10] sm:$0xff]
    %v118 = vld [vmem:[%s3 + $0x18] sm:$0xff]
    %v119 = vld [vmem:[%s3 + $0x20] sm:$0xff]
    %v120 = vld [vmem:[%s3 + $0x28] sm:$0xff]
    %v121 = vld [vmem:[%s3 + $0x30] sm:$0xff]
    %v122 = vld [vmem:[%s3 + $0x38] sm:$0xff]
    %v123 = vld [vmem:[%s3 + $0x40] sm:$0xff]
    %v124 = vld [vmem:[%s3 + $0x48] sm:$0xff]
    %v125 = vld [vmem:[%s3 + $0x50] sm:$0xff]
    %v126 = vld [vmem:[%s3 + $0x58] sm:$0xff]
    %v127 = vld [vmem:[%s3 + $0x60] sm:$0xff]
    %v128 = vld [vmem:[%s3 + $0x68] sm:$0xff]
    %v129 = vld [vmem:[%s3 + $0x70] sm:$0xff]
    %v130 = vld [vmem:[%s3 + $0x78] sm:$0xff]
    %v131 = vld [vmem:[#allocation3] sm:$0xff]
    %v132 = vlaneseq
    %v133 = vand.u32 %v132, 127
    %vm134 = vcmp.lt.s32.totalorder %v133, 76
    %v135 = vsel %vm134, 1, 0
    %v136 = vcvt.s32.f32 %v135
    %vm137 = vcmp.lt.s32.totalorder %v133, 32
    %v138 = vsel %vm137, 1, 0
    %v139 = vcvt.s32.f32 %v138
    %v140 = vlaneseq
    %v141 = vshrl.u32 %v140, 7
    %v142 = vadd.s32 %v141, 8
    %v143 = vadd.s32 %v141, 16
    %v144 = vadd.s32 %v141, 24
    %v145 = vadd.s32 %v141, 32
    %v146 = vadd.s32 %v141, 40
    %v147 = vadd.s32 %v141, 48
    %v148 = vadd.s32 %v141, 56
    %v149 = vadd.s32 %v141, 64
    %v150 = vadd.s32 %v141, 72
    %v151 = vadd.s32 %v141, 80
    %v152 = vadd.s32 %v141, 88
    %v153 = vadd.s32 %v141, 96
    %v154 = vadd.s32 %v141, 104
    %v155 = vadd.s32 %v141, 112
    %v156 = vadd.s32 %v141, 120
    %vm157 = vcmp.lt.s32.totalorder %v141, 16
    %vm158 = vcmp.lt.s32.totalorder %v142, 16
    %vm159 = vcmp.lt.s32.totalorder %v143, 16
    %vm160 = vcmp.lt.s32.totalorder %v144, 16
    %vm161 = vcmp.lt.s32.totalorder %v145, 16
    %vm162 = vcmp.lt.s32.totalorder %v146, 16
    %vm163 = vcmp.lt.s32.totalorder %v147, 16
    %vm164 = vcmp.lt.s32.totalorder %v148, 16
    %vm165 = vcmp.lt.s32.totalorder %v149, 16
    %vm166 = vcmp.lt.s32.totalorder %v150, 16
    %vm167 = vcmp.lt.s32.totalorder %v151, 16
    %vm168 = vcmp.lt.s32.totalorder %v152, 16
    %vm169 = vcmp.lt.s32.totalorder %v153, 16
    %vm170 = vcmp.lt.s32.totalorder %v154, 16
    %vm171 = vcmp.lt.s32.totalorder %v155, 16
    %vm172 = vcmp.lt.s32.totalorder %v156, 16
    %v173 = vsel %vm157, 1, 0
    %v174 = vsel %vm158, 1, 0
    %v175 = vsel %vm159, 1, 0
    %v176 = vsel %vm160, 1, 0
    %v177 = vsel %vm161, 1, 0
    %v178 = vsel %vm162, 1, 0
    %v179 = vsel %vm163, 1, 0
    %v180 = vsel %vm164, 1, 0
    %v181 = vsel %vm165, 1, 0
    %v182 = vsel %vm166, 1, 0
    %v183 = vsel %vm167, 1, 0
    %v184 = vsel %vm168, 1, 0
    %v185 = vsel %vm169, 1, 0
    %v186 = vsel %vm170, 1, 0
    %v187 = vsel %vm171, 1, 0
    %v188 = vsel %vm172, 1, 0
    %v189 = vcvt.s32.f32 %v173
    %v190 = vcvt.s32.f32 %v174
    %v191 = vcvt.s32.f32 %v175
    %v192 = vcvt.s32.f32 %v176
    %v193 = vcvt.s32.f32 %v177
    %v194 = vcvt.s32.f32 %v178
    %v195 = vcvt.s32.f32 %v179
    %v196 = vcvt.s32.f32 %v180
    %v197 = vcvt.s32.f32 %v181
    %v198 = vcvt.s32.f32 %v182
    %v199 = vcvt.s32.f32 %v183
    %v200 = vcvt.s32.f32 %v184
    %v201 = vcvt.s32.f32 %v185
    %v202 = vcvt.s32.f32 %v186
    %v203 = vcvt.s32.f32 %v187
    %v204 = vcvt.s32.f32 %v188
    %v205 = vld [vmem:[%s0] sm:$0xff]
    %v206 = vld [vmem:[%s0 + $0x8] sm:$0xff]
    %v207 = vld [vmem:[%s0 + $0x10] sm:$0xff]
    %v208 = vld [vmem:[%s0 + $0x18] sm:$0xff]
    %v209 = vld [vmem:[%s0 + $0x20] sm:$0xff]
    %v210 = vld [vmem:[%s0 + $0x28] sm:$0xff]
    %v211 = vld [vmem:[%s0 + $0x30] sm:$0xff]
    %v212 = vld [vmem:[%s0 + $0x38] sm:$0xff]
    %v213 = vld [vmem:[%s0 + $0x40] sm:$0xff]
    %v214 = vld [vmem:[%s0 + $0x48] sm:$0xff]
    %v215 = vld [vmem:[%s0 + $0x50] sm:$0xff]
    %v216 = vld [vmem:[%s0 + $0x58] sm:$0xff]
    %v217 = vld [vmem:[%s0 + $0x60] sm:$0xff]
    %v218 = vld [vmem:[%s0 + $0x68] sm:$0xff]
    %v219 = vld [vmem:[%s0 + $0x70] sm:$0xff]
    %v220 = vld [vmem:[%s0 + $0x78] sm:$0xff]
    %v221 = vpack.c.bf16 %v206, %v205
    %v222 = vpack.c.bf16 %v208, %v207
    %v223 = vpack.c.bf16 %v210, %v209
    %v224 = vpack.c.bf16 %v212, %v211
    %v225 = vpack.c.bf16 %v214, %v213
    %v226 = vpack.c.bf16 %v216, %v215
    %v227 = vpack.c.bf16 %v218, %v217
    %v228 = vpack.c.bf16 %v220, %v219
    %v229 = vld [vmem:[%s7] sm:$0xf]
    %v230 = vld [vmem:[%s7 + $0x4] sm:$0xf]
    %v231 = vld [vmem:[%s7 + $0x8] sm:$0xf]
    %v232 = vld [vmem:[%s7 + $0xc] sm:$0xf]
    %v233 = vld [vmem:[%s7 + $0x10] sm:$0xf]
    %v234 = vld [vmem:[%s7 + $0x14] sm:$0xf]
    %v235 = vld [vmem:[%s7 + $0x18] sm:$0xf]
    %v236 = vld [vmem:[%s7 + $0x1c] sm:$0xf]
    %v237 = vld [vmem:[%s7 + $0x20] sm:$0xf]
    %v238 = vld [vmem:[%s7 + $0x24] sm:$0xf]
    %v239 = vld [vmem:[%s7 + $0x28] sm:$0xf]
    %v240 = vld [vmem:[%s7 + $0x2c] sm:$0xf]
    %v241 = vld [vmem:[%s7 + $0x30] sm:$0xf]
    %v242 = vld [vmem:[%s7 + $0x34] sm:$0xf]
    %v243 = vld [vmem:[%s7 + $0x38] sm:$0xf]
    %v244 = vld [vmem:[%s7 + $0x3c] sm:$0xf]
    %v245 = vld [vmem:[#allocation6] sm:$0x1]
    %v247 = vlaneseq
    %v248 = vshrl.u32 %v247, 7
    %v249 = vsub.s32 0, %v248
    %v250 = vrot.slane %v245, %v249
    %v268 = vunpack.c.l.b16 %v229
    %v269 = vunpack.c.l.b16 %v230
    %v270 = vunpack.c.l.b16 %v231
    %v271 = vunpack.c.l.b16 %v232
    %v272 = vunpack.c.l.b16 %v233
    %v273 = vunpack.c.l.b16 %v234
    %v274 = vunpack.c.l.b16 %v235
    %v275 = vunpack.c.l.b16 %v236
    %v276 = vunpack.c.l.b16 %v237
    %v277 = vunpack.c.l.b16 %v238
    %v278 = vunpack.c.l.b16 %v239
    %v279 = vunpack.c.l.b16 %v240
    %v280 = vunpack.c.l.b16 %v241
    %v281 = vunpack.c.l.b16 %v242
    %v282 = vunpack.c.l.b16 %v243
    %v283 = vunpack.c.l.b16 %v244
    %v284 = vpack.c.b16 %v269, %v268
    %v285 = vpack.c.b16 %v271, %v270
    %v286 = vpack.c.b16 %v273, %v272
    %v287 = vpack.c.b16 %v275, %v274
    %v288 = vpack.c.b16 %v277, %v276
    %v289 = vpack.c.b16 %v279, %v278
    %v290 = vpack.c.b16 %v281, %v280
    %v291 = vpack.c.b16 %v283, %v282
    %300 = vmatprep.subr.bf16.mxu0 0
    %301 = vmatpush1.bf16.msra.mxu0 %v284
    %302 = vmatprep.subr.bf16.mxu0 0
    %303 = vmatpush1.bf16.msra.mxu0 %v285
    %304 = vmatprep.subr.bf16.mxu0 0
    %305 = vmatpush1.bf16.msra.mxu0 %v286
    %306 = vmatprep.subr.bf16.mxu0 0
    %307 = vmatpush1.bf16.msra.mxu0 %v287
    %308 = vmatprep.subr.bf16.mxu0 0
    %309 = vmatpush1.bf16.msra.mxu0 %v288
    %310 = vmatprep.subr.bf16.mxu0 0
    %311 = vmatpush1.bf16.msra.mxu0 %v289
    %312 = vmatprep.subr.bf16.mxu0 0
    %313 = vmatpush1.bf16.msra.mxu0 %v290
    %314 = vmatprep.subr.bf16.mxu0 0
    %315 = vmatpush1.bf16.msra.mxu0 %v291
    %316 = vmatprep.subr.bf16.mxu0 0
    %317 = vmatpush1.bf16.msra.mxu0 0
    %318 = vmatprep.subr.bf16.mxu0 0
    %319 = vmatpush1.bf16.msra.mxu0 0
    %320 = vmatprep.subr.bf16.mxu0 0
    %321 = vmatpush1.bf16.msra.mxu0 0
    %322 = vmatprep.subr.bf16.mxu0 0
    %323 = vmatpush1.bf16.msra.mxu0 0
    %324 = vmatprep.subr.bf16.mxu0 0
    %325 = vmatpush1.bf16.msra.mxu0 0
    %326 = vmatprep.subr.bf16.mxu0 0
    %327 = vmatpush1.bf16.msra.mxu0 0
    %328 = vmatprep.subr.bf16.mxu0 0
    %329 = vmatpush1.bf16.msra.mxu0 0
    %330 = vmatprep.subr.bf16.mxu0 0
    %331 = vmatpush1.bf16.msra.mxu0 0
    %332 = vmatprep.mubr.bf16.mxu0 0
    %333 = vmatmul.mubr.bf16.gmra.mrb[0].mxu0 %v221
    %v334 = vpop.f32.mrb[0].mxu0
    %v335 = vadd.f32 %v250, %v334
    %v336 = vpop.f32.mrb[0].mxu0
    %v337 = vpop.f32.mrb[0].mxu0
    %v338 = vadd.f32 %v250, %v337
    %v339 = vpop.f32.mrb[0].mxu0
    %340 = vmatprep.mubr.bf16.mxu0 0
    %341 = vmatmul.mubr.bf16.gmra.mrb[0].mxu0 %v222
    %v342 = vpop.f32.mrb[0].mxu0
    %v343 = vadd.f32 %v250, %v342
    %v344 = vpop.f32.mrb[0].mxu0
    %v345 = vpop.f32.mrb[0].mxu0
    %v346 = vadd.f32 %v250, %v345
    %v347 = vpop.f32.mrb[0].mxu0
    %348 = vmatprep.mubr.bf16.mxu0 0
    %349 = vmatmul.mubr.bf16.gmra.mrb[0].mxu0 %v223
    %v350 = vpop.f32.mrb[0].mxu0
    %v351 = vadd.f32 %v250, %v350
    %v352 = vpop.f32.mrb[0].mxu0
    %v353 = vpop.f32.mrb[0].mxu0
    %v354 = vadd.f32 %v250, %v353
    %v355 = vpop.f32.mrb[0].mxu0
    %356 = vmatprep.mubr.bf16.mxu0 0
    %357 = vmatmul.mubr.bf16.gmra.mrb[0].mxu0 %v224
    %v358 = vpop.f32.mrb[0].mxu0
    %v359 = vadd.f32 %v250, %v358
    %v360 = vpop.f32.mrb[0].mxu0
    %v361 = vpop.f32.mrb[0].mxu0
    %v362 = vadd.f32 %v250, %v361
    %v363 = vpop.f32.mrb[0].mxu0
    %364 = vmatprep.mubr.bf16.mxu0 0
    %365 = vmatmul.mubr.bf16.gmra.mrb[0].mxu0 %v225
    %v366 = vpop.f32.mrb[0].mxu0
    %v367 = vadd.f32 %v250, %v366
    %v368 = vpop.f32.mrb[0].mxu0
    %v369 = vpop.f32.mrb[0].mxu0
    %v370 = vadd.f32 %v250, %v369
    %v371 = vpop.f32.mrb[0].mxu0
    %372 = vmatprep.mubr.bf16.mxu0 0
    %373 = vmatmul.mubr.bf16.gmra.mrb[0].mxu0 %v226
    %v374 = vpop.f32.mrb[0].mxu0
    %v375 = vadd.f32 %v250, %v374
    %v376 = vpop.f32.mrb[0].mxu0
    %v377 = vpop.f32.mrb[0].mxu0
    %v378 = vadd.f32 %v250, %v377
    %v379 = vpop.f32.mrb[0].mxu0
    %380 = vmatprep.mubr.bf16.mxu0 0
    %381 = vmatmul.mubr.bf16.gmra.mrb[0].mxu0 %v227
    %v382 = vpop.f32.mrb[0].mxu0
    %v383 = vadd.f32 %v250, %v382
    %v384 = vpop.f32.mrb[0].mxu0
    %v385 = vpop.f32.mrb[0].mxu0
    %v386 = vadd.f32 %v250, %v385
    %v387 = vpop.f32.mrb[0].mxu0
    %388 = vmatprep.mubr.bf16.mxu0 0
    %389 = vmatmul.mubr.bf16.gmra.mrb[0].mxu0 %v228
    %v390 = vpop.f32.mrb[0].mxu0
    %v391 = vadd.f32 %v250, %v390
    %v392 = vpop.f32.mrb[0].mxu0
    %v393 = vpop.f32.mrb[0].mxu0
    %v394 = vadd.f32 %v250, %v393
    %v395 = vpop.f32.mrb[0].mxu0
    %396 = vdwg.mxu0
    %vm397 = vcmp.gt.f32.partialorder %v335, 0.0
    %vm398 = vcmp.gt.f32.partialorder %v338, 0.0
    %vm399 = vcmp.gt.f32.partialorder %v343, 0.0
    %vm400 = vcmp.gt.f32.partialorder %v346, 0.0
    %vm401 = vcmp.gt.f32.partialorder %v351, 0.0
    %vm402 = vcmp.gt.f32.partialorder %v354, 0.0
    %vm403 = vcmp.gt.f32.partialorder %v359, 0.0
    %vm404 = vcmp.gt.f32.partialorder %v362, 0.0
    %vm405 = vcmp.gt.f32.partialorder %v367, 0.0
    %vm406 = vcmp.gt.f32.partialorder %v370, 0.0
    %vm407 = vcmp.gt.f32.partialorder %v375, 0.0
    %vm408 = vcmp.gt.f32.partialorder %v378, 0.0
    %vm409 = vcmp.gt.f32.partialorder %v383, 0.0
    %vm410 = vcmp.gt.f32.partialorder %v386, 0.0
    %vm411 = vcmp.gt.f32.partialorder %v391, 0.0
    %vm412 = vcmp.gt.f32.partialorder %v394, 0.0
    %v413 = vmul.f32 %v335, 0.01
    %v414 = vmul.f32 %v338, 0.01
    %v415 = vmul.f32 %v343, 0.01
    %v416 = vmul.f32 %v346, 0.01
    %v417 = vmul.f32 %v351, 0.01
    %v418 = vmul.f32 %v354, 0.01
    %v419 = vmul.f32 %v359, 0.01
    %v420 = vmul.f32 %v362, 0.01
    %v421 = vmul.f32 %v367, 0.01
    %v422 = vmul.f32 %v370, 0.01
    %v423 = vmul.f32 %v375, 0.01
    %v424 = vmul.f32 %v378, 0.01
    %v425 = vmul.f32 %v383, 0.01
    %v426 = vmul.f32 %v386, 0.01
    %v427 = vmul.f32 %v391, 0.01
    %v428 = vmul.f32 %v394, 0.01
    %v429 = vsel %vm397, %v335, %v413
    %v430 = vsel %vm398, %v338, %v414
    %v431 = vsel %vm399, %v343, %v415
    %v432 = vsel %vm400, %v346, %v416
    %v433 = vsel %vm401, %v351, %v417
    %v434 = vsel %vm402, %v354, %v418
    %v435 = vsel %vm403, %v359, %v419
    %v436 = vsel %vm404, %v362, %v420
    %v437 = vsel %vm405, %v367, %v421
    %v438 = vsel %vm406, %v370, %v422
    %v439 = vsel %vm407, %v375, %v423
    %v440 = vsel %vm408, %v378, %v424
    %v441 = vsel %vm409, %v383, %v425
    %v442 = vsel %vm410, %v386, %v426
    %v443 = vsel %vm411, %v391, %v427
    %v444 = vsel %vm412, %v394, %v428
    %v445 = vmul.f32 %v429, %v189
    %v446 = vmul.f32 %v430, %v190
    %v447 = vmul.f32 %v431, %v191
    %v448 = vmul.f32 %v432, %v192
    %v449 = vmul.f32 %v433, %v193
    %v450 = vmul.f32 %v434, %v194
    %v451 = vmul.f32 %v435, %v195
    %v452 = vmul.f32 %v436, %v196
    %v453 = vmul.f32 %v437, %v197
    %v454 = vmul.f32 %v438, %v198
    %v455 = vmul.f32 %v439, %v199
    %v456 = vmul.f32 %v440, %v200
    %v457 = vmul.f32 %v441, %v201
    %v458 = vmul.f32 %v442, %v202
    %v459 = vmul.f32 %v443, %v203
    %v460 = vmul.f32 %v444, %v204
    %v461 = vld [vmem:[%s5] sm:$0xff]
    %v462 = vld [vmem:[#allocation8] sm:$0x1]
    %v463 = vld [vmem:[%s10] sm:$0x1]
    %464 = vmatprep.subr.mxu0 0.0
    %465 = vmatpush1.msra.mxu0 %v445
    %466 = vmatprep.subr.mxu0 0.0
    %467 = vmatpush1.msra.mxu0 %v446
    %468 = vmatprep.subr.mxu0 0.0
    %469 = vmatpush1.msra.mxu0 %v447
    %470 = vmatprep.subr.mxu0 0.0
    %471 = vmatpush1.msra.mxu0 %v448
    %472 = vmatprep.subr.mxu0 0.0
    %473 = vmatpush1.msra.mxu0 %v449
    %474 = vmatprep.subr.mxu0 0.0
    %475 = vmatpush1.msra.mxu0 %v450
    %476 = vmatprep.subr.mxu0 0.0
    %477 = vmatpush1.msra.mxu0 %v451
    %478 = vmatprep.subr.mxu0 0.0
    %479 = vmatpush1.msra.mxu0 %v452
    %480 = vmatprep.subr.mxu0 0.0
    %481 = vmatpush1.msra.mxu0 %v453
    %482 = vmatprep.subr.mxu0 0.0
    %483 = vmatpush1.msra.mxu0 %v454
    %484 = vmatprep.subr.mxu0 0.0
    %485 = vmatpush1.msra.mxu0 %v455
    %486 = vmatprep.subr.mxu0 0.0
    %487 = vmatpush1.msra.mxu0 %v456
    %488 = vmatprep.subr.mxu0 0.0
    %489 = vmatpush1.msra.mxu0 %v457
    %490 = vmatprep.subr.mxu0 0.0
    %491 = vmatpush1.msra.mxu0 %v458
    %492 = vmatprep.subr.mxu0 0.0
    %493 = vmatpush1.msra.mxu0 %v459
    %494 = vmatprep.subr.mxu0 0.0
    %495 = vmatpush1.msra.mxu0 %v460
    %496 = vmatprep.subr.mxu0 0.0
    %497 = vmatpush1.msra.mxu0 0.0
    %498 = vmatprep.subr.mxu0 0.0
    %499 = vmatpush1.msra.mxu0 0.0
    %500 = vmatprep.subr.mxu0 0.0
    %501 = vmatpush1.msra.mxu0 0.0
    %502 = vmatprep.subr.mxu0 0.0
    %503 = vmatpush1.msra.mxu0 0.0
    %504 = vmatprep.subr.mxu0 0.0
    %505 = vmatpush1.msra.mxu0 0.0
    %506 = vmatprep.subr.mxu0 0.0
    %507 = vmatpush1.msra.mxu0 0.0
    %508 = vmatprep.subr.mxu0 0.0
    %509 = vmatpush1.msra.mxu0 0.0
    %510 = vmatprep.subr.mxu0 0.0
    %511 = vmatpush1.msra.mxu0 0.0
    %512 = vmatprep.subr.mxu0 0.0
    %513 = vmatpush1.msra.mxu0 0.0
    %514 = vmatprep.subr.mxu0 0.0
    %515 = vmatpush1.msra.mxu0 0.0
    %516 = vmatprep.subr.mxu0 0.0
    %517 = vmatpush1.msra.mxu0 0.0
    %518 = vmatprep.subr.mxu0 0.0
    %519 = vmatpush1.msra.mxu0 0.0
    %520 = vmatprep.subr.mxu0 0.0
    %521 = vmatpush1.msra.mxu0 0.0
    %522 = vmatprep.subr.mxu0 0.0
    %523 = vmatpush1.msra.mxu0 0.0
    %524 = vmatprep.subr.mxu0 0.0
    %525 = vmatpush1.msra.mxu0 0.0
    %526 = vmatprep.subr.mxu0 0.0
    %527 = vmatpush1.msra.mxu0 0.0
    %528 = vmatprep.mubr.f32.mxu0 0.0
    %529 = vmatmul.mubr.f32.gmra.mrb[0].mxu0 %v131
    %v530 = vpop.f32.mrb[0].mxu0
    %v531 = vadd.f32 0.0, %v530
    %v532 = vpop.f32.mrb[0].mxu0
    %533 = vdwg.mxu0
    %534 = vadd.xlane.f32.xlu0 %v531
    %v535 = vpop.xlane.xlu0 %534
    %v536 = vmul.f32 %v535, %v461
    %538 = vset.pattern.permute.xlu0 0
    %539 = vperm.xlu0 %538, %v536
    %v540 = vpop.permute.xlu0 %539
    %vm542 = vcmask 64512
    %v544 = vsel %vm542, %v115, 0
    %v547 = vsel %vm542, %v116, 0
    %v550 = vsel %vm542, %v117, 0
    %v553 = vsel %vm542, %v118, 0
    %v556 = vsel %vm542, %v119, 0
    %v559 = vsel %vm542, %v120, 0
    %v562 = vsel %vm542, %v121, 0
    %v565 = vsel %vm542, %v122, 0
    %v568 = vsel %vm542, %v123, 0
    %v571 = vsel %vm542, %v124, 0
    %v574 = vsel %vm542, %v125, 0
    %v577 = vsel %vm542, %v126, 0
    %v580 = vsel %vm542, %v127, 0
    %v583 = vsel %vm542, %v128, 0
    %v586 = vsel %vm542, %v129, 0
    %v589 = vsel %vm542, %v130, 0
    %591 = vmatprep.subr.mxu0 0.0
    %592 = vmatpush1.msra.mxu0 %v540
    %593 = vmatprep.subr.mxu0 0.0
    %594 = vmatpush1.msra.mxu0 0.0
    %595 = vmatprep.subr.mxu0 0.0
    %596 = vmatpush1.msra.mxu0 0.0
    %597 = vmatprep.subr.mxu0 0.0
    %598 = vmatpush1.msra.mxu0 0.0
    %599 = vmatprep.subr.mxu0 0.0
    %600 = vmatpush1.msra.mxu0 0.0
    %601 = vmatprep.subr.mxu0 0.0
    %602 = vmatpush1.msra.mxu0 0.0
    %603 = vmatprep.subr.mxu0 0.0
    %604 = vmatpush1.msra.mxu0 0.0
    %605 = vmatprep.subr.mxu0 0.0
    %606 = vmatpush1.msra.mxu0 0.0
    %607 = vmatprep.subr.mxu0 0.0
    %608 = vmatpush1.msra.mxu0 0.0
    %609 = vmatprep.subr.mxu0 0.0
    %610 = vmatpush1.msra.mxu0 0.0
    %611 = vmatprep.subr.mxu0 0.0
    %612 = vmatpush1.msra.mxu0 0.0
    %613 = vmatprep.subr.mxu0 0.0
    %614 = vmatpush1.msra.mxu0 0.0
    %615 = vmatprep.subr.mxu0 0.0
    %616 = vmatpush1.msra.mxu0 0.0
    %617 = vmatprep.subr.mxu0 0.0
    %618 = vmatpush1.msra.mxu0 0.0
    %619 = vmatprep.subr.mxu0 0.0
    %620 = vmatpush1.msra.mxu0 0.0
    %621 = vmatprep.subr.mxu0 0.0
    %622 = vmatpush1.msra.mxu0 0.0
    %623 = vmatprep.subr.mxu0 0.0
    %624 = vmatpush1.msra.mxu0 0.0
    %625 = vmatprep.subr.mxu0 0.0
    %626 = vmatpush1.msra.mxu0 0.0
    %627 = vmatprep.subr.mxu0 0.0
    %628 = vmatpush1.msra.mxu0 0.0
    %629 = vmatprep.subr.mxu0 0.0
    %630 = vmatpush1.msra.mxu0 0.0
    %631 = vmatprep.subr.mxu0 0.0
    %632 = vmatpush1.msra.mxu0 0.0
    %633 = vmatprep.subr.mxu0 0.0
    %634 = vmatpush1.msra.mxu0 0.0
    %635 = vmatprep.subr.mxu0 0.0
    %636 = vmatpush1.msra.mxu0 0.0
    %637 = vmatprep.subr.mxu0 0.0
    %638 = vmatpush1.msra.mxu0 0.0
    %639 = vmatprep.subr.mxu0 0.0
    %640 = vmatpush1.msra.mxu0 0.0
    %641 = vmatprep.subr.mxu0 0.0
    %642 = vmatpush1.msra.mxu0 0.0
    %643 = vmatprep.subr.mxu0 0.0
    %644 = vmatpush1.msra.mxu0 0.0
    %645 = vmatprep.subr.mxu0 0.0
    %646 = vmatpush1.msra.mxu0 0.0
    %647 = vmatprep.subr.mxu0 0.0
    %648 = vmatpush1.msra.mxu0 0.0
    %649 = vmatprep.subr.mxu0 0.0
    %650 = vmatpush1.msra.mxu0 0.0
    %651 = vmatprep.subr.mxu0 0.0
    %652 = vmatpush1.msra.mxu0 0.0
    %653 = vmatprep.subr.mxu0 0.0
    %654 = vmatpush1.msra.mxu0 0.0
    %655 = vmatprep.mubr.f32.mxu0 0.0
    %656 = vmatmul.mubr.f32.gmra.mrb[0].mxu0 %v544
    %v657 = vpop.f32.mrb[0].mxu0
    %v658 = vadd.f32 0.0, %v657
    %v659 = vpop.f32.mrb[0].mxu0
    %660 = vmatprep.mubr.f32.mxu0 0.0
    %661 = vmatmul.mubr.f32.gmra.mrb[0].mxu0 %v547
    %v662 = vpop.f32.mrb[0].mxu0
    %v663 = vadd.f32 0.0, %v662
    %v664 = vpop.f32.mrb[0].mxu0
    %665 = vmatprep.mubr.f32.mxu0 0.0
    %666 = vmatmul.mubr.f32.gmra.mrb[0].mxu0 %v550
    %v667 = vpop.f32.mrb[0].mxu0
    %v668 = vadd.f32 0.0, %v667
    %v669 = vpop.f32.mrb[0].mxu0
    %670 = vmatprep.mubr.f32.mxu0 0.0
    %671 = vmatmul.mubr.f32.gmra.mrb[0].mxu0 %v553
    %v672 = vpop.f32.mrb[0].mxu0
    %v673 = vadd.f32 0.0, %v672
    %v674 = vpop.f32.mrb[0].mxu0
    %675 = vmatprep.mubr.f32.mxu0 0.0
    %676 = vmatmul.mubr.f32.gmra.mrb[0].mxu0 %v556
    %v677 = vpop.f32.mrb[0].mxu0
    %v678 = vadd.f32 0.0, %v677
    %v679 = vpop.f32.mrb[0].mxu0
    %680 = vmatprep.mubr.f32.mxu0 0.0
    %681 = vmatmul.mubr.f32.gmra.mrb[0].mxu0 %v559
    %v682 = vpop.f32.mrb[0].mxu0
    %v683 = vadd.f32 0.0, %v682
    %v684 = vpop.f32.mrb[0].mxu0
    %685 = vmatprep.mubr.f32.mxu0 0.0
    %686 = vmatmul.mubr.f32.gmra.mrb[0].mxu0 %v562
    %v687 = vpop.f32.mrb[0].mxu0
    %v688 = vadd.f32 0.0, %v687
    %v689 = vpop.f32.mrb[0].mxu0
    %690 = vmatprep.mubr.f32.mxu0 0.0
    %691 = vmatmul.mubr.f32.gmra.mrb[0].mxu0 %v565
    %v692 = vpop.f32.mrb[0].mxu0
    %v693 = vadd.f32 0.0, %v692
    %v694 = vpop.f32.mrb[0].mxu0
    %695 = vmatprep.mubr.f32.mxu0 0.0
    %696 = vmatmul.mubr.f32.gmra.mrb[0].mxu0 %v568
    %v697 = vpop.f32.mrb[0].mxu0
    %v698 = vadd.f32 0.0, %v697
    %v699 = vpop.f32.mrb[0].mxu0
    %700 = vmatprep.mubr.f32.mxu0 0.0
    %701 = vmatmul.mubr.f32.gmra.mrb[0].mxu0 %v571
    %v702 = vpop.f32.mrb[0].mxu0
    %v703 = vadd.f32 0.0, %v702
    %v704 = vpop.f32.mrb[0].mxu0
    %705 = vmatprep.mubr.f32.mxu0 0.0
    %706 = vmatmul.mubr.f32.gmra.mrb[0].mxu0 %v574
    %v707 = vpop.f32.mrb[0].mxu0
    %v708 = vadd.f32 0.0, %v707
    %v709 = vpop.f32.mrb[0].mxu0
    %710 = vmatprep.mubr.f32.mxu0 0.0
    %711 = vmatmul.mubr.f32.gmra.mrb[0].mxu0 %v577
    %v712 = vpop.f32.mrb[0].mxu0
    %v713 = vadd.f32 0.0, %v712
    %v714 = vpop.f32.mrb[0].mxu0
    %715 = vmatprep.mubr.f32.mxu0 0.0
    %716 = vmatmul.mubr.f32.gmra.mrb[0].mxu0 %v580
    %v717 = vpop.f32.mrb[0].mxu0
    %v718 = vadd.f32 0.0, %v717
    %v719 = vpop.f32.mrb[0].mxu0
    %720 = vmatprep.mubr.f32.mxu0 0.0
    %721 = vmatmul.mubr.f32.gmra.mrb[0].mxu0 %v583
    %v722 = vpop.f32.mrb[0].mxu0
    %v723 = vadd.f32 0.0, %v722
    %v724 = vpop.f32.mrb[0].mxu0
    %725 = vmatprep.mubr.f32.mxu0 0.0
    %726 = vmatmul.mubr.f32.gmra.mrb[0].mxu0 %v586
    %v727 = vpop.f32.mrb[0].mxu0
    %v728 = vadd.f32 0.0, %v727
    %v729 = vpop.f32.mrb[0].mxu0
    %730 = vmatprep.mubr.f32.mxu0 0.0
    %731 = vmatmul.mubr.f32.gmra.mrb[0].mxu0 %v589
    %v732 = vpop.f32.mrb[0].mxu0
    %v733 = vadd.f32 0.0, %v732
    %v734 = vpop.f32.mrb[0].mxu0
    %735 = vdwg.mxu0
    %v736 = vsub.f32 %v445, %v658
    %v737 = vsub.f32 %v446, %v663
    %v738 = vsub.f32 %v447, %v668
    %v739 = vsub.f32 %v448, %v673
    %v740 = vsub.f32 %v449, %v678
    %v741 = vsub.f32 %v450, %v683
    %v742 = vsub.f32 %v451, %v688
    %v743 = vsub.f32 %v452, %v693
    %v744 = vsub.f32 %v453, %v698
    %v745 = vsub.f32 %v454, %v703
    %v746 = vsub.f32 %v455, %v708
    %v747 = vsub.f32 %v456, %v713
    %v748 = vsub.f32 %v457, %v718
    %v749 = vsub.f32 %v458, %v723
    %v750 = vsub.f32 %v459, %v728
    %v751 = vsub.f32 %v460, %v733
    %v752 = vmul.f32 %v736, %v136
    %v753 = vmul.f32 %v737, %v136
    %v754 = vmul.f32 %v738, %v136
    %v755 = vmul.f32 %v739, %v136
    %v756 = vmul.f32 %v740, %v136
    %v757 = vmul.f32 %v741, %v136
    %v758 = vmul.f32 %v742, %v136
    %v759 = vmul.f32 %v743, %v136
    %v760 = vmul.f32 %v744, %v136
    %v761 = vmul.f32 %v745, %v136
    %v762 = vmul.f32 %v746, %v136
    %v763 = vmul.f32 %v747, %v136
    %v764 = vmul.f32 %v748, %v136
    %v765 = vmul.f32 %v749, %v136
    %v766 = vmul.f32 %v750, %v136
    %v767 = vmul.f32 %v751, %v136
    %v768 = vmul.f32 %v752, %v752
    %v769 = vmul.f32 %v753, %v753
    %v770 = vmul.f32 %v754, %v754
    %v771 = vmul.f32 %v755, %v755
    %v772 = vmul.f32 %v756, %v756
    %v773 = vmul.f32 %v757, %v757
    %v774 = vmul.f32 %v758, %v758
    %v775 = vmul.f32 %v759, %v759
    %v776 = vmul.f32 %v760, %v760
    %v777 = vmul.f32 %v761, %v761
    %v778 = vmul.f32 %v762, %v762
    %v779 = vmul.f32 %v763, %v763
    %v780 = vmul.f32 %v764, %v764
    %v781 = vmul.f32 %v765, %v765
    %v782 = vmul.f32 %v766, %v766
    %v783 = vmul.f32 %v767, %v767
    %784 = vmatprep.subr.mxu0 0.0
    %785 = vmatpush1.msra.mxu0 %v768
    %786 = vmatprep.subr.mxu0 0.0
    %787 = vmatpush1.msra.mxu0 %v769
    %788 = vmatprep.subr.mxu0 0.0
    %789 = vmatpush1.msra.mxu0 %v770
    %790 = vmatprep.subr.mxu0 0.0
    %791 = vmatpush1.msra.mxu0 %v771
    %792 = vmatprep.subr.mxu0 0.0
    %793 = vmatpush1.msra.mxu0 %v772
    %794 = vmatprep.subr.mxu0 0.0
    %795 = vmatpush1.msra.mxu0 %v773
    %796 = vmatprep.subr.mxu0 0.0
    %797 = vmatpush1.msra.mxu0 %v774
    %798 = vmatprep.subr.mxu0 0.0
    %799 = vmatpush1.msra.mxu0 %v775
    %800 = vmatprep.subr.mxu0 0.0
    %801 = vmatpush1.msra.mxu0 %v776
    %802 = vmatprep.subr.mxu0 0.0
    %803 = vmatpush1.msra.mxu0 %v777
    %804 = vmatprep.subr.mxu0 0.0
    %805 = vmatpush1.msra.mxu0 %v778
    %806 = vmatprep.subr.mxu0 0.0
    %807 = vmatpush1.msra.mxu0 %v779
    %808 = vmatprep.subr.mxu0 0.0
    %809 = vmatpush1.msra.mxu0 %v780
    %810 = vmatprep.subr.mxu0 0.0
    %811 = vmatpush1.msra.mxu0 %v781
    %812 = vmatprep.subr.mxu0 0.0
    %813 = vmatpush1.msra.mxu0 %v782
    %814 = vmatprep.subr.mxu0 0.0
    %815 = vmatpush1.msra.mxu0 %v783
    %816 = vmatprep.subr.mxu0 0.0
    %817 = vmatpush1.msra.mxu0 0.0
    %818 = vmatprep.subr.mxu0 0.0
    %819 = vmatpush1.msra.mxu0 0.0
    %820 = vmatprep.subr.mxu0 0.0
    %821 = vmatpush1.msra.mxu0 0.0
    %822 = vmatprep.subr.mxu0 0.0
    %823 = vmatpush1.msra.mxu0 0.0
    %824 = vmatprep.subr.mxu0 0.0
    %825 = vmatpush1.msra.mxu0 0.0
    %826 = vmatprep.subr.mxu0 0.0
    %827 = vmatpush1.msra.mxu0 0.0
    %828 = vmatprep.subr.mxu0 0.0
    %829 = vmatpush1.msra.mxu0 0.0
    %830 = vmatprep.subr.mxu0 0.0
    %831 = vmatpush1.msra.mxu0 0.0
    %832 = vmatprep.subr.mxu0 0.0
    %833 = vmatpush1.msra.mxu0 0.0
    %834 = vmatprep.subr.mxu0 0.0
    %835 = vmatpush1.msra.mxu0 0.0
    %836 = vmatprep.subr.mxu0 0.0
    %837 = vmatpush1.msra.mxu0 0.0
    %838 = vmatprep.subr.mxu0 0.0
    %839 = vmatpush1.msra.mxu0 0.0
    %840 = vmatprep.subr.mxu0 0.0
    %841 = vmatpush1.msra.mxu0 0.0
    %842 = vmatprep.subr.mxu0 0.0
    %843 = vmatpush1.msra.mxu0 0.0
    %844 = vmatprep.subr.mxu0 0.0
    %845 = vmatpush1.msra.mxu0 0.0
    %846 = vmatprep.subr.mxu0 0.0
    %847 = vmatpush1.msra.mxu0 0.0
    %848 = vmatprep.mubr.f32.mxu0 0.0
    %849 = vmatmul.mubr.f32.gmra.mrb[0].mxu0 %v131
    %v850 = vpop.f32.mrb[0].mxu0
    %v851 = vadd.f32 0.0, %v850
    %v852 = vpop.f32.mrb[0].mxu0
    %853 = vdwg.mxu0
    %854 = vadd.xlane.f32.xlu0 %v851
    %v855 = vpop.xlane.xlu0 %854
    %v856 = vmul.f32 %v855, %v461
    %858 = vset.pattern.permute.xlu0 0
    %859 = vperm.xlu0 %858, %v856
    %v860 = vpop.permute.xlu0 %859
    %862 = vmatprep.subr.mxu0 0.0
    %863 = vmatpush1.msra.mxu0 %v860
    %864 = vmatprep.subr.mxu0 0.0
    %865 = vmatpush1.msra.mxu0 0.0
    %866 = vmatprep.subr.mxu0 0.0
    %867 = vmatpush1.msra.mxu0 0.0
    %868 = vmatprep.subr.mxu0 0.0
    %869 = vmatpush1.msra.mxu0 0.0
    %870 = vmatprep.subr.mxu0 0.0
    %871 = vmatpush1.msra.mxu0 0.0
    %872 = vmatprep.subr.mxu0 0.0
    %873 = vmatpush1.msra.mxu0 0.0
    %874 = vmatprep.subr.mxu0 0.0
    %875 = vmatpush1.msra.mxu0 0.0
    %876 = vmatprep.subr.mxu0 0.0
    %877 = vmatpush1.msra.mxu0 0.0
    %878 = vmatprep.subr.mxu0 0.0
    %879 = vmatpush1.msra.mxu0 0.0
    %880 = vmatprep.subr.mxu0 0.0
    %881 = vmatpush1.msra.mxu0 0.0
    %882 = vmatprep.subr.mxu0 0.0
    %883 = vmatpush1.msra.mxu0 0.0
    %884 = vmatprep.subr.mxu0 0.0
    %885 = vmatpush1.msra.mxu0 0.0
    %886 = vmatprep.subr.mxu0 0.0
    %887 = vmatpush1.msra.mxu0 0.0
    %888 = vmatprep.subr.mxu0 0.0
    %889 = vmatpush1.msra.mxu0 0.0
    %890 = vmatprep.subr.mxu0 0.0
    %891 = vmatpush1.msra.mxu0 0.0
    %892 = vmatprep.subr.mxu0 0.0
    %893 = vmatpush1.msra.mxu0 0.0
    %894 = vmatprep.subr.mxu0 0.0
    %895 = vmatpush1.msra.mxu0 0.0
    %896 = vmatprep.subr.mxu0 0.0
    %897 = vmatpush1.msra.mxu0 0.0
    %898 = vmatprep.subr.mxu0 0.0
    %899 = vmatpush1.msra.mxu0 0.0
    %900 = vmatprep.subr.mxu0 0.0
    %901 = vmatpush1.msra.mxu0 0.0
    %902 = vmatprep.subr.mxu0 0.0
    %903 = vmatpush1.msra.mxu0 0.0
    %904 = vmatprep.subr.mxu0 0.0
    %905 = vmatpush1.msra.mxu0 0.0
    %906 = vmatprep.subr.mxu0 0.0
    %907 = vmatpush1.msra.mxu0 0.0
    %908 = vmatprep.subr.mxu0 0.0
    %909 = vmatpush1.msra.mxu0 0.0
    %910 = vmatprep.subr.mxu0 0.0
    %911 = vmatpush1.msra.mxu0 0.0
    %912 = vmatprep.subr.mxu0 0.0
    %913 = vmatpush1.msra.mxu0 0.0
    %914 = vmatprep.subr.mxu0 0.0
    %915 = vmatpush1.msra.mxu0 0.0
    %916 = vmatprep.subr.mxu0 0.0
    %917 = vmatpush1.msra.mxu0 0.0
    %918 = vmatprep.subr.mxu0 0.0
    %919 = vmatpush1.msra.mxu0 0.0
    %920 = vmatprep.subr.mxu0 0.0
    %921 = vmatpush1.msra.mxu0 0.0
    %922 = vmatprep.subr.mxu0 0.0
    %923 = vmatpush1.msra.mxu0 0.0
    %924 = vmatprep.subr.mxu0 0.0
    %925 = vmatpush1.msra.mxu0 0.0
    %926 = vmatprep.mubr.f32.mxu0 0.0
    %927 = vmatmul.mubr.f32.gmra.mrb[0].mxu0 %v544
    %v928 = vpop.f32.mrb[0].mxu0
    %v929 = vadd.f32 1e-05, %v928
    %v930 = vpop.f32.mrb[0].mxu0
    %931 = vmatprep.mubr.f32.mxu0 0.0
    %932 = vmatmul.mubr.f32.gmra.mrb[0].mxu0 %v547
    %v933 = vpop.f32.mrb[0].mxu0
    %v934 = vadd.f32 1e-05, %v933
    %v935 = vpop.f32.mrb[0].mxu0
    %936 = vmatprep.mubr.f32.mxu0 0.0
    %937 = vmatmul.mubr.f32.gmra.mrb[0].mxu0 %v550
    %v938 = vpop.f32.mrb[0].mxu0
    %v939 = vadd.f32 1e-05, %v938
    %v940 = vpop.f32.mrb[0].mxu0
    %941 = vmatprep.mubr.f32.mxu0 0.0
    %942 = vmatmul.mubr.f32.gmra.mrb[0].mxu0 %v553
    %v943 = vpop.f32.mrb[0].mxu0
    %v944 = vadd.f32 1e-05, %v943
    %v945 = vpop.f32.mrb[0].mxu0
    %946 = vmatprep.mubr.f32.mxu0 0.0
    %947 = vmatmul.mubr.f32.gmra.mrb[0].mxu0 %v556
    %v948 = vpop.f32.mrb[0].mxu0
    %v949 = vadd.f32 1e-05, %v948
    %v950 = vpop.f32.mrb[0].mxu0
    %951 = vmatprep.mubr.f32.mxu0 0.0
    %952 = vmatmul.mubr.f32.gmra.mrb[0].mxu0 %v559
    %v953 = vpop.f32.mrb[0].mxu0
    %v954 = vadd.f32 1e-05, %v953
    %v955 = vpop.f32.mrb[0].mxu0
    %956 = vmatprep.mubr.f32.mxu0 0.0
    %957 = vmatmul.mubr.f32.gmra.mrb[0].mxu0 %v562
    %v958 = vpop.f32.mrb[0].mxu0
    %v959 = vadd.f32 1e-05, %v958
    %v960 = vpop.f32.mrb[0].mxu0
    %961 = vmatprep.mubr.f32.mxu0 0.0
    %962 = vmatmul.mubr.f32.gmra.mrb[0].mxu0 %v565
    %v963 = vpop.f32.mrb[0].mxu0
    %v964 = vadd.f32 1e-05, %v963
    %v965 = vpop.f32.mrb[0].mxu0
    %966 = vmatprep.mubr.f32.mxu0 0.0
    %967 = vmatmul.mubr.f32.gmra.mrb[0].mxu0 %v568
    %v968 = vpop.f32.mrb[0].mxu0
    %v969 = vadd.f32 1e-05, %v968
    %v970 = vpop.f32.mrb[0].mxu0
    %971 = vmatprep.mubr.f32.mxu0 0.0
    %972 = vmatmul.mubr.f32.gmra.mrb[0].mxu0 %v571
    %v973 = vpop.f32.mrb[0].mxu0
    %v974 = vadd.f32 1e-05, %v973
    %v975 = vpop.f32.mrb[0].mxu0
    %976 = vmatprep.mubr.f32.mxu0 0.0
    %977 = vmatmul.mubr.f32.gmra.mrb[0].mxu0 %v574
    %v978 = vpop.f32.mrb[0].mxu0
    %v979 = vadd.f32 1e-05, %v978
    %v980 = vpop.f32.mrb[0].mxu0
    %981 = vmatprep.mubr.f32.mxu0 0.0
    %982 = vmatmul.mubr.f32.gmra.mrb[0].mxu0 %v577
    %v983 = vpop.f32.mrb[0].mxu0
    %v984 = vadd.f32 1e-05, %v983
    %v985 = vpop.f32.mrb[0].mxu0
    %986 = vmatprep.mubr.f32.mxu0 0.0
    %987 = vmatmul.mubr.f32.gmra.mrb[0].mxu0 %v580
    %v988 = vpop.f32.mrb[0].mxu0
    %v989 = vadd.f32 1e-05, %v988
    %v990 = vpop.f32.mrb[0].mxu0
    %991 = vmatprep.mubr.f32.mxu0 0.0
    %992 = vmatmul.mubr.f32.gmra.mrb[0].mxu0 %v583
    %v993 = vpop.f32.mrb[0].mxu0
    %v994 = vadd.f32 1e-05, %v993
    %v995 = vpop.f32.mrb[0].mxu0
    %996 = vmatprep.mubr.f32.mxu0 0.0
    %997 = vmatmul.mubr.f32.gmra.mrb[0].mxu0 %v586
    %v998 = vpop.f32.mrb[0].mxu0
    %v999 = vadd.f32 1e-05, %v998
    %v1000 = vpop.f32.mrb[0].mxu0
    %1001 = vmatprep.mubr.f32.mxu0 0.0
    %1002 = vmatmul.mubr.f32.gmra.mrb[0].mxu0 %v589
    %v1003 = vpop.f32.mrb[0].mxu0
    %v1004 = vadd.f32 1e-05, %v1003
    %v1005 = vpop.f32.mrb[0].mxu0
    %1006 = vdwg.mxu0
    %v1007 = vrsqrt.pop %v929
    %v1008 = vrsqrt.pop %v934
    %v1009 = vrsqrt.pop %v939
    %v1010 = vrsqrt.pop %v944
    %v1011 = vrsqrt.pop %v949
    %v1012 = vrsqrt.pop %v954
    %v1013 = vrsqrt.pop %v959
    %v1014 = vrsqrt.pop %v964
    %v1015 = vrsqrt.pop %v969
    %v1016 = vrsqrt.pop %v974
    %v1017 = vrsqrt.pop %v979
    %v1018 = vrsqrt.pop %v984
    %v1019 = vrsqrt.pop %v989
    %v1020 = vrsqrt.pop %v994
    %v1021 = vrsqrt.pop %v999
    %v1022 = vrsqrt.pop %v1004
    %v1023 = vmul.f32 %v752, %v1007
    %v1024 = vmul.f32 %v753, %v1008
    %v1025 = vmul.f32 %v754, %v1009
    %v1026 = vmul.f32 %v755, %v1010
    %v1027 = vmul.f32 %v756, %v1011
    %v1028 = vmul.f32 %v757, %v1012
    %v1029 = vmul.f32 %v758, %v1013
    %v1030 = vmul.f32 %v759, %v1014
    %v1031 = vmul.f32 %v760, %v1015
    %v1032 = vmul.f32 %v761, %v1016
    %v1033 = vmul.f32 %v762, %v1017
    %v1034 = vmul.f32 %v763, %v1018
    %v1035 = vmul.f32 %v764, %v1019
    %v1036 = vmul.f32 %v765, %v1020
    %v1037 = vmul.f32 %v766, %v1021
    %v1038 = vmul.f32 %v767, %v1022
    %v1040 = vlaneseq
    %v1041 = vshrl.u32 %v1040, 7
    %v1042 = vsub.s32 0, %v1041
    %v1043 = vrot.slane %v462, %v1042
    %v1045 = vmul.f32 %v1023, %v1043
    %v1046 = vmul.f32 %v1024, %v1043
    %v1047 = vmul.f32 %v1025, %v1043
    %v1048 = vmul.f32 %v1026, %v1043
    %v1049 = vmul.f32 %v1027, %v1043
    %v1050 = vmul.f32 %v1028, %v1043
    %v1051 = vmul.f32 %v1029, %v1043
    %v1052 = vmul.f32 %v1030, %v1043
    %v1053 = vmul.f32 %v1031, %v1043
    %v1054 = vmul.f32 %v1032, %v1043
    %v1055 = vmul.f32 %v1033, %v1043
    %v1056 = vmul.f32 %v1034, %v1043
    %v1057 = vmul.f32 %v1035, %v1043
    %v1058 = vmul.f32 %v1036, %v1043
    %v1059 = vmul.f32 %v1037, %v1043
    %v1060 = vmul.f32 %v1038, %v1043
    %v1062 = vlaneseq
    %v1063 = vshrl.u32 %v1062, 7
    %v1064 = vsub.s32 0, %v1063
    %v1065 = vrot.slane %v463, %v1064
    %v1067 = vadd.f32 %v1045, %v1065
    %v1068 = vadd.f32 %v1046, %v1065
    %v1069 = vadd.f32 %v1047, %v1065
    %v1070 = vadd.f32 %v1048, %v1065
    %v1071 = vadd.f32 %v1049, %v1065
    %v1072 = vadd.f32 %v1050, %v1065
    %v1073 = vadd.f32 %v1051, %v1065
    %v1074 = vadd.f32 %v1052, %v1065
    %v1075 = vadd.f32 %v1053, %v1065
    %v1076 = vadd.f32 %v1054, %v1065
    %v1077 = vadd.f32 %v1055, %v1065
    %v1078 = vadd.f32 %v1056, %v1065
    %v1079 = vadd.f32 %v1057, %v1065
    %v1080 = vadd.f32 %v1058, %v1065
    %v1081 = vadd.f32 %v1059, %v1065
    %v1082 = vadd.f32 %v1060, %v1065
    %v1083 = vpack.c.bf16 %v1068, %v1067
    %v1084 = vpack.c.bf16 %v1070, %v1069
    %v1085 = vpack.c.bf16 %v1072, %v1071
    %v1086 = vpack.c.bf16 %v1074, %v1073
    %v1087 = vpack.c.bf16 %v1076, %v1075
    %v1088 = vpack.c.bf16 %v1078, %v1077
    %v1089 = vpack.c.bf16 %v1080, %v1079
    %v1090 = vpack.c.bf16 %v1082, %v1081
    %v1091 = vld [vmem:[%s11] sm:$0xf]
    %v1092 = vld [vmem:[%s11 + $0x4] sm:$0xf]
    %v1093 = vld [vmem:[%s11 + $0x8] sm:$0xf]
    %v1094 = vld [vmem:[%s11 + $0xc] sm:$0xf]
    %v1095 = vld [vmem:[%s11 + $0x10] sm:$0xf]
    %v1096 = vld [vmem:[%s11 + $0x14] sm:$0xf]
    %v1097 = vld [vmem:[%s11 + $0x18] sm:$0xf]
    %v1098 = vld [vmem:[%s11 + $0x1c] sm:$0xf]
    %v1099 = vld [vmem:[%s11 + $0x20] sm:$0xf]
    %v1100 = vld [vmem:[%s11 + $0x24] sm:$0xf]
    %v1101 = vld [vmem:[%s11 + $0x28] sm:$0xf]
    %v1102 = vld [vmem:[%s11 + $0x2c] sm:$0xf]
    %v1103 = vld [vmem:[%s11 + $0x30] sm:$0xf]
    %v1104 = vld [vmem:[%s11 + $0x34] sm:$0xf]
    %v1105 = vld [vmem:[%s11 + $0x38] sm:$0xf]
    %v1106 = vld [vmem:[%s11 + $0x3c] sm:$0xf]
    %v1107 = vld [vmem:[%s12] sm:$0x1]
    %v1109 = vlaneseq
    %v1110 = vshrl.u32 %v1109, 7
    %v1111 = vsub.s32 0, %v1110
    %v1112 = vrot.slane %v1107, %v1111
    %v1130 = vunpack.c.l.b16 %v1091
    %v1131 = vunpack.c.l.b16 %v1092
    %v1132 = vunpack.c.l.b16 %v1093
    %v1133 = vunpack.c.l.b16 %v1094
    %v1134 = vunpack.c.l.b16 %v1095
    %v1135 = vunpack.c.l.b16 %v1096
    %v1136 = vunpack.c.l.b16 %v1097
    %v1137 = vunpack.c.l.b16 %v1098
    %v1138 = vunpack.c.l.b16 %v1099
    %v1139 = vunpack.c.l.b16 %v1100
    %v1140 = vunpack.c.l.b16 %v1101
    %v1141 = vunpack.c.l.b16 %v1102
    %v1142 = vunpack.c.l.b16 %v1103
    %v1143 = vunpack.c.l.b16 %v1104
    %v1144 = vunpack.c.l.b16 %v1105
    %v1145 = vunpack.c.l.b16 %v1106
    %v1146 = vpack.c.b16 %v1131, %v1130
    %v1147 = vpack.c.b16 %v1133, %v1132
    %v1148 = vpack.c.b16 %v1135, %v1134
    %v1149 = vpack.c.b16 %v1137, %v1136
    %v1150 = vpack.c.b16 %v1139, %v1138
    %v1151 = vpack.c.b16 %v1141, %v1140
    %v1152 = vpack.c.b16 %v1143, %v1142
    %v1153 = vpack.c.b16 %v1145, %v1144
    %1162 = vmatprep.subr.bf16.mxu0 0
    %1163 = vmatpush1.bf16.msra.mxu0 %v1146
    %1164 = vmatprep.subr.bf16.mxu0 0
    %1165 = vmatpush1.bf16.msra.mxu0 %v1147
    %1166 = vmatprep.subr.bf16.mxu0 0
    %1167 = vmatpush1.bf16.msra.mxu0 %v1148
    %1168 = vmatprep.subr.bf16.mxu0 0
    %1169 = vmatpush1.bf16.msra.mxu0 %v1149
    %1170 = vmatprep.subr.bf16.mxu0 0
    %1171 = vmatpush1.bf16.msra.mxu0 %v1150
    %1172 = vmatprep.subr.bf16.mxu0 0
    %1173 = vmatpush1.bf16.msra.mxu0 %v1151
    %1174 = vmatprep.subr.bf16.mxu0 0
    %1175 = vmatpush1.bf16.msra.mxu0 %v1152
    %1176 = vmatprep.subr.bf16.mxu0 0
    %1177 = vmatpush1.bf16.msra.mxu0 %v1153
    %1178 = vmatprep.subr.bf16.mxu0 0
    %1179 = vmatpush1.bf16.msra.mxu0 0
    %1180 = vmatprep.subr.bf16.mxu0 0
    %1181 = vmatpush1.bf16.msra.mxu0 0
    %1182 = vmatprep.subr.bf16.mxu0 0
    %1183 = vmatpush1.bf16.msra.mxu0 0
    %1184 = vmatprep.subr.bf16.mxu0 0
    %1185 = vmatpush1.bf16.msra.mxu0 0
    %1186 = vmatprep.subr.bf16.mxu0 0
    %1187 = vmatpush1.bf16.msra.mxu0 0
    %1188 = vmatprep.subr.bf16.mxu0 0
    %1189 = vmatpush1.bf16.msra.mxu0 0
    %1190 = vmatprep.subr.bf16.mxu0 0
    %1191 = vmatpush1.bf16.msra.mxu0 0
    %1192 = vmatprep.subr.bf16.mxu0 0
    %1193 = vmatpush1.bf16.msra.mxu0 0
    %1194 = vmatprep.mubr.bf16.mxu0 0
    %1195 = vmatmul.mubr.bf16.gmra.mrb[0].mxu0 %v1083
    %v1196 = vpop.f32.mrb[0].mxu0
    %v1197 = vadd.f32 %v1112, %v1196
    %v1198 = vpop.f32.mrb[0].mxu0
    %v1199 = vpop.f32.mrb[0].mxu0
    %v1200 = vadd.f32 %v1112, %v1199
    %v1201 = vpop.f32.mrb[0].mxu0
    %1202 = vmatprep.mubr.bf16.mxu0 0
    %1203 = vmatmul.mubr.bf16.gmra.mrb[0].mxu0 %v1084
    %v1204 = vpop.f32.mrb[0].mxu0
    %v1205 = vadd.f32 %v1112, %v1204
    %v1206 = vpop.f32.mrb[0].mxu0
    %v1207 = vpop.f32.mrb[0].mxu0
    %v1208 = vadd.f32 %v1112, %v1207
    %v1209 = vpop.f32.mrb[0].mxu0
    %1210 = vmatprep.mubr.bf16.mxu0 0
    %1211 = vmatmul.mubr.bf16.gmra.mrb[0].mxu0 %v1085
    %v1212 = vpop.f32.mrb[0].mxu0
    %v1213 = vadd.f32 %v1112, %v1212
    %v1214 = vpop.f32.mrb[0].mxu0
    %v1215 = vpop.f32.mrb[0].mxu0
    %v1216 = vadd.f32 %v1112, %v1215
    %v1217 = vpop.f32.mrb[0].mxu0
    %1218 = vmatprep.mubr.bf16.mxu0 0
    %1219 = vmatmul.mubr.bf16.gmra.mrb[0].mxu0 %v1086
    %v1220 = vpop.f32.mrb[0].mxu0
    %v1221 = vadd.f32 %v1112, %v1220
    %v1222 = vpop.f32.mrb[0].mxu0
    %v1223 = vpop.f32.mrb[0].mxu0
    %v1224 = vadd.f32 %v1112, %v1223
    %v1225 = vpop.f32.mrb[0].mxu0
    %1226 = vmatprep.mubr.bf16.mxu0 0
    %1227 = vmatmul.mubr.bf16.gmra.mrb[0].mxu0 %v1087
    %v1228 = vpop.f32.mrb[0].mxu0
    %v1229 = vadd.f32 %v1112, %v1228
    %v1230 = vpop.f32.mrb[0].mxu0
    %v1231 = vpop.f32.mrb[0].mxu0
    %v1232 = vadd.f32 %v1112, %v1231
    %v1233 = vpop.f32.mrb[0].mxu0
    %1234 = vmatprep.mubr.bf16.mxu0 0
    %1235 = vmatmul.mubr.bf16.gmra.mrb[0].mxu0 %v1088
    %v1236 = vpop.f32.mrb[0].mxu0
    %v1237 = vadd.f32 %v1112, %v1236
    %v1238 = vpop.f32.mrb[0].mxu0
    %v1239 = vpop.f32.mrb[0].mxu0
    %v1240 = vadd.f32 %v1112, %v1239
    %v1241 = vpop.f32.mrb[0].mxu0
    %1242 = vmatprep.mubr.bf16.mxu0 0
    %1243 = vmatmul.mubr.bf16.gmra.mrb[0].mxu0 %v1089
    %v1244 = vpop.f32.mrb[0].mxu0
    %v1245 = vadd.f32 %v1112, %v1244
    %v1246 = vpop.f32.mrb[0].mxu0
    %v1247 = vpop.f32.mrb[0].mxu0
    %v1248 = vadd.f32 %v1112, %v1247
    %v1249 = vpop.f32.mrb[0].mxu0
    %1250 = vmatprep.mubr.bf16.mxu0 0
    %1251 = vmatmul.mubr.bf16.gmra.mrb[0].mxu0 %v1090
    %v1252 = vpop.f32.mrb[0].mxu0
    %v1253 = vadd.f32 %v1112, %v1252
    %v1254 = vpop.f32.mrb[0].mxu0
    %v1255 = vpop.f32.mrb[0].mxu0
    %v1256 = vadd.f32 %v1112, %v1255
    %v1257 = vpop.f32.mrb[0].mxu0
    %1258 = vdwg.mxu0
    %vm1259 = vcmp.gt.f32.partialorder %v1197, 0.0
    %vm1260 = vcmp.gt.f32.partialorder %v1200, 0.0
    %vm1261 = vcmp.gt.f32.partialorder %v1205, 0.0
    %vm1262 = vcmp.gt.f32.partialorder %v1208, 0.0
    %vm1263 = vcmp.gt.f32.partialorder %v1213, 0.0
    %vm1264 = vcmp.gt.f32.partialorder %v1216, 0.0
    %vm1265 = vcmp.gt.f32.partialorder %v1221, 0.0
    %vm1266 = vcmp.gt.f32.partialorder %v1224, 0.0
    %vm1267 = vcmp.gt.f32.partialorder %v1229, 0.0
    %vm1268 = vcmp.gt.f32.partialorder %v1232, 0.0
    %vm1269 = vcmp.gt.f32.partialorder %v1237, 0.0
    %vm1270 = vcmp.gt.f32.partialorder %v1240, 0.0
    %vm1271 = vcmp.gt.f32.partialorder %v1245, 0.0
    %vm1272 = vcmp.gt.f32.partialorder %v1248, 0.0
    %vm1273 = vcmp.gt.f32.partialorder %v1253, 0.0
    %vm1274 = vcmp.gt.f32.partialorder %v1256, 0.0
    %v1275 = vmul.f32 %v1197, 0.01
    %v1276 = vmul.f32 %v1200, 0.01
    %v1277 = vmul.f32 %v1205, 0.01
    %v1278 = vmul.f32 %v1208, 0.01
    %v1279 = vmul.f32 %v1213, 0.01
    %v1280 = vmul.f32 %v1216, 0.01
    %v1281 = vmul.f32 %v1221, 0.01
    %v1282 = vmul.f32 %v1224, 0.01
    %v1283 = vmul.f32 %v1229, 0.01
    %v1284 = vmul.f32 %v1232, 0.01
    %v1285 = vmul.f32 %v1237, 0.01
    %v1286 = vmul.f32 %v1240, 0.01
    %v1287 = vmul.f32 %v1245, 0.01
    %v1288 = vmul.f32 %v1248, 0.01
    %v1289 = vmul.f32 %v1253, 0.01
    %v1290 = vmul.f32 %v1256, 0.01
    %v1291 = vsel %vm1259, %v1197, %v1275
    %v1292 = vsel %vm1260, %v1200, %v1276
    %v1293 = vsel %vm1261, %v1205, %v1277
    %v1294 = vsel %vm1262, %v1208, %v1278
    %v1295 = vsel %vm1263, %v1213, %v1279
    %v1296 = vsel %vm1264, %v1216, %v1280
    %v1297 = vsel %vm1265, %v1221, %v1281
    %v1298 = vsel %vm1266, %v1224, %v1282
    %v1299 = vsel %vm1267, %v1229, %v1283
    %v1300 = vsel %vm1268, %v1232, %v1284
    %v1301 = vsel %vm1269, %v1237, %v1285
    %v1302 = vsel %vm1270, %v1240, %v1286
    %v1303 = vsel %vm1271, %v1245, %v1287
    %v1304 = vsel %vm1272, %v1248, %v1288
    %v1305 = vsel %vm1273, %v1253, %v1289
    %v1306 = vsel %vm1274, %v1256, %v1290
    %v1307 = vmul.f32 %v1291, %v189
    %v1308 = vmul.f32 %v1292, %v190
    %v1309 = vmul.f32 %v1293, %v191
    %v1310 = vmul.f32 %v1294, %v192
    %v1311 = vmul.f32 %v1295, %v193
    %v1312 = vmul.f32 %v1296, %v194
    %v1313 = vmul.f32 %v1297, %v195
    %v1314 = vmul.f32 %v1298, %v196
    %v1315 = vmul.f32 %v1299, %v197
    %v1316 = vmul.f32 %v1300, %v198
    %v1317 = vmul.f32 %v1301, %v199
    %v1318 = vmul.f32 %v1302, %v200
    %v1319 = vmul.f32 %v1303, %v201
    %v1320 = vmul.f32 %v1304, %v202
    %v1321 = vmul.f32 %v1305, %v203
    %v1322 = vmul.f32 %v1306, %v204
    %v1323 = vld [vmem:[%s6] sm:$0xff]
    %v1324 = vld [vmem:[%s13] sm:$0x1]
    %v1325 = vld [vmem:[%s14] sm:$0x1]
    %1326 = vmatprep.subr.mxu0 0.0
    %1327 = vmatpush1.msra.mxu0 %v1307
    %1328 = vmatprep.subr.mxu0 0.0
    %1329 = vmatpush1.msra.mxu0 %v1308
    %1330 = vmatprep.subr.mxu0 0.0
    %1331 = vmatpush1.msra.mxu0 %v1309
    %1332 = vmatprep.subr.mxu0 0.0
    %1333 = vmatpush1.msra.mxu0 %v1310
    %1334 = vmatprep.subr.mxu0 0.0
    %1335 = vmatpush1.msra.mxu0 %v1311
    %1336 = vmatprep.subr.mxu0 0.0
    %1337 = vmatpush1.msra.mxu0 %v1312
    %1338 = vmatprep.subr.mxu0 0.0
    %1339 = vmatpush1.msra.mxu0 %v1313
    %1340 = vmatprep.subr.mxu0 0.0
    %1341 = vmatpush1.msra.mxu0 %v1314
    %1342 = vmatprep.subr.mxu0 0.0
    %1343 = vmatpush1.msra.mxu0 %v1315
    %1344 = vmatprep.subr.mxu0 0.0
    %1345 = vmatpush1.msra.mxu0 %v1316
    %1346 = vmatprep.subr.mxu0 0.0
    %1347 = vmatpush1.msra.mxu0 %v1317
    %1348 = vmatprep.subr.mxu0 0.0
    %1349 = vmatpush1.msra.mxu0 %v1318
    %1350 = vmatprep.subr.mxu0 0.0
    %1351 = vmatpush1.msra.mxu0 %v1319
    %1352 = vmatprep.subr.mxu0 0.0
    %1353 = vmatpush1.msra.mxu0 %v1320
    %1354 = vmatprep.subr.mxu0 0.0
    %1355 = vmatpush1.msra.mxu0 %v1321
    %1356 = vmatprep.subr.mxu0 0.0
    %1357 = vmatpush1.msra.mxu0 %v1322
    %1358 = vmatprep.subr.mxu0 0.0
    %1359 = vmatpush1.msra.mxu0 0.0
    %1360 = vmatprep.subr.mxu0 0.0
    %1361 = vmatpush1.msra.mxu0 0.0
    %1362 = vmatprep.subr.mxu0 0.0
    %1363 = vmatpush1.msra.mxu0 0.0
    %1364 = vmatprep.subr.mxu0 0.0
    %1365 = vmatpush1.msra.mxu0 0.0
    %1366 = vmatprep.subr.mxu0 0.0
    %1367 = vmatpush1.msra.mxu0 0.0
    %1368 = vmatprep.subr.mxu0 0.0
    %1369 = vmatpush1.msra.mxu0 0.0
    %1370 = vmatprep.subr.mxu0 0.0
    %1371 = vmatpush1.msra.mxu0 0.0
    %1372 = vmatprep.subr.mxu0 0.0
    %1373 = vmatpush1.msra.mxu0 0.0
    %1374 = vmatprep.subr.mxu0 0.0
    %1375 = vmatpush1.msra.mxu0 0.0
    %1376 = vmatprep.subr.mxu0 0.0
    %1377 = vmatpush1.msra.mxu0 0.0
    %1378 = vmatprep.subr.mxu0 0.0
    %1379 = vmatpush1.msra.mxu0 0.0
    %1380 = vmatprep.subr.mxu0 0.0
    %1381 = vmatpush1.msra.mxu0 0.0
    %1382 = vmatprep.subr.mxu0 0.0
    %1383 = vmatpush1.msra.mxu0 0.0
    %1384 = vmatprep.subr.mxu0 0.0
    %1385 = vmatpush1.msra.mxu0 0.0
    %1386 = vmatprep.subr.mxu0 0.0
    %1387 = vmatpush1.msra.mxu0 0.0
    %1388 = vmatprep.subr.mxu0 0.0
    %1389 = vmatpush1.msra.mxu0 0.0
    %1390 = vmatprep.mubr.f32.mxu0 0.0
    %1391 = vmatmul.mubr.f32.gmra.mrb[0].mxu0 %v131
    %v1392 = vpop.f32.mrb[0].mxu0
    %v1393 = vadd.f32 0.0, %v1392
    %v1394 = vpop.f32.mrb[0].mxu0
    %1395 = vdwg.mxu0
    %1396 = vadd.xlane.f32.xlu0 %v1393
    %v1397 = vpop.xlane.xlu0 %1396
    %v1398 = vmul.f32 %v1397, %v1323
    %1400 = vset.pattern.permute.xlu0 0
    %1401 = vperm.xlu0 %1400, %v1398
    %v1402 = vpop.permute.xlu0 %1401
    %1404 = vmatprep.subr.mxu0 0.0
    %1405 = vmatpush1.msra.mxu0 %v1402
    %1406 = vmatprep.subr.mxu0 0.0
    %1407 = vmatpush1.msra.mxu0 0.0
    %1408 = vmatprep.subr.mxu0 0.0
    %1409 = vmatpush1.msra.mxu0 0.0
    %1410 = vmatprep.subr.mxu0 0.0
    %1411 = vmatpush1.msra.mxu0 0.0
    %1412 = vmatprep.subr.mxu0 0.0
    %1413 = vmatpush1.msra.mxu0 0.0
    %1414 = vmatprep.subr.mxu0 0.0
    %1415 = vmatpush1.msra.mxu0 0.0
    %1416 = vmatprep.subr.mxu0 0.0
    %1417 = vmatpush1.msra.mxu0 0.0
    %1418 = vmatprep.subr.mxu0 0.0
    %1419 = vmatpush1.msra.mxu0 0.0
    %1420 = vmatprep.subr.mxu0 0.0
    %1421 = vmatpush1.msra.mxu0 0.0
    %1422 = vmatprep.subr.mxu0 0.0
    %1423 = vmatpush1.msra.mxu0 0.0
    %1424 = vmatprep.subr.mxu0 0.0
    %1425 = vmatpush1.msra.mxu0 0.0
    %1426 = vmatprep.subr.mxu0 0.0
    %1427 = vmatpush1.msra.mxu0 0.0
    %1428 = vmatprep.subr.mxu0 0.0
    %1429 = vmatpush1.msra.mxu0 0.0
    %1430 = vmatprep.subr.mxu0 0.0
    %1431 = vmatpush1.msra.mxu0 0.0
    %1432 = vmatprep.subr.mxu0 0.0
    %1433 = vmatpush1.msra.mxu0 0.0
    %1434 = vmatprep.subr.mxu0 0.0
    %1435 = vmatpush1.msra.mxu0 0.0
    %1436 = vmatprep.subr.mxu0 0.0
    %1437 = vmatpush1.msra.mxu0 0.0
    %1438 = vmatprep.subr.mxu0 0.0
    %1439 = vmatpush1.msra.mxu0 0.0
    %1440 = vmatprep.subr.mxu0 0.0
    %1441 = vmatpush1.msra.mxu0 0.0
    %1442 = vmatprep.subr.mxu0 0.0
    %1443 = vmatpush1.msra.mxu0 0.0
    %1444 = vmatprep.subr.mxu0 0.0
    %1445 = vmatpush1.msra.mxu0 0.0
    %1446 = vmatprep.subr.mxu0 0.0
    %1447 = vmatpush1.msra.mxu0 0.0
    %1448 = vmatprep.subr.mxu0 0.0
    %1449 = vmatpush1.msra.mxu0 0.0
    %1450 = vmatprep.subr.mxu0 0.0
    %1451 = vmatpush1.msra.mxu0 0.0
    %1452 = vmatprep.subr.mxu0 0.0
    %1453 = vmatpush1.msra.mxu0 0.0
    %1454 = vmatprep.subr.mxu0 0.0
    %1455 = vmatpush1.msra.mxu0 0.0
    %1456 = vmatprep.subr.mxu0 0.0
    %1457 = vmatpush1.msra.mxu0 0.0
    %1458 = vmatprep.subr.mxu0 0.0
    %1459 = vmatpush1.msra.mxu0 0.0
    %1460 = vmatprep.subr.mxu0 0.0
    %1461 = vmatpush1.msra.mxu0 0.0
    %1462 = vmatprep.subr.mxu0 0.0
    %1463 = vmatpush1.msra.mxu0 0.0
    %1464 = vmatprep.subr.mxu0 0.0
    %1465 = vmatpush1.msra.mxu0 0.0
    %1466 = vmatprep.subr.mxu0 0.0
    %1467 = vmatpush1.msra.mxu0 0.0
    %1468 = vmatprep.mubr.f32.mxu0 0.0
    %1469 = vmatmul.mubr.f32.gmra.mrb[0].mxu0 %v544
    %v1470 = vpop.f32.mrb[0].mxu0
    %v1471 = vadd.f32 0.0, %v1470
    %v1472 = vpop.f32.mrb[0].mxu0
    %1473 = vmatprep.mubr.f32.mxu0 0.0
    %1474 = vmatmul.mubr.f32.gmra.mrb[0].mxu0 %v547
    %v1475 = vpop.f32.mrb[0].mxu0
    %v1476 = vadd.f32 0.0, %v1475
    %v1477 = vpop.f32.mrb[0].mxu0
    %1478 = vmatprep.mubr.f32.mxu0 0.0
    %1479 = vmatmul.mubr.f32.gmra.mrb[0].mxu0 %v550
    %v1480 = vpop.f32.mrb[0].mxu0
    %v1481 = vadd.f32 0.0, %v1480
    %v1482 = vpop.f32.mrb[0].mxu0
    %1483 = vmatprep.mubr.f32.mxu0 0.0
    %1484 = vmatmul.mubr.f32.gmra.mrb[0].mxu0 %v553
    %v1485 = vpop.f32.mrb[0].mxu0
    %v1486 = vadd.f32 0.0, %v1485
    %v1487 = vpop.f32.mrb[0].mxu0
    %1488 = vmatprep.mubr.f32.mxu0 0.0
    %1489 = vmatmul.mubr.f32.gmra.mrb[0].mxu0 %v556
    %v1490 = vpop.f32.mrb[0].mxu0
    %v1491 = vadd.f32 0.0, %v1490
    %v1492 = vpop.f32.mrb[0].mxu0
    %1493 = vmatprep.mubr.f32.mxu0 0.0
    %1494 = vmatmul.mubr.f32.gmra.mrb[0].mxu0 %v559
    %v1495 = vpop.f32.mrb[0].mxu0
    %v1496 = vadd.f32 0.0, %v1495
    %v1497 = vpop.f32.mrb[0].mxu0
    %1498 = vmatprep.mubr.f32.mxu0 0.0
    %1499 = vmatmul.mubr.f32.gmra.mrb[0].mxu0 %v562
    %v1500 = vpop.f32.mrb[0].mxu0
    %v1501 = vadd.f32 0.0, %v1500
    %v1502 = vpop.f32.mrb[0].mxu0
    %1503 = vmatprep.mubr.f32.mxu0 0.0
    %1504 = vmatmul.mubr.f32.gmra.mrb[0].mxu0 %v565
    %v1505 = vpop.f32.mrb[0].mxu0
    %v1506 = vadd.f32 0.0, %v1505
    %v1507 = vpop.f32.mrb[0].mxu0
    %1508 = vmatprep.mubr.f32.mxu0 0.0
    %1509 = vmatmul.mubr.f32.gmra.mrb[0].mxu0 %v568
    %v1510 = vpop.f32.mrb[0].mxu0
    %v1511 = vadd.f32 0.0, %v1510
    %v1512 = vpop.f32.mrb[0].mxu0
    %1513 = vmatprep.mubr.f32.mxu0 0.0
    %1514 = vmatmul.mubr.f32.gmra.mrb[0].mxu0 %v571
    %v1515 = vpop.f32.mrb[0].mxu0
    %v1516 = vadd.f32 0.0, %v1515
    %v1517 = vpop.f32.mrb[0].mxu0
    %1518 = vmatprep.mubr.f32.mxu0 0.0
    %1519 = vmatmul.mubr.f32.gmra.mrb[0].mxu0 %v574
    %v1520 = vpop.f32.mrb[0].mxu0
    %v1521 = vadd.f32 0.0, %v1520
    %v1522 = vpop.f32.mrb[0].mxu0
    %1523 = vmatprep.mubr.f32.mxu0 0.0
    %1524 = vmatmul.mubr.f32.gmra.mrb[0].mxu0 %v577
    %v1525 = vpop.f32.mrb[0].mxu0
    %v1526 = vadd.f32 0.0, %v1525
    %v1527 = vpop.f32.mrb[0].mxu0
    %1528 = vmatprep.mubr.f32.mxu0 0.0
    %1529 = vmatmul.mubr.f32.gmra.mrb[0].mxu0 %v580
    %v1530 = vpop.f32.mrb[0].mxu0
    %v1531 = vadd.f32 0.0, %v1530
    %v1532 = vpop.f32.mrb[0].mxu0
    %1533 = vmatprep.mubr.f32.mxu0 0.0
    %1534 = vmatmul.mubr.f32.gmra.mrb[0].mxu0 %v583
    %v1535 = vpop.f32.mrb[0].mxu0
    %v1536 = vadd.f32 0.0, %v1535
    %v1537 = vpop.f32.mrb[0].mxu0
    %1538 = vmatprep.mubr.f32.mxu0 0.0
    %1539 = vmatmul.mubr.f32.gmra.mrb[0].mxu0 %v586
    %v1540 = vpop.f32.mrb[0].mxu0
    %v1541 = vadd.f32 0.0, %v1540
    %v1542 = vpop.f32.mrb[0].mxu0
    %1543 = vmatprep.mubr.f32.mxu0 0.0
    %1544 = vmatmul.mubr.f32.gmra.mrb[0].mxu0 %v589
    %v1545 = vpop.f32.mrb[0].mxu0
    %v1546 = vadd.f32 0.0, %v1545
    %v1547 = vpop.f32.mrb[0].mxu0
    %1548 = vdwg.mxu0
    %v1549 = vsub.f32 %v1307, %v1471
    %v1550 = vsub.f32 %v1308, %v1476
    %v1551 = vsub.f32 %v1309, %v1481
    %v1552 = vsub.f32 %v1310, %v1486
    %v1553 = vsub.f32 %v1311, %v1491
    %v1554 = vsub.f32 %v1312, %v1496
    %v1555 = vsub.f32 %v1313, %v1501
    %v1556 = vsub.f32 %v1314, %v1506
    %v1557 = vsub.f32 %v1315, %v1511
    %v1558 = vsub.f32 %v1316, %v1516
    %v1559 = vsub.f32 %v1317, %v1521
    %v1560 = vsub.f32 %v1318, %v1526
    %v1561 = vsub.f32 %v1319, %v1531
    %v1562 = vsub.f32 %v1320, %v1536
    %v1563 = vsub.f32 %v1321, %v1541
    %v1564 = vsub.f32 %v1322, %v1546
    %v1565 = vmul.f32 %v1549, %v139
    %v1566 = vmul.f32 %v1550, %v139
    %v1567 = vmul.f32 %v1551, %v139
    %v1568 = vmul.f32 %v1552, %v139
    %v1569 = vmul.f32 %v1553, %v139
    %v1570 = vmul.f32 %v1554, %v139
    %v1571 = vmul.f32 %v1555, %v139
    %v1572 = vmul.f32 %v1556, %v139
    %v1573 = vmul.f32 %v1557, %v139
    %v1574 = vmul.f32 %v1558, %v139
    %v1575 = vmul.f32 %v1559, %v139
    %v1576 = vmul.f32 %v1560, %v139
    %v1577 = vmul.f32 %v1561, %v139
    %v1578 = vmul.f32 %v1562, %v139
    %v1579 = vmul.f32 %v1563, %v139
    %v1580 = vmul.f32 %v1564, %v139
    %v1581 = vmul.f32 %v1565, %v1565
    %v1582 = vmul.f32 %v1566, %v1566
    %v1583 = vmul.f32 %v1567, %v1567
    %v1584 = vmul.f32 %v1568, %v1568
    %v1585 = vmul.f32 %v1569, %v1569
    %v1586 = vmul.f32 %v1570, %v1570
    %v1587 = vmul.f32 %v1571, %v1571
    %v1588 = vmul.f32 %v1572, %v1572
    %v1589 = vmul.f32 %v1573, %v1573
    %v1590 = vmul.f32 %v1574, %v1574
    %v1591 = vmul.f32 %v1575, %v1575
    %v1592 = vmul.f32 %v1576, %v1576
    %v1593 = vmul.f32 %v1577, %v1577
    %v1594 = vmul.f32 %v1578, %v1578
    %v1595 = vmul.f32 %v1579, %v1579
    %v1596 = vmul.f32 %v1580, %v1580
    %1597 = vmatprep.subr.mxu0 0.0
    %1598 = vmatpush1.msra.mxu0 %v1581
    %1599 = vmatprep.subr.mxu0 0.0
    %1600 = vmatpush1.msra.mxu0 %v1582
    %1601 = vmatprep.subr.mxu0 0.0
    %1602 = vmatpush1.msra.mxu0 %v1583
    %1603 = vmatprep.subr.mxu0 0.0
    %1604 = vmatpush1.msra.mxu0 %v1584
    %1605 = vmatprep.subr.mxu0 0.0
    %1606 = vmatpush1.msra.mxu0 %v1585
    %1607 = vmatprep.subr.mxu0 0.0
    %1608 = vmatpush1.msra.mxu0 %v1586
    %1609 = vmatprep.subr.mxu0 0.0
    %1610 = vmatpush1.msra.mxu0 %v1587
    %1611 = vmatprep.subr.mxu0 0.0
    %1612 = vmatpush1.msra.mxu0 %v1588
    %1613 = vmatprep.subr.mxu0 0.0
    %1614 = vmatpush1.msra.mxu0 %v1589
    %1615 = vmatprep.subr.mxu0 0.0
    %1616 = vmatpush1.msra.mxu0 %v1590
    %1617 = vmatprep.subr.mxu0 0.0
    %1618 = vmatpush1.msra.mxu0 %v1591
    %1619 = vmatprep.subr.mxu0 0.0
    %1620 = vmatpush1.msra.mxu0 %v1592
    %1621 = vmatprep.subr.mxu0 0.0
    %1622 = vmatpush1.msra.mxu0 %v1593
    %1623 = vmatprep.subr.mxu0 0.0
    %1624 = vmatpush1.msra.mxu0 %v1594
    %1625 = vmatprep.subr.mxu0 0.0
    %1626 = vmatpush1.msra.mxu0 %v1595
    %1627 = vmatprep.subr.mxu0 0.0
    %1628 = vmatpush1.msra.mxu0 %v1596
    %1629 = vmatprep.subr.mxu0 0.0
    %1630 = vmatpush1.msra.mxu0 0.0
    %1631 = vmatprep.subr.mxu0 0.0
    %1632 = vmatpush1.msra.mxu0 0.0
    %1633 = vmatprep.subr.mxu0 0.0
    %1634 = vmatpush1.msra.mxu0 0.0
    %1635 = vmatprep.subr.mxu0 0.0
    %1636 = vmatpush1.msra.mxu0 0.0
    %1637 = vmatprep.subr.mxu0 0.0
    %1638 = vmatpush1.msra.mxu0 0.0
    %1639 = vmatprep.subr.mxu0 0.0
    %1640 = vmatpush1.msra.mxu0 0.0
    %1641 = vmatprep.subr.mxu0 0.0
    %1642 = vmatpush1.msra.mxu0 0.0
    %1643 = vmatprep.subr.mxu0 0.0
    %1644 = vmatpush1.msra.mxu0 0.0
    %1645 = vmatprep.subr.mxu0 0.0
    %1646 = vmatpush1.msra.mxu0 0.0
    %1647 = vmatprep.subr.mxu0 0.0
    %1648 = vmatpush1.msra.mxu0 0.0
    %1649 = vmatprep.subr.mxu0 0.0
    %1650 = vmatpush1.msra.mxu0 0.0
    %1651 = vmatprep.subr.mxu0 0.0
    %1652 = vmatpush1.msra.mxu0 0.0
    %1653 = vmatprep.subr.mxu0 0.0
    %1654 = vmatpush1.msra.mxu0 0.0
    %1655 = vmatprep.subr.mxu0 0.0
    %1656 = vmatpush1.msra.mxu0 0.0
    %1657 = vmatprep.subr.mxu0 0.0
    %1658 = vmatpush1.msra.mxu0 0.0
    %1659 = vmatprep.subr.mxu0 0.0
    %1660 = vmatpush1.msra.mxu0 0.0
    %1661 = vmatprep.mubr.f32.mxu0 0.0
    %1662 = vmatmul.mubr.f32.gmra.mrb[0].mxu0 %v131
    %v1663 = vpop.f32.mrb[0].mxu0
    %v1664 = vadd.f32 0.0, %v1663
    %v1665 = vpop.f32.mrb[0].mxu0
    %1666 = vdwg.mxu0
    %1667 = vadd.xlane.f32.xlu0 %v1664
    %v1668 = vpop.xlane.xlu0 %1667
    %v1669 = vmul.f32 %v1668, %v1323
    %1671 = vset.pattern.permute.xlu0 0
    %1672 = vperm.xlu0 %1671, %v1669
    %v1673 = vpop.permute.xlu0 %1672
    %1675 = vmatprep.subr.mxu0 0.0
    %1676 = vmatpush1.msra.mxu0 %v1673
    %1677 = vmatprep.subr.mxu0 0.0
    %1678 = vmatpush1.msra.mxu0 0.0
    %1679 = vmatprep.subr.mxu0 0.0
    %1680 = vmatpush1.msra.mxu0 0.0
    %1681 = vmatprep.subr.mxu0 0.0
    %1682 = vmatpush1.msra.mxu0 0.0
    %1683 = vmatprep.subr.mxu0 0.0
    %1684 = vmatpush1.msra.mxu0 0.0
    %1685 = vmatprep.subr.mxu0 0.0
    %1686 = vmatpush1.msra.mxu0 0.0
    %1687 = vmatprep.subr.mxu0 0.0
    %1688 = vmatpush1.msra.mxu0 0.0
    %1689 = vmatprep.subr.mxu0 0.0
    %1690 = vmatpush1.msra.mxu0 0.0
    %1691 = vmatprep.subr.mxu0 0.0
    %1692 = vmatpush1.msra.mxu0 0.0
    %1693 = vmatprep.subr.mxu0 0.0
    %1694 = vmatpush1.msra.mxu0 0.0
    %1695 = vmatprep.subr.mxu0 0.0
    %1696 = vmatpush1.msra.mxu0 0.0
    %1697 = vmatprep.subr.mxu0 0.0
    %1698 = vmatpush1.msra.mxu0 0.0
    %1699 = vmatprep.subr.mxu0 0.0
    %1700 = vmatpush1.msra.mxu0 0.0
    %1701 = vmatprep.subr.mxu0 0.0
    %1702 = vmatpush1.msra.mxu0 0.0
    %1703 = vmatprep.subr.mxu0 0.0
    %1704 = vmatpush1.msra.mxu0 0.0
    %1705 = vmatprep.subr.mxu0 0.0
    %1706 = vmatpush1.msra.mxu0 0.0
    %1707 = vmatprep.subr.mxu0 0.0
    %1708 = vmatpush1.msra.mxu0 0.0
    %1709 = vmatprep.subr.mxu0 0.0
    %1710 = vmatpush1.msra.mxu0 0.0
    %1711 = vmatprep.subr.mxu0 0.0
    %1712 = vmatpush1.msra.mxu0 0.0
    %1713 = vmatprep.subr.mxu0 0.0
    %1714 = vmatpush1.msra.mxu0 0.0
    %1715 = vmatprep.subr.mxu0 0.0
    %1716 = vmatpush1.msra.mxu0 0.0
    %1717 = vmatprep.subr.mxu0 0.0
    %1718 = vmatpush1.msra.mxu0 0.0
    %1719 = vmatprep.subr.mxu0 0.0
    %1720 = vmatpush1.msra.mxu0 0.0
    %1721 = vmatprep.subr.mxu0 0.0
    %1722 = vmatpush1.msra.mxu0 0.0
    %1723 = vmatprep.subr.mxu0 0.0
    %1724 = vmatpush1.msra.mxu0 0.0
    %1725 = vmatprep.subr.mxu0 0.0
    %1726 = vmatpush1.msra.mxu0 0.0
    %1727 = vmatprep.subr.mxu0 0.0
    %1728 = vmatpush1.msra.mxu0 0.0
    %1729 = vmatprep.subr.mxu0 0.0
    %1730 = vmatpush1.msra.mxu0 0.0
    %1731 = vmatprep.subr.mxu0 0.0
    %1732 = vmatpush1.msra.mxu0 0.0
    %1733 = vmatprep.subr.mxu0 0.0
    %1734 = vmatpush1.msra.mxu0 0.0
    %1735 = vmatprep.subr.mxu0 0.0
    %1736 = vmatpush1.msra.mxu0 0.0
    %1737 = vmatprep.subr.mxu0 0.0
    %1738 = vmatpush1.msra.mxu0 0.0
    %1739 = vmatprep.mubr.f32.mxu0 0.0
    %1740 = vmatmul.mubr.f32.gmra.mrb[0].mxu0 %v544
    %v1741 = vpop.f32.mrb[0].mxu0
    %v1742 = vadd.f32 1e-05, %v1741
    %v1743 = vpop.f32.mrb[0].mxu0
    %1744 = vmatprep.mubr.f32.mxu0 0.0
    %1745 = vmatmul.mubr.f32.gmra.mrb[0].mxu0 %v547
    %v1746 = vpop.f32.mrb[0].mxu0
    %v1747 = vadd.f32 1e-05, %v1746
    %v1748 = vpop.f32.mrb[0].mxu0
    %1749 = vmatprep.mubr.f32.mxu0 0.0
    %1750 = vmatmul.mubr.f32.gmra.mrb[0].mxu0 %v550
    %v1751 = vpop.f32.mrb[0].mxu0
    %v1752 = vadd.f32 1e-05, %v1751
    %v1753 = vpop.f32.mrb[0].mxu0
    %1754 = vmatprep.mubr.f32.mxu0 0.0
    %1755 = vmatmul.mubr.f32.gmra.mrb[0].mxu0 %v553
    %v1756 = vpop.f32.mrb[0].mxu0
    %v1757 = vadd.f32 1e-05, %v1756
    %v1758 = vpop.f32.mrb[0].mxu0
    %1759 = vmatprep.mubr.f32.mxu0 0.0
    %1760 = vmatmul.mubr.f32.gmra.mrb[0].mxu0 %v556
    %v1761 = vpop.f32.mrb[0].mxu0
    %v1762 = vadd.f32 1e-05, %v1761
    %v1763 = vpop.f32.mrb[0].mxu0
    %1764 = vmatprep.mubr.f32.mxu0 0.0
    %1765 = vmatmul.mubr.f32.gmra.mrb[0].mxu0 %v559
    %v1766 = vpop.f32.mrb[0].mxu0
    %v1767 = vadd.f32 1e-05, %v1766
    %v1768 = vpop.f32.mrb[0].mxu0
    %1769 = vmatprep.mubr.f32.mxu0 0.0
    %1770 = vmatmul.mubr.f32.gmra.mrb[0].mxu0 %v562
    %v1771 = vpop.f32.mrb[0].mxu0
    %v1772 = vadd.f32 1e-05, %v1771
    %v1773 = vpop.f32.mrb[0].mxu0
    %1774 = vmatprep.mubr.f32.mxu0 0.0
    %1775 = vmatmul.mubr.f32.gmra.mrb[0].mxu0 %v565
    %v1776 = vpop.f32.mrb[0].mxu0
    %v1777 = vadd.f32 1e-05, %v1776
    %v1778 = vpop.f32.mrb[0].mxu0
    %1779 = vmatprep.mubr.f32.mxu0 0.0
    %1780 = vmatmul.mubr.f32.gmra.mrb[0].mxu0 %v568
    %v1781 = vpop.f32.mrb[0].mxu0
    %v1782 = vadd.f32 1e-05, %v1781
    %v1783 = vpop.f32.mrb[0].mxu0
    %1784 = vmatprep.mubr.f32.mxu0 0.0
    %1785 = vmatmul.mubr.f32.gmra.mrb[0].mxu0 %v571
    %v1786 = vpop.f32.mrb[0].mxu0
    %v1787 = vadd.f32 1e-05, %v1786
    %v1788 = vpop.f32.mrb[0].mxu0
    %1789 = vmatprep.mubr.f32.mxu0 0.0
    %1790 = vmatmul.mubr.f32.gmra.mrb[0].mxu0 %v574
    %v1791 = vpop.f32.mrb[0].mxu0
    %v1792 = vadd.f32 1e-05, %v1791
    %v1793 = vpop.f32.mrb[0].mxu0
    %1794 = vmatprep.mubr.f32.mxu0 0.0
    %1795 = vmatmul.mubr.f32.gmra.mrb[0].mxu0 %v577
    %v1796 = vpop.f32.mrb[0].mxu0
    %v1797 = vadd.f32 1e-05, %v1796
    %v1798 = vpop.f32.mrb[0].mxu0
    %1799 = vmatprep.mubr.f32.mxu0 0.0
    %1800 = vmatmul.mubr.f32.gmra.mrb[0].mxu0 %v580
    %v1801 = vpop.f32.mrb[0].mxu0
    %v1802 = vadd.f32 1e-05, %v1801
    %v1803 = vpop.f32.mrb[0].mxu0
    %1804 = vmatprep.mubr.f32.mxu0 0.0
    %1805 = vmatmul.mubr.f32.gmra.mrb[0].mxu0 %v583
    %v1806 = vpop.f32.mrb[0].mxu0
    %v1807 = vadd.f32 1e-05, %v1806
    %v1808 = vpop.f32.mrb[0].mxu0
    %1809 = vmatprep.mubr.f32.mxu0 0.0
    %1810 = vmatmul.mubr.f32.gmra.mrb[0].mxu0 %v586
    %v1811 = vpop.f32.mrb[0].mxu0
    %v1812 = vadd.f32 1e-05, %v1811
    %v1813 = vpop.f32.mrb[0].mxu0
    %1814 = vmatprep.mubr.f32.mxu0 0.0
    %1815 = vmatmul.mubr.f32.gmra.mrb[0].mxu0 %v589
    %v1816 = vpop.f32.mrb[0].mxu0
    %v1817 = vadd.f32 1e-05, %v1816
    %v1818 = vpop.f32.mrb[0].mxu0
    %1819 = vdwg.mxu0
    %v1820 = vrsqrt.pop %v1742
    %v1821 = vrsqrt.pop %v1747
    %v1822 = vrsqrt.pop %v1752
    %v1823 = vrsqrt.pop %v1757
    %v1824 = vrsqrt.pop %v1762
    %v1825 = vrsqrt.pop %v1767
    %v1826 = vrsqrt.pop %v1772
    %v1827 = vrsqrt.pop %v1777
    %v1828 = vrsqrt.pop %v1782
    %v1829 = vrsqrt.pop %v1787
    %v1830 = vrsqrt.pop %v1792
    %v1831 = vrsqrt.pop %v1797
    %v1832 = vrsqrt.pop %v1802
    %v1833 = vrsqrt.pop %v1807
    %v1834 = vrsqrt.pop %v1812
    %v1835 = vrsqrt.pop %v1817
    %v1836 = vmul.f32 %v1565, %v1820
    %v1837 = vmul.f32 %v1566, %v1821
    %v1838 = vmul.f32 %v1567, %v1822
    %v1839 = vmul.f32 %v1568, %v1823
    %v1840 = vmul.f32 %v1569, %v1824
    %v1841 = vmul.f32 %v1570, %v1825
    %v1842 = vmul.f32 %v1571, %v1826
    %v1843 = vmul.f32 %v1572, %v1827
    %v1844 = vmul.f32 %v1573, %v1828
    %v1845 = vmul.f32 %v1574, %v1829
    %v1846 = vmul.f32 %v1575, %v1830
    %v1847 = vmul.f32 %v1576, %v1831
    %v1848 = vmul.f32 %v1577, %v1832
    %v1849 = vmul.f32 %v1578, %v1833
    %v1850 = vmul.f32 %v1579, %v1834
    %v1851 = vmul.f32 %v1580, %v1835
    %v1853 = vlaneseq
    %v1854 = vshrl.u32 %v1853, 7
    %v1855 = vsub.s32 0, %v1854
    %v1856 = vrot.slane %v1324, %v1855
    %v1858 = vmul.f32 %v1836, %v1856
    %v1859 = vmul.f32 %v1837, %v1856
    %v1860 = vmul.f32 %v1838, %v1856
    %v1861 = vmul.f32 %v1839, %v1856
    %v1862 = vmul.f32 %v1840, %v1856
    %v1863 = vmul.f32 %v1841, %v1856
    %v1864 = vmul.f32 %v1842, %v1856
    %v1865 = vmul.f32 %v1843, %v1856
    %v1866 = vmul.f32 %v1844, %v1856
    %v1867 = vmul.f32 %v1845, %v1856
    %v1868 = vmul.f32 %v1846, %v1856
    %v1869 = vmul.f32 %v1847, %v1856
    %v1870 = vmul.f32 %v1848, %v1856
    %v1871 = vmul.f32 %v1849, %v1856
    %v1872 = vmul.f32 %v1850, %v1856
    %v1873 = vmul.f32 %v1851, %v1856
    %v1875 = vlaneseq
    %v1876 = vshrl.u32 %v1875, 7
    %v1877 = vsub.s32 0, %v1876
    %v1878 = vrot.slane %v1325, %v1877
    %v1880 = vadd.f32 %v1858, %v1878
    %v1881 = vadd.f32 %v1859, %v1878
    %v1882 = vadd.f32 %v1860, %v1878
    %v1883 = vadd.f32 %v1861, %v1878
    %v1884 = vadd.f32 %v1862, %v1878
    %v1885 = vadd.f32 %v1863, %v1878
    %v1886 = vadd.f32 %v1864, %v1878
    %v1887 = vadd.f32 %v1865, %v1878
    %v1888 = vadd.f32 %v1866, %v1878
    %v1889 = vadd.f32 %v1867, %v1878
    %v1890 = vadd.f32 %v1868, %v1878
    %v1891 = vadd.f32 %v1869, %v1878
    %v1892 = vadd.f32 %v1870, %v1878
    %v1893 = vadd.f32 %v1871, %v1878
    %v1894 = vadd.f32 %v1872, %v1878
    %v1895 = vadd.f32 %v1873, %v1878
    %v1896 = vmul.f32 %v1880, %v189
    %v1897 = vmul.f32 %v1881, %v190
    %v1898 = vmul.f32 %v1882, %v191
    %v1899 = vmul.f32 %v1883, %v192
    %v1900 = vmul.f32 %v1884, %v193
    %v1901 = vmul.f32 %v1885, %v194
    %v1902 = vmul.f32 %v1886, %v195
    %v1903 = vmul.f32 %v1887, %v196
    %v1904 = vmul.f32 %v1888, %v197
    %v1905 = vmul.f32 %v1889, %v198
    %v1906 = vmul.f32 %v1890, %v199
    %v1907 = vmul.f32 %v1891, %v200
    %v1908 = vmul.f32 %v1892, %v201
    %v1909 = vmul.f32 %v1893, %v202
    %v1910 = vmul.f32 %v1894, %v203
    %v1911 = vmul.f32 %v1895, %v204
    %v1912 = vld [vmem:[%s1] sm:$0xf]
    %v1913 = vld [vmem:[%s1 + $0x4] sm:$0xf]
    %v1914 = vld [vmem:[%s1 + $0x8] sm:$0xf]
    %v1915 = vld [vmem:[%s1 + $0xc] sm:$0xf]
    %v1916 = vld [vmem:[%s1 + $0x10] sm:$0xf]
    %v1917 = vld [vmem:[%s1 + $0x14] sm:$0xf]
    %v1918 = vld [vmem:[%s1 + $0x18] sm:$0xf]
    %v1919 = vld [vmem:[%s1 + $0x1c] sm:$0xf]
    %v1920 = vld [vmem:[%s1 + $0x20] sm:$0xf]
    %v1921 = vld [vmem:[%s1 + $0x24] sm:$0xf]
    %v1922 = vld [vmem:[%s1 + $0x28] sm:$0xf]
    %v1923 = vld [vmem:[%s1 + $0x2c] sm:$0xf]
    %v1924 = vld [vmem:[%s1 + $0x30] sm:$0xf]
    %v1925 = vld [vmem:[%s1 + $0x34] sm:$0xf]
    %v1926 = vld [vmem:[%s1 + $0x38] sm:$0xf]
    %v1927 = vld [vmem:[%s1 + $0x3c] sm:$0xf]
    %v1928 = vld [vmem:[%s2] sm:$0xff]
    %v1929 = vld [vmem:[%s2 + $0x8] sm:$0xff]
    %v1930 = vld [vmem:[%s2 + $0x10] sm:$0xff]
    %v1931 = vld [vmem:[%s2 + $0x18] sm:$0xff]
    %v1932 = vld [vmem:[%s2 + $0x20] sm:$0xff]
    %v1933 = vld [vmem:[%s2 + $0x28] sm:$0xff]
    %v1934 = vld [vmem:[%s2 + $0x30] sm:$0xff]
    %v1935 = vld [vmem:[%s2 + $0x38] sm:$0xff]
    %v1936 = vld [vmem:[%s2 + $0x40] sm:$0xff]
    %v1937 = vld [vmem:[%s2 + $0x48] sm:$0xff]
    %v1938 = vld [vmem:[%s2 + $0x50] sm:$0xff]
    %v1939 = vld [vmem:[%s2 + $0x58] sm:$0xff]
    %v1940 = vld [vmem:[%s2 + $0x60] sm:$0xff]
    %v1941 = vld [vmem:[%s2 + $0x68] sm:$0xff]
    %v1942 = vld [vmem:[%s2 + $0x70] sm:$0xff]
    %v1943 = vld [vmem:[%s2 + $0x78] sm:$0xff]
    %v1944 = vpack.c.bf16 %v1897, %v1896
    %v1945 = vpack.c.bf16 %v1899, %v1898
    %v1946 = vpack.c.bf16 %v1901, %v1900
    %v1947 = vpack.c.bf16 %v1903, %v1902
    %v1948 = vpack.c.bf16 %v1905, %v1904
    %v1949 = vpack.c.bf16 %v1907, %v1906
    %v1950 = vpack.c.bf16 %v1909, %v1908
    %v1951 = vpack.c.bf16 %v1911, %v1910
    %v1968 = vunpack.c.l.b16 %v1912
    %v1969 = vunpack.c.l.b16 %v1913
    %v1970 = vunpack.c.l.b16 %v1914
    %v1971 = vunpack.c.l.b16 %v1915
    %v1972 = vunpack.c.l.b16 %v1916
    %v1973 = vunpack.c.l.b16 %v1917
    %v1974 = vunpack.c.l.b16 %v1918
    %v1975 = vunpack.c.l.b16 %v1919
    %v1976 = vunpack.c.l.b16 %v1920
    %v1977 = vunpack.c.l.b16 %v1921
    %v1978 = vunpack.c.l.b16 %v1922
    %v1979 = vunpack.c.l.b16 %v1923
    %v1980 = vunpack.c.l.b16 %v1924
    %v1981 = vunpack.c.l.b16 %v1925
    %v1982 = vunpack.c.l.b16 %v1926
    %v1983 = vunpack.c.l.b16 %v1927
    %v1984 = vpack.c.b16 %v1969, %v1968
    %v1985 = vpack.c.b16 %v1971, %v1970
    %v1986 = vpack.c.b16 %v1973, %v1972
    %v1987 = vpack.c.b16 %v1975, %v1974
    %v1988 = vpack.c.b16 %v1977, %v1976
    %v1989 = vpack.c.b16 %v1979, %v1978
    %v1990 = vpack.c.b16 %v1981, %v1980
    %v1991 = vpack.c.b16 %v1983, %v1982
    %2000 = vmatprep.subr.bf16.mxu0 0
    %2001 = vmatpush1.bf16.msra.mxu0 %v1944
    %2002 = vmatprep.subr.bf16.mxu0 0
    %2003 = vmatpush1.bf16.msra.mxu0 %v1945
    %2004 = vmatprep.subr.bf16.mxu0 0
    %2005 = vmatpush1.bf16.msra.mxu0 %v1946
    %2006 = vmatprep.subr.bf16.mxu0 0
    %2007 = vmatpush1.bf16.msra.mxu0 %v1947
    %2008 = vmatprep.subr.bf16.mxu0 0
    %2009 = vmatpush1.bf16.msra.mxu0 %v1948
    %2010 = vmatprep.subr.bf16.mxu0 0
    %2011 = vmatpush1.bf16.msra.mxu0 %v1949
    %2012 = vmatprep.subr.bf16.mxu0 0
    %2013 = vmatpush1.bf16.msra.mxu0 %v1950
    %2014 = vmatprep.subr.bf16.mxu0 0
    %2015 = vmatpush1.bf16.msra.mxu0 %v1951
    %2016 = vmatprep.subr.bf16.mxu0 0
    %2017 = vmatpush1.bf16.msra.mxu0 0
    %2018 = vmatprep.subr.bf16.mxu0 0
    %2019 = vmatpush1.bf16.msra.mxu0 0
    %2020 = vmatprep.subr.bf16.mxu0 0
    %2021 = vmatpush1.bf16.msra.mxu0 0
    %2022 = vmatprep.subr.bf16.mxu0 0
    %2023 = vmatpush1.bf16.msra.mxu0 0
    %2024 = vmatprep.subr.bf16.mxu0 0
    %2025 = vmatpush1.bf16.msra.mxu0 0
    %2026 = vmatprep.subr.bf16.mxu0 0
    %2027 = vmatpush1.bf16.msra.mxu0 0
    %2028 = vmatprep.subr.bf16.mxu0 0
    %2029 = vmatpush1.bf16.msra.mxu0 0
    %2030 = vmatprep.subr.bf16.mxu0 0
    %2031 = vmatpush1.bf16.msra.mxu0 0
    %2032 = vmatprep.mubr.bf16.mxu0 0
    %2033 = vmatmul.mubr.bf16.gmra.mrb[0].mxu0 %v1984
    %v2034 = vpop.f32.mrb[0].mxu0
    %v2035 = vadd.f32 0.0, %v2034
    %v2036 = vpop.f32.mrb[0].mxu0
    %v2037 = vpop.f32.mrb[0].mxu0
    %v2038 = vadd.f32 0.0, %v2037
    %v2039 = vpop.f32.mrb[0].mxu0
    %2040 = vmatprep.mubr.bf16.mxu0 0
    %2041 = vmatmul.mubr.bf16.gmra.mrb[0].mxu0 %v1985
    %v2042 = vpop.f32.mrb[0].mxu0
    %v2043 = vadd.f32 0.0, %v2042
    %v2044 = vpop.f32.mrb[0].mxu0
    %v2045 = vpop.f32.mrb[0].mxu0
    %v2046 = vadd.f32 0.0, %v2045
    %v2047 = vpop.f32.mrb[0].mxu0
    %2048 = vmatprep.mubr.bf16.mxu0 0
    %2049 = vmatmul.mubr.bf16.gmra.mrb[0].mxu0 %v1986
    %v2050 = vpop.f32.mrb[0].mxu0
    %v2051 = vadd.f32 0.0, %v2050
    %v2052 = vpop.f32.mrb[0].mxu0
    %v2053 = vpop.f32.mrb[0].mxu0
    %v2054 = vadd.f32 0.0, %v2053
    %v2055 = vpop.f32.mrb[0].mxu0
    %2056 = vmatprep.mubr.bf16.mxu0 0
    %2057 = vmatmul.mubr.bf16.gmra.mrb[0].mxu0 %v1987
    %v2058 = vpop.f32.mrb[0].mxu0
    %v2059 = vadd.f32 0.0, %v2058
    %v2060 = vpop.f32.mrb[0].mxu0
    %v2061 = vpop.f32.mrb[0].mxu0
    %v2062 = vadd.f32 0.0, %v2061
    %v2063 = vpop.f32.mrb[0].mxu0
    %2064 = vmatprep.mubr.bf16.mxu0 0
    %2065 = vmatmul.mubr.bf16.gmra.mrb[0].mxu0 %v1988
    %v2066 = vpop.f32.mrb[0].mxu0
    %v2067 = vadd.f32 0.0, %v2066
    %v2068 = vpop.f32.mrb[0].mxu0
    %v2069 = vpop.f32.mrb[0].mxu0
    %v2070 = vadd.f32 0.0, %v2069
    %v2071 = vpop.f32.mrb[0].mxu0
    %2072 = vmatprep.mubr.bf16.mxu0 0
    %2073 = vmatmul.mubr.bf16.gmra.mrb[0].mxu0 %v1989
    %v2074 = vpop.f32.mrb[0].mxu0
    %v2075 = vadd.f32 0.0, %v2074
    %v2076 = vpop.f32.mrb[0].mxu0
    %v2077 = vpop.f32.mrb[0].mxu0
    %v2078 = vadd.f32 0.0, %v2077
    %v2079 = vpop.f32.mrb[0].mxu0
    %2080 = vmatprep.mubr.bf16.mxu0 0
    %2081 = vmatmul.mubr.bf16.gmra.mrb[0].mxu0 %v1990
    %v2082 = vpop.f32.mrb[0].mxu0
    %v2083 = vadd.f32 0.0, %v2082
    %v2084 = vpop.f32.mrb[0].mxu0
    %v2085 = vpop.f32.mrb[0].mxu0
    %v2086 = vadd.f32 0.0, %v2085
    %v2087 = vpop.f32.mrb[0].mxu0
    %2088 = vmatprep.mubr.bf16.mxu0 0
    %2089 = vmatmul.mubr.bf16.gmra.mrb[0].mxu0 %v1991
    %v2090 = vpop.f32.mrb[0].mxu0
    %v2091 = vadd.f32 0.0, %v2090
    %v2092 = vpop.f32.mrb[0].mxu0
    %v2093 = vpop.f32.mrb[0].mxu0
    %v2094 = vadd.f32 0.0, %v2093
    %v2095 = vpop.f32.mrb[0].mxu0
    %2096 = vdwg.mxu0
    %2098 = vset.pattern.permute.xlu0 0
    %2099 = vperm.xlu0 %2098, %v1928
    %v2100 = vpop.permute.xlu0 %2099
    %2103 = vset.pattern.permute.xlu0 0
    %2104 = vperm.xlu0 %2103, %v1929
    %v2105 = vpop.permute.xlu0 %2104
    %2108 = vset.pattern.permute.xlu0 0
    %2109 = vperm.xlu0 %2108, %v1930
    %v2110 = vpop.permute.xlu0 %2109
    %2113 = vset.pattern.permute.xlu0 0
    %2114 = vperm.xlu0 %2113, %v1931
    %v2115 = vpop.permute.xlu0 %2114
    %2118 = vset.pattern.permute.xlu0 0
    %2119 = vperm.xlu0 %2118, %v1932
    %v2120 = vpop.permute.xlu0 %2119
    %2123 = vset.pattern.permute.xlu0 0
    %2124 = vperm.xlu0 %2123, %v1933
    %v2125 = vpop.permute.xlu0 %2124
    %2128 = vset.pattern.permute.xlu0 0
    %2129 = vperm.xlu0 %2128, %v1934
    %v2130 = vpop.permute.xlu0 %2129
    %2133 = vset.pattern.permute.xlu0 0
    %2134 = vperm.xlu0 %2133, %v1935
    %v2135 = vpop.permute.xlu0 %2134
    %2138 = vset.pattern.permute.xlu0 0
    %2139 = vperm.xlu0 %2138, %v1936
    %v2140 = vpop.permute.xlu0 %2139
    %2143 = vset.pattern.permute.xlu0 0
    %2144 = vperm.xlu0 %2143, %v1937
    %v2145 = vpop.permute.xlu0 %2144
    %2148 = vset.pattern.permute.xlu0 0
    %2149 = vperm.xlu0 %2148, %v1938
    %v2150 = vpop.permute.xlu0 %2149
    %2153 = vset.pattern.permute.xlu0 0
    %2154 = vperm.xlu0 %2153, %v1939
    %v2155 = vpop.permute.xlu0 %2154
    %2158 = vset.pattern.permute.xlu0 0
    %2159 = vperm.xlu0 %2158, %v1940
    %v2160 = vpop.permute.xlu0 %2159
    %2163 = vset.pattern.permute.xlu0 0
    %2164 = vperm.xlu0 %2163, %v1941
    %v2165 = vpop.permute.xlu0 %2164
    %2168 = vset.pattern.permute.xlu0 0
    %2169 = vperm.xlu0 %2168, %v1942
    %v2170 = vpop.permute.xlu0 %2169
    %2173 = vset.pattern.permute.xlu0 0
    %2174 = vperm.xlu0 %2173, %v1943
    %v2175 = vpop.permute.xlu0 %2174
    %v2177 = vmul.f32 %v2035, %v2100
    %v2178 = vmul.f32 %v2038, %v2105
    %v2179 = vmul.f32 %v2043, %v2110
    %v2180 = vmul.f32 %v2046, %v2115
    %v2181 = vmul.f32 %v2051, %v2120
    %v2182 = vmul.f32 %v2054, %v2125
    %v2183 = vmul.f32 %v2059, %v2130
    %v2184 = vmul.f32 %v2062, %v2135
    %v2185 = vmul.f32 %v2067, %v2140
    %v2186 = vmul.f32 %v2070, %v2145
    %v2187 = vmul.f32 %v2075, %v2150
    %v2188 = vmul.f32 %v2078, %v2155
    %v2189 = vmul.f32 %v2083, %v2160
    %v2190 = vmul.f32 %v2086, %v2165
    %v2191 = vmul.f32 %v2091, %v2170
    %v2192 = vmul.f32 %v2094, %v2175
    %v2193 = vpack.c.bf16 %v2178, %v2177
    %v2194 = vpack.c.bf16 %v2180, %v2179
    %v2195 = vpack.c.bf16 %v2182, %v2181
    %v2196 = vpack.c.bf16 %v2184, %v2183
    %v2197 = vpack.c.bf16 %v2186, %v2185
    %v2198 = vpack.c.bf16 %v2188, %v2187
    %v2199 = vpack.c.bf16 %v2190, %v2189
    %v2200 = vpack.c.bf16 %v2192, %v2191
    %v2201 = vld [vmem:[#allocation9] sm:$0xf]
    %v2202 = vld [vmem:[#allocation9 + $0x4] sm:$0xf]
    %v2203 = vld [vmem:[#allocation9 + $0x8] sm:$0xf]
    %v2204 = vld [vmem:[#allocation9 + $0xc] sm:$0xf]
    %v2205 = vld [vmem:[#allocation9 + $0x10] sm:$0xf]
    %v2206 = vld [vmem:[#allocation9 + $0x14] sm:$0xf]
    %v2207 = vld [vmem:[#allocation9 + $0x18] sm:$0xf]
    %v2208 = vld [vmem:[#allocation9 + $0x1c] sm:$0xf]
    %v2209 = vld [vmem:[#allocation9 + $0x20] sm:$0xf]
    %v2210 = vld [vmem:[#allocation9 + $0x24] sm:$0xf]
    %v2211 = vld [vmem:[#allocation9 + $0x28] sm:$0xf]
    %v2212 = vld [vmem:[#allocation9 + $0x2c] sm:$0xf]
    %v2213 = vld [vmem:[#allocation9 + $0x30] sm:$0xf]
    %v2214 = vld [vmem:[#allocation9 + $0x34] sm:$0xf]
    %v2215 = vld [vmem:[#allocation9 + $0x38] sm:$0xf]
    %v2216 = vld [vmem:[#allocation9 + $0x3c] sm:$0xf]
    %v2217 = vld [vmem:[#allocation9 + $0x40] sm:$0xf]
    %v2218 = vld [vmem:[#allocation9 + $0x44] sm:$0xf]
    %v2219 = vld [vmem:[#allocation9 + $0x48] sm:$0xf]
    %v2220 = vld [vmem:[#allocation9 + $0x4c] sm:$0xf]
    %v2221 = vld [vmem:[#allocation9 + $0x50] sm:$0xf]
    %v2222 = vld [vmem:[#allocation9 + $0x54] sm:$0xf]
    %v2223 = vld [vmem:[#allocation9 + $0x58] sm:$0xf]
    %v2224 = vld [vmem:[#allocation9 + $0x5c] sm:$0xf]
    %v2225 = vld [vmem:[#allocation9 + $0x60] sm:$0xf]
    %v2226 = vld [vmem:[#allocation9 + $0x64] sm:$0xf]
    %v2227 = vld [vmem:[#allocation9 + $0x68] sm:$0xf]
    %v2228 = vld [vmem:[#allocation9 + $0x6c] sm:$0xf]
    %v2229 = vld [vmem:[#allocation9 + $0x70] sm:$0xf]
    %v2230 = vld [vmem:[#allocation9 + $0x74] sm:$0xf]
    %v2231 = vld [vmem:[#allocation9 + $0x78] sm:$0xf]
    %v2232 = vld [vmem:[#allocation9 + $0x7c] sm:$0xf]
    %v2233 = vld [vmem:[%s16] sm:$0x1]
    %v2235 = vlaneseq
    %v2236 = vshrl.u32 %v2235, 7
    %v2237 = vsub.s32 0, %v2236
    %v2238 = vrot.slane %v2233, %v2237
    %v2272 = vunpack.c.l.b16 %v2201
    %v2273 = vunpack.c.l.b16 %v2202
    %v2274 = vunpack.c.l.b16 %v2203
    %v2275 = vunpack.c.l.b16 %v2204
    %v2276 = vunpack.c.l.b16 %v2205
    %v2277 = vunpack.c.l.b16 %v2206
    %v2278 = vunpack.c.l.b16 %v2207
    %v2279 = vunpack.c.l.b16 %v2208
    %v2280 = vunpack.c.l.b16 %v2209
    %v2281 = vunpack.c.l.b16 %v2210
    %v2282 = vunpack.c.l.b16 %v2211
    %v2283 = vunpack.c.l.b16 %v2212
    %v2284 = vunpack.c.l.b16 %v2213
    %v2285 = vunpack.c.l.b16 %v2214
    %v2286 = vunpack.c.l.b16 %v2215
    %v2287 = vunpack.c.l.b16 %v2216
    %v2288 = vunpack.c.l.b16 %v2217
    %v2289 = vunpack.c.l.b16 %v2218
    %v2290 = vunpack.c.l.b16 %v2219
    %v2291 = vunpack.c.l.b16 %v2220
    %v2292 = vunpack.c.l.b16 %v2221
    %v2293 = vunpack.c.l.b16 %v2222
    %v2294 = vunpack.c.l.b16 %v2223
    %v2295 = vunpack.c.l.b16 %v2224
    %v2296 = vunpack.c.l.b16 %v2225
    %v2297 = vunpack.c.l.b16 %v2226
    %v2298 = vunpack.c.l.b16 %v2227
    %v2299 = vunpack.c.l.b16 %v2228
    %v2300 = vunpack.c.l.b16 %v2229
    %v2301 = vunpack.c.l.b16 %v2230
    %v2302 = vunpack.c.l.b16 %v2231
    %v2303 = vunpack.c.l.b16 %v2232
    %v2304 = vpack.c.b16 %v2273, %v2272
    %v2305 = vpack.c.b16 %v2275, %v2274
    %v2306 = vpack.c.b16 %v2277, %v2276
    %v2307 = vpack.c.b16 %v2279, %v2278
    %v2308 = vpack.c.b16 %v2281, %v2280
    %v2309 = vpack.c.b16 %v2283, %v2282
    %v2310 = vpack.c.b16 %v2285, %v2284
    %v2311 = vpack.c.b16 %v2287, %v2286
    %v2312 = vpack.c.b16 %v2289, %v2288
    %v2313 = vpack.c.b16 %v2291, %v2290
    %v2314 = vpack.c.b16 %v2293, %v2292
    %v2315 = vpack.c.b16 %v2295, %v2294
    %v2316 = vpack.c.b16 %v2297, %v2296
    %v2317 = vpack.c.b16 %v2299, %v2298
    %v2318 = vpack.c.b16 %v2301, %v2300
    %v2319 = vpack.c.b16 %v2303, %v2302
    %2336 = vmatprep.subr.bf16.mxu0 0
    %2337 = vmatpush1.bf16.msra.mxu0 %v2304
    %2338 = vmatprep.subr.bf16.mxu0 0
    %2339 = vmatpush1.bf16.msra.mxu0 %v2305
    %2340 = vmatprep.subr.bf16.mxu0 0
    %2341 = vmatpush1.bf16.msra.mxu0 %v2306
    %2342 = vmatprep.subr.bf16.mxu0 0
    %2343 = vmatpush1.bf16.msra.mxu0 %v2307
    %2344 = vmatprep.subr.bf16.mxu0 0
    %2345 = vmatpush1.bf16.msra.mxu0 %v2308
    %2346 = vmatprep.subr.bf16.mxu0 0
    %2347 = vmatpush1.bf16.msra.mxu0 %v2309
    %2348 = vmatprep.subr.bf16.mxu0 0
    %2349 = vmatpush1.bf16.msra.mxu0 %v2310
    %2350 = vmatprep.subr.bf16.mxu0 0
    %2351 = vmatpush1.bf16.msra.mxu0 %v2311
    %2352 = vmatprep.subr.bf16.mxu0 0
    %2353 = vmatpush1.bf16.msra.mxu0 %v2312
    %2354 = vmatprep.subr.bf16.mxu0 0
    %2355 = vmatpush1.bf16.msra.mxu0 %v2313
    %2356 = vmatprep.subr.bf16.mxu0 0
    %2357 = vmatpush1.bf16.msra.mxu0 %v2314
    %2358 = vmatprep.subr.bf16.mxu0 0
    %2359 = vmatpush1.bf16.msra.mxu0 %v2315
    %2360 = vmatprep.subr.bf16.mxu0 0
    %2361 = vmatpush1.bf16.msra.mxu0 %v2316
    %2362 = vmatprep.subr.bf16.mxu0 0
    %2363 = vmatpush1.bf16.msra.mxu0 %v2317
    %2364 = vmatprep.subr.bf16.mxu0 0
    %2365 = vmatpush1.bf16.msra.mxu0 %v2318
    %2366 = vmatprep.subr.bf16.mxu0 0
    %2367 = vmatpush1.bf16.msra.mxu0 %v2319
    %2368 = vmatprep.mubr.bf16.mxu0 %v1944
    %2369 = vmatmul.mubr.bf16.gmra.mrb[0].mxu0 %v2193
    %v2370 = vpop.f32.mrb[0].mxu0
    %v2371 = vadd.f32 %v2238, %v2370
    %v2372 = vpop.f32.mrb[0].mxu0
    %v2373 = vpop.f32.mrb[0].mxu0
    %v2374 = vadd.f32 %v2238, %v2373
    %v2375 = vpop.f32.mrb[0].mxu0
    %2376 = vmatprep.mubr.bf16.mxu0 %v1945
    %2377 = vmatmul.mubr.bf16.gmra.mrb[0].mxu0 %v2194
    %v2378 = vpop.f32.mrb[0].mxu0
    %v2379 = vadd.f32 %v2238, %v2378
    %v2380 = vpop.f32.mrb[0].mxu0
    %v2381 = vpop.f32.mrb[0].mxu0
    %v2382 = vadd.f32 %v2238, %v2381
    %v2383 = vpop.f32.mrb[0].mxu0
    %2384 = vmatprep.mubr.bf16.mxu0 %v1946
    %2385 = vmatmul.mubr.bf16.gmra.mrb[0].mxu0 %v2195
    %v2386 = vpop.f32.mrb[0].mxu0
    %v2387 = vadd.f32 %v2238, %v2386
    %v2388 = vpop.f32.mrb[0].mxu0
    %v2389 = vpop.f32.mrb[0].mxu0
    %v2390 = vadd.f32 %v2238, %v2389
    %v2391 = vpop.f32.mrb[0].mxu0
    %2392 = vmatprep.mubr.bf16.mxu0 %v1947
    %2393 = vmatmul.mubr.bf16.gmra.mrb[0].mxu0 %v2196
    %v2394 = vpop.f32.mrb[0].mxu0
    %v2395 = vadd.f32 %v2238, %v2394
    %v2396 = vpop.f32.mrb[0].mxu0
    %v2397 = vpop.f32.mrb[0].mxu0
    %v2398 = vadd.f32 %v2238, %v2397
    %v2399 = vpop.f32.mrb[0].mxu0
    %2400 = vmatprep.mubr.bf16.mxu0 %v1948
    %2401 = vmatmul.mubr.bf16.gmra.mrb[0].mxu0 %v2197
    %v2402 = vpop.f32.mrb[0].mxu0
    %v2403 = vadd.f32 %v2238, %v2402
    %v2404 = vpop.f32.mrb[0].mxu0
    %v2405 = vpop.f32.mrb[0].mxu0
    %v2406 = vadd.f32 %v2238, %v2405
    %v2407 = vpop.f32.mrb[0].mxu0
    %2408 = vmatprep.mubr.bf16.mxu0 %v1949
    %2409 = vmatmul.mubr.bf16.gmra.mrb[0].mxu0 %v2198
    %v2410 = vpop.f32.mrb[0].mxu0
    %v2411 = vadd.f32 %v2238, %v2410
    %v2412 = vpop.f32.mrb[0].mxu0
    %v2413 = vpop.f32.mrb[0].mxu0
    %v2414 = vadd.f32 %v2238, %v2413
    %v2415 = vpop.f32.mrb[0].mxu0
    %2416 = vmatprep.mubr.bf16.mxu0 %v1950
    %2417 = vmatmul.mubr.bf16.gmra.mrb[0].mxu0 %v2199
    %v2418 = vpop.f32.mrb[0].mxu0
    %v2419 = vadd.f32 %v2238, %v2418
    %v2420 = vpop.f32.mrb[0].mxu0
    %v2421 = vpop.f32.mrb[0].mxu0
    %v2422 = vadd.f32 %v2238, %v2421
    %v2423 = vpop.f32.mrb[0].mxu0
    %2424 = vmatprep.mubr.bf16.mxu0 %v1951
    %2425 = vmatmul.mubr.bf16.gmra.mrb[0].mxu0 %v2200
    %v2426 = vpop.f32.mrb[0].mxu0
    %v2427 = vadd.f32 %v2238, %v2426
    %v2428 = vpop.f32.mrb[0].mxu0
    %v2429 = vpop.f32.mrb[0].mxu0
    %v2430 = vadd.f32 %v2238, %v2429
    %v2431 = vpop.f32.mrb[0].mxu0
    %2432 = vdwg.mxu0
    %v2433 = vmul.f32 %v2371, %v2371
    %v2434 = vmul.f32 %v2374, %v2374
    %v2435 = vmul.f32 %v2379, %v2379
    %v2436 = vmul.f32 %v2382, %v2382
    %v2437 = vmul.f32 %v2387, %v2387
    %v2438 = vmul.f32 %v2390, %v2390
    %v2439 = vmul.f32 %v2395, %v2395
    %v2440 = vmul.f32 %v2398, %v2398
    %v2441 = vmul.f32 %v2403, %v2403
    %v2442 = vmul.f32 %v2406, %v2406
    %v2443 = vmul.f32 %v2411, %v2411
    %v2444 = vmul.f32 %v2414, %v2414
    %v2445 = vmul.f32 %v2419, %v2419
    %v2446 = vmul.f32 %v2422, %v2422
    %v2447 = vmul.f32 %v2427, %v2427
    %v2448 = vmul.f32 %v2430, %v2430
    %2449 = vadd.xlane.f32.xlu0 %v2433
    %v2450 = vpop.xlane.xlu0 %2449
    %2451 = vadd.xlane.f32.xlu0 %v2434
    %v2452 = vpop.xlane.xlu0 %2451
    %2453 = vadd.xlane.f32.xlu0 %v2435
    %v2454 = vpop.xlane.xlu0 %2453
    %2455 = vadd.xlane.f32.xlu0 %v2436
    %v2456 = vpop.xlane.xlu0 %2455
    %2457 = vadd.xlane.f32.xlu0 %v2437
    %v2458 = vpop.xlane.xlu0 %2457
    %2459 = vadd.xlane.f32.xlu0 %v2438
    %v2460 = vpop.xlane.xlu0 %2459
    %2461 = vadd.xlane.f32.xlu0 %v2439
    %v2462 = vpop.xlane.xlu0 %2461
    %2463 = vadd.xlane.f32.xlu0 %v2440
    %v2464 = vpop.xlane.xlu0 %2463
    %2465 = vadd.xlane.f32.xlu0 %v2441
    %v2466 = vpop.xlane.xlu0 %2465
    %2467 = vadd.xlane.f32.xlu0 %v2442
    %v2468 = vpop.xlane.xlu0 %2467
    %2469 = vadd.xlane.f32.xlu0 %v2443
    %v2470 = vpop.xlane.xlu0 %2469
    %2471 = vadd.xlane.f32.xlu0 %v2444
    %v2472 = vpop.xlane.xlu0 %2471
    %2473 = vadd.xlane.f32.xlu0 %v2445
    %v2474 = vpop.xlane.xlu0 %2473
    %2475 = vadd.xlane.f32.xlu0 %v2446
    %v2476 = vpop.xlane.xlu0 %2475
    %2477 = vadd.xlane.f32.xlu0 %v2447
    %v2478 = vpop.xlane.xlu0 %2477
    %2479 = vadd.xlane.f32.xlu0 %v2448
    %v2480 = vpop.xlane.xlu0 %2479
    %v2481 = vmax.f32 %v2450, 1e-24
    %v2482 = vmax.f32 %v2452, 1e-24
    %v2483 = vmax.f32 %v2454, 1e-24
    %v2484 = vmax.f32 %v2456, 1e-24
    %v2485 = vmax.f32 %v2458, 1e-24
    %v2486 = vmax.f32 %v2460, 1e-24
    %v2487 = vmax.f32 %v2462, 1e-24
    %v2488 = vmax.f32 %v2464, 1e-24
    %v2489 = vmax.f32 %v2466, 1e-24
    %v2490 = vmax.f32 %v2468, 1e-24
    %v2491 = vmax.f32 %v2470, 1e-24
    %v2492 = vmax.f32 %v2472, 1e-24
    %v2493 = vmax.f32 %v2474, 1e-24
    %v2494 = vmax.f32 %v2476, 1e-24
    %v2495 = vmax.f32 %v2478, 1e-24
    %v2496 = vmax.f32 %v2480, 1e-24
    %v2497 = vrsqrt.pop %v2481
    %v2498 = vrsqrt.pop %v2482
    %v2499 = vrsqrt.pop %v2483
    %v2500 = vrsqrt.pop %v2484
    %v2501 = vrsqrt.pop %v2485
    %v2502 = vrsqrt.pop %v2486
    %v2503 = vrsqrt.pop %v2487
    %v2504 = vrsqrt.pop %v2488
    %v2505 = vrsqrt.pop %v2489
    %v2506 = vrsqrt.pop %v2490
    %v2507 = vrsqrt.pop %v2491
    %v2508 = vrsqrt.pop %v2492
    %v2509 = vrsqrt.pop %v2493
    %v2510 = vrsqrt.pop %v2494
    %v2511 = vrsqrt.pop %v2495
    %v2512 = vrsqrt.pop %v2496
    %v2513 = vmul.f32 %v2371, %v2497
    %v2514 = vmul.f32 %v2374, %v2498
    %v2515 = vmul.f32 %v2379, %v2499
    %v2516 = vmul.f32 %v2382, %v2500
    %v2517 = vmul.f32 %v2387, %v2501
    %v2518 = vmul.f32 %v2390, %v2502
    %v2519 = vmul.f32 %v2395, %v2503
    %v2520 = vmul.f32 %v2398, %v2504
    %v2521 = vmul.f32 %v2403, %v2505
    %v2522 = vmul.f32 %v2406, %v2506
    %v2523 = vmul.f32 %v2411, %v2507
    %v2524 = vmul.f32 %v2414, %v2508
    %v2525 = vmul.f32 %v2419, %v2509
    %v2526 = vmul.f32 %v2422, %v2510
    %v2527 = vmul.f32 %v2427, %v2511
    %v2528 = vmul.f32 %v2430, %v2512
    %v2529 = vmax.f32 %v2513, 0.0
    %v2530 = vmax.f32 %v2514, 0.0
    %v2531 = vmax.f32 %v2515, 0.0
    %v2532 = vmax.f32 %v2516, 0.0
    %v2533 = vmax.f32 %v2517, 0.0
    %v2534 = vmax.f32 %v2518, 0.0
    %v2535 = vmax.f32 %v2519, 0.0
    %v2536 = vmax.f32 %v2520, 0.0
    %v2537 = vmax.f32 %v2521, 0.0
    %v2538 = vmax.f32 %v2522, 0.0
    %v2539 = vmax.f32 %v2523, 0.0
    %v2540 = vmax.f32 %v2524, 0.0
    %v2541 = vmax.f32 %v2525, 0.0
    %v2542 = vmax.f32 %v2526, 0.0
    %v2543 = vmax.f32 %v2527, 0.0
    %v2544 = vmax.f32 %v2528, 0.0
    %v2545 = vpack.c.bf16 %v2530, %v2529
    %v2546 = vpack.c.bf16 %v2532, %v2531
    %v2547 = vpack.c.bf16 %v2534, %v2533
    %v2548 = vpack.c.bf16 %v2536, %v2535
    %v2549 = vpack.c.bf16 %v2538, %v2537
    %v2550 = vpack.c.bf16 %v2540, %v2539
    %v2551 = vpack.c.bf16 %v2542, %v2541
    %v2552 = vpack.c.bf16 %v2544, %v2543
    %2553 = vmatprep.subr.bf16.mxu0 0
    %2554 = vmatpush1.bf16.msra.mxu0 %v2545
    %2555 = vmatprep.subr.bf16.mxu0 0
    %2556 = vmatpush1.bf16.msra.mxu0 %v2546
    %2557 = vmatprep.subr.bf16.mxu0 0
    %2558 = vmatpush1.bf16.msra.mxu0 %v2547
    %2559 = vmatprep.subr.bf16.mxu0 0
    %2560 = vmatpush1.bf16.msra.mxu0 %v2548
    %2561 = vmatprep.subr.bf16.mxu0 0
    %2562 = vmatpush1.bf16.msra.mxu0 %v2549
    %2563 = vmatprep.subr.bf16.mxu0 0
    %2564 = vmatpush1.bf16.msra.mxu0 %v2550
    %2565 = vmatprep.subr.bf16.mxu0 0
    %2566 = vmatpush1.bf16.msra.mxu0 %v2551
    %2567 = vmatprep.subr.bf16.mxu0 0
    %2568 = vmatpush1.bf16.msra.mxu0 %v2552
    %2569 = vmatprep.subr.bf16.mxu0 0
    %2570 = vmatpush1.bf16.msra.mxu0 0
    %2571 = vmatprep.subr.bf16.mxu0 0
    %2572 = vmatpush1.bf16.msra.mxu0 0
    %2573 = vmatprep.subr.bf16.mxu0 0
    %2574 = vmatpush1.bf16.msra.mxu0 0
    %2575 = vmatprep.subr.bf16.mxu0 0
    %2576 = vmatpush1.bf16.msra.mxu0 0
    %2577 = vmatprep.subr.bf16.mxu0 0
    %2578 = vmatpush1.bf16.msra.mxu0 0
    %2579 = vmatprep.subr.bf16.mxu0 0
    %2580 = vmatpush1.bf16.msra.mxu0 0
    %2581 = vmatprep.subr.bf16.mxu0 0
    %2582 = vmatpush1.bf16.msra.mxu0 0
    %2583 = vmatprep.subr.bf16.mxu0 0
    %2584 = vmatpush1.bf16.msra.mxu0 0
    %2585 = vmatprep.mubr.bf16.mxu0 0
    %2586 = vmatmul.mubr.bf16.gmra.mrb[0].mxu0 %v1984
    %v2587 = vpop.f32.mrb[0].mxu0
    %v2588 = vadd.f32 0.0, %v2587
    %v2589 = vpop.f32.mrb[0].mxu0
    %v2590 = vpop.f32.mrb[0].mxu0
    %v2591 = vadd.f32 0.0, %v2590
    %v2592 = vpop.f32.mrb[0].mxu0
    %2593 = vmatprep.mubr.bf16.mxu0 0
    %2594 = vmatmul.mubr.bf16.gmra.mrb[0].mxu0 %v1985
    %v2595 = vpop.f32.mrb[0].mxu0
    %v2596 = vadd.f32 0.0, %v2595
    %v2597 = vpop.f32.mrb[0].mxu0
    %v2598 = vpop.f32.mrb[0].mxu0
    %v2599 = vadd.f32 0.0, %v2598
    %v2600 = vpop.f32.mrb[0].mxu0
    %2601 = vmatprep.mubr.bf16.mxu0 0
    %2602 = vmatmul.mubr.bf16.gmra.mrb[0].mxu0 %v1986
    %v2603 = vpop.f32.mrb[0].mxu0
    %v2604 = vadd.f32 0.0, %v2603
    %v2605 = vpop.f32.mrb[0].mxu0
    %v2606 = vpop.f32.mrb[0].mxu0
    %v2607 = vadd.f32 0.0, %v2606
    %v2608 = vpop.f32.mrb[0].mxu0
    %2609 = vmatprep.mubr.bf16.mxu0 0
    %2610 = vmatmul.mubr.bf16.gmra.mrb[0].mxu0 %v1987
    %v2611 = vpop.f32.mrb[0].mxu0
    %v2612 = vadd.f32 0.0, %v2611
    %v2613 = vpop.f32.mrb[0].mxu0
    %v2614 = vpop.f32.mrb[0].mxu0
    %v2615 = vadd.f32 0.0, %v2614
    %v2616 = vpop.f32.mrb[0].mxu0
    %2617 = vmatprep.mubr.bf16.mxu0 0
    %2618 = vmatmul.mubr.bf16.gmra.mrb[0].mxu0 %v1988
    %v2619 = vpop.f32.mrb[0].mxu0
    %v2620 = vadd.f32 0.0, %v2619
    %v2621 = vpop.f32.mrb[0].mxu0
    %v2622 = vpop.f32.mrb[0].mxu0
    %v2623 = vadd.f32 0.0, %v2622
    %v2624 = vpop.f32.mrb[0].mxu0
    %2625 = vmatprep.mubr.bf16.mxu0 0
    %2626 = vmatmul.mubr.bf16.gmra.mrb[0].mxu0 %v1989
    %v2627 = vpop.f32.mrb[0].mxu0
    %v2628 = vadd.f32 0.0, %v2627
    %v2629 = vpop.f32.mrb[0].mxu0
    %v2630 = vpop.f32.mrb[0].mxu0
    %v2631 = vadd.f32 0.0, %v2630
    %v2632 = vpop.f32.mrb[0].mxu0
    %2633 = vmatprep.mubr.bf16.mxu0 0
    %2634 = vmatmul.mubr.bf16.gmra.mrb[0].mxu0 %v1990
    %v2635 = vpop.f32.mrb[0].mxu0
    %v2636 = vadd.f32 0.0, %v2635
    %v2637 = vpop.f32.mrb[0].mxu0
    %v2638 = vpop.f32.mrb[0].mxu0
    %v2639 = vadd.f32 0.0, %v2638
    %v2640 = vpop.f32.mrb[0].mxu0
    %2641 = vmatprep.mubr.bf16.mxu0 0
    %2642 = vmatmul.mubr.bf16.gmra.mrb[0].mxu0 %v1991
    %v2643 = vpop.f32.mrb[0].mxu0
    %v2644 = vadd.f32 0.0, %v2643
    %v2645 = vpop.f32.mrb[0].mxu0
    %v2646 = vpop.f32.mrb[0].mxu0
    %v2647 = vadd.f32 0.0, %v2646
    %v2648 = vpop.f32.mrb[0].mxu0
    %2649 = vdwg.mxu0
    %v2650 = vmul.f32 %v2588, %v2100
    %v2651 = vmul.f32 %v2591, %v2105
    %v2652 = vmul.f32 %v2596, %v2110
    %v2653 = vmul.f32 %v2599, %v2115
    %v2654 = vmul.f32 %v2604, %v2120
    %v2655 = vmul.f32 %v2607, %v2125
    %v2656 = vmul.f32 %v2612, %v2130
    %v2657 = vmul.f32 %v2615, %v2135
    %v2658 = vmul.f32 %v2620, %v2140
    %v2659 = vmul.f32 %v2623, %v2145
    %v2660 = vmul.f32 %v2628, %v2150
    %v2661 = vmul.f32 %v2631, %v2155
    %v2662 = vmul.f32 %v2636, %v2160
    %v2663 = vmul.f32 %v2639, %v2165
    %v2664 = vmul.f32 %v2644, %v2170
    %v2665 = vmul.f32 %v2647, %v2175
    %v2666 = vpack.c.bf16 %v2651, %v2650
    %v2667 = vpack.c.bf16 %v2653, %v2652
    %v2668 = vpack.c.bf16 %v2655, %v2654
    %v2669 = vpack.c.bf16 %v2657, %v2656
    %v2670 = vpack.c.bf16 %v2659, %v2658
    %v2671 = vpack.c.bf16 %v2661, %v2660
    %v2672 = vpack.c.bf16 %v2663, %v2662
    %v2673 = vpack.c.bf16 %v2665, %v2664
    %s2674 = scalar_lea.vmem [#allocation9], 128
    %v2675 = vld [vmem:[%s2674] sm:$0xf]
    %v2676 = vld [vmem:[%s2674 + $0x4] sm:$0xf]
    %v2677 = vld [vmem:[%s2674 + $0x8] sm:$0xf]
    %v2678 = vld [vmem:[%s2674 + $0xc] sm:$0xf]
    %v2679 = vld [vmem:[%s2674 + $0x10] sm:$0xf]
    %v2680 = vld [vmem:[%s2674 + $0x14] sm:$0xf]
    %v2681 = vld [vmem:[%s2674 + $0x18] sm:$0xf]
    %v2682 = vld [vmem:[%s2674 + $0x1c] sm:$0xf]
    %v2683 = vld [vmem:[%s2674 + $0x20] sm:$0xf]
    %v2684 = vld [vmem:[%s2674 + $0x24] sm:$0xf]
    %v2685 = vld [vmem:[%s2674 + $0x28] sm:$0xf]
    %v2686 = vld [vmem:[%s2674 + $0x2c] sm:$0xf]
    %v2687 = vld [vmem:[%s2674 + $0x30] sm:$0xf]
    %v2688 = vld [vmem:[%s2674 + $0x34] sm:$0xf]
    %v2689 = vld [vmem:[%s2674 + $0x38] sm:$0xf]
    %v2690 = vld [vmem:[%s2674 + $0x3c] sm:$0xf]
    %v2691 = vld [vmem:[%s2674 + $0x40] sm:$0xf]
    %v2692 = vld [vmem:[%s2674 + $0x44] sm:$0xf]
    %v2693 = vld [vmem:[%s2674 + $0x48] sm:$0xf]
    %v2694 = vld [vmem:[%s2674 + $0x4c] sm:$0xf]
    %v2695 = vld [vmem:[%s2674 + $0x50] sm:$0xf]
    %v2696 = vld [vmem:[%s2674 + $0x54] sm:$0xf]
    %v2697 = vld [vmem:[%s2674 + $0x58] sm:$0xf]
    %v2698 = vld [vmem:[%s2674 + $0x5c] sm:$0xf]
    %v2699 = vld [vmem:[%s2674 + $0x60] sm:$0xf]
    %v2700 = vld [vmem:[%s2674 + $0x64] sm:$0xf]
    %v2701 = vld [vmem:[%s2674 + $0x68] sm:$0xf]
    %v2702 = vld [vmem:[%s2674 + $0x6c] sm:$0xf]
    %v2703 = vld [vmem:[%s2674 + $0x70] sm:$0xf]
    %v2704 = vld [vmem:[%s2674 + $0x74] sm:$0xf]
    %v2705 = vld [vmem:[%s2674 + $0x78] sm:$0xf]
    %v2706 = vld [vmem:[%s2674 + $0x7c] sm:$0xf]
    %s2707 = scalar_lea.vmem %s16, 1
    %v2708 = vld [vmem:[%s2707] sm:$0x1]
    %v2710 = vlaneseq
    %v2711 = vshrl.u32 %v2710, 7
    %v2712 = vsub.s32 0, %v2711
    %v2713 = vrot.slane %v2708, %v2712
    %v2747 = vunpack.c.l.b16 %v2675
    %v2748 = vunpack.c.l.b16 %v2676
    %v2749 = vunpack.c.l.b16 %v2677
    %v2750 = vunpack.c.l.b16 %v2678
    %v2751 = vunpack.c.l.b16 %v2679
    %v2752 = vunpack.c.l.b16 %v2680
    %v2753 = vunpack.c.l.b16 %v2681
    %v2754 = vunpack.c.l.b16 %v2682
    %v2755 = vunpack.c.l.b16 %v2683
    %v2756 = vunpack.c.l.b16 %v2684
    %v2757 = vunpack.c.l.b16 %v2685
    %v2758 = vunpack.c.l.b16 %v2686
    %v2759 = vunpack.c.l.b16 %v2687
    %v2760 = vunpack.c.l.b16 %v2688
    %v2761 = vunpack.c.l.b16 %v2689
    %v2762 = vunpack.c.l.b16 %v2690
    %v2763 = vunpack.c.l.b16 %v2691
    %v2764 = vunpack.c.l.b16 %v2692
    %v2765 = vunpack.c.l.b16 %v2693
    %v2766 = vunpack.c.l.b16 %v2694
    %v2767 = vunpack.c.l.b16 %v2695
    %v2768 = vunpack.c.l.b16 %v2696
    %v2769 = vunpack.c.l.b16 %v2697
    %v2770 = vunpack.c.l.b16 %v2698
    %v2771 = vunpack.c.l.b16 %v2699
    %v2772 = vunpack.c.l.b16 %v2700
    %v2773 = vunpack.c.l.b16 %v2701
    %v2774 = vunpack.c.l.b16 %v2702
    %v2775 = vunpack.c.l.b16 %v2703
    %v2776 = vunpack.c.l.b16 %v2704
    %v2777 = vunpack.c.l.b16 %v2705
    %v2778 = vunpack.c.l.b16 %v2706
    %v2779 = vpack.c.b16 %v2748, %v2747
    %v2780 = vpack.c.b16 %v2750, %v2749
    %v2781 = vpack.c.b16 %v2752, %v2751
    %v2782 = vpack.c.b16 %v2754, %v2753
    %v2783 = vpack.c.b16 %v2756, %v2755
    %v2784 = vpack.c.b16 %v2758, %v2757
    %v2785 = vpack.c.b16 %v2760, %v2759
    %v2786 = vpack.c.b16 %v2762, %v2761
    %v2787 = vpack.c.b16 %v2764, %v2763
    %v2788 = vpack.c.b16 %v2766, %v2765
    %v2789 = vpack.c.b16 %v2768, %v2767
    %v2790 = vpack.c.b16 %v2770, %v2769
    %v2791 = vpack.c.b16 %v2772, %v2771
    %v2792 = vpack.c.b16 %v2774, %v2773
    %v2793 = vpack.c.b16 %v2776, %v2775
    %v2794 = vpack.c.b16 %v2778, %v2777
    %2811 = vmatprep.subr.bf16.mxu0 0
    %2812 = vmatpush1.bf16.msra.mxu0 %v2779
    %2813 = vmatprep.subr.bf16.mxu0 0
    %2814 = vmatpush1.bf16.msra.mxu0 %v2780
    %2815 = vmatprep.subr.bf16.mxu0 0
    %2816 = vmatpush1.bf16.msra.mxu0 %v2781
    %2817 = vmatprep.subr.bf16.mxu0 0
    %2818 = vmatpush1.bf16.msra.mxu0 %v2782
    %2819 = vmatprep.subr.bf16.mxu0 0
    %2820 = vmatpush1.bf16.msra.mxu0 %v2783
    %2821 = vmatprep.subr.bf16.mxu0 0
    %2822 = vmatpush1.bf16.msra.mxu0 %v2784
    %2823 = vmatprep.subr.bf16.mxu0 0
    %2824 = vmatpush1.bf16.msra.mxu0 %v2785
    %2825 = vmatprep.subr.bf16.mxu0 0
    %2826 = vmatpush1.bf16.msra.mxu0 %v2786
    %2827 = vmatprep.subr.bf16.mxu0 0
    %2828 = vmatpush1.bf16.msra.mxu0 %v2787
    %2829 = vmatprep.subr.bf16.mxu0 0
    %2830 = vmatpush1.bf16.msra.mxu0 %v2788
    %2831 = vmatprep.subr.bf16.mxu0 0
    %2832 = vmatpush1.bf16.msra.mxu0 %v2789
    %2833 = vmatprep.subr.bf16.mxu0 0
    %2834 = vmatpush1.bf16.msra.mxu0 %v2790
    %2835 = vmatprep.subr.bf16.mxu0 0
    %2836 = vmatpush1.bf16.msra.mxu0 %v2791
    %2837 = vmatprep.subr.bf16.mxu0 0
    %2838 = vmatpush1.bf16.msra.mxu0 %v2792
    %2839 = vmatprep.subr.bf16.mxu0 0
    %2840 = vmatpush1.bf16.msra.mxu0 %v2793
    %2841 = vmatprep.subr.bf16.mxu0 0
    %2842 = vmatpush1.bf16.msra.mxu0 %v2794
    %2843 = vmatprep.mubr.bf16.mxu0 %v2545
    %2844 = vmatmul.mubr.bf16.gmra.mrb[0].mxu0 %v2666
    %v2845 = vpop.f32.mrb[0].mxu0
    %v2846 = vadd.f32 %v2713, %v2845
    %v2847 = vpop.f32.mrb[0].mxu0
    %v2848 = vpop.f32.mrb[0].mxu0
    %v2849 = vadd.f32 %v2713, %v2848
    %v2850 = vpop.f32.mrb[0].mxu0
    %2851 = vmatprep.mubr.bf16.mxu0 %v2546
    %2852 = vmatmul.mubr.bf16.gmra.mrb[0].mxu0 %v2667
    %v2853 = vpop.f32.mrb[0].mxu0
    %v2854 = vadd.f32 %v2713, %v2853
    %v2855 = vpop.f32.mrb[0].mxu0
    %v2856 = vpop.f32.mrb[0].mxu0
    %v2857 = vadd.f32 %v2713, %v2856
    %v2858 = vpop.f32.mrb[0].mxu0
    %2859 = vmatprep.mubr.bf16.mxu0 %v2547
    %2860 = vmatmul.mubr.bf16.gmra.mrb[0].mxu0 %v2668
    %v2861 = vpop.f32.mrb[0].mxu0
    %v2862 = vadd.f32 %v2713, %v2861
    %v2863 = vpop.f32.mrb[0].mxu0
    %v2864 = vpop.f32.mrb[0].mxu0
    %v2865 = vadd.f32 %v2713, %v2864
    %v2866 = vpop.f32.mrb[0].mxu0
    %2867 = vmatprep.mubr.bf16.mxu0 %v2548
    %2868 = vmatmul.mubr.bf16.gmra.mrb[0].mxu0 %v2669
    %v2869 = vpop.f32.mrb[0].mxu0
    %v2870 = vadd.f32 %v2713, %v2869
    %v2871 = vpop.f32.mrb[0].mxu0
    %v2872 = vpop.f32.mrb[0].mxu0
    %v2873 = vadd.f32 %v2713, %v2872
    %v2874 = vpop.f32.mrb[0].mxu0
    %2875 = vmatprep.mubr.bf16.mxu0 %v2549
    %2876 = vmatmul.mubr.bf16.gmra.mrb[0].mxu0 %v2670
    %v2877 = vpop.f32.mrb[0].mxu0
    %v2878 = vadd.f32 %v2713, %v2877
    %v2879 = vpop.f32.mrb[0].mxu0
    %v2880 = vpop.f32.mrb[0].mxu0
    %v2881 = vadd.f32 %v2713, %v2880
    %v2882 = vpop.f32.mrb[0].mxu0
    %2883 = vmatprep.mubr.bf16.mxu0 %v2550
    %2884 = vmatmul.mubr.bf16.gmra.mrb[0].mxu0 %v2671
    %v2885 = vpop.f32.mrb[0].mxu0
    %v2886 = vadd.f32 %v2713, %v2885
    %v2887 = vpop.f32.mrb[0].mxu0
    %v2888 = vpop.f32.mrb[0].mxu0
    %v2889 = vadd.f32 %v2713, %v2888
    %v2890 = vpop.f32.mrb[0].mxu0
    %2891 = vmatprep.mubr.bf16.mxu0 %v2551
    %2892 = vmatmul.mubr.bf16.gmra.mrb[0].mxu0 %v2672
    %v2893 = vpop.f32.mrb[0].mxu0
    %v2894 = vadd.f32 %v2713, %v2893
    %v2895 = vpop.f32.mrb[0].mxu0
    %v2896 = vpop.f32.mrb[0].mxu0
    %v2897 = vadd.f32 %v2713, %v2896
    %v2898 = vpop.f32.mrb[0].mxu0
    %2899 = vmatprep.mubr.bf16.mxu0 %v2552
    %2900 = vmatmul.mubr.bf16.gmra.mrb[0].mxu0 %v2673
    %v2901 = vpop.f32.mrb[0].mxu0
    %v2902 = vadd.f32 %v2713, %v2901
    %v2903 = vpop.f32.mrb[0].mxu0
    %v2904 = vpop.f32.mrb[0].mxu0
    %v2905 = vadd.f32 %v2713, %v2904
    %v2906 = vpop.f32.mrb[0].mxu0
    %2907 = vdwg.mxu0
    %v2908 = vmul.f32 %v2846, %v2846
    %v2909 = vmul.f32 %v2849, %v2849
    %v2910 = vmul.f32 %v2854, %v2854
    %v2911 = vmul.f32 %v2857, %v2857
    %v2912 = vmul.f32 %v2862, %v2862
    %v2913 = vmul.f32 %v2865, %v2865
    %v2914 = vmul.f32 %v2870, %v2870
    %v2915 = vmul.f32 %v2873, %v2873
    %v2916 = vmul.f32 %v2878, %v2878
    %v2917 = vmul.f32 %v2881, %v2881
    %v2918 = vmul.f32 %v2886, %v2886
    %v2919 = vmul.f32 %v2889, %v2889
    %v2920 = vmul.f32 %v2894, %v2894
    %v2921 = vmul.f32 %v2897, %v2897
    %v2922 = vmul.f32 %v2902, %v2902
    %v2923 = vmul.f32 %v2905, %v2905
    %2924 = vadd.xlane.f32.xlu0 %v2908
    %v2925 = vpop.xlane.xlu0 %2924
    %2926 = vadd.xlane.f32.xlu0 %v2909
    %v2927 = vpop.xlane.xlu0 %2926
    %2928 = vadd.xlane.f32.xlu0 %v2910
    %v2929 = vpop.xlane.xlu0 %2928
    %2930 = vadd.xlane.f32.xlu0 %v2911
    %v2931 = vpop.xlane.xlu0 %2930
    %2932 = vadd.xlane.f32.xlu0 %v2912
    %v2933 = vpop.xlane.xlu0 %2932
    %2934 = vadd.xlane.f32.xlu0 %v2913
    %v2935 = vpop.xlane.xlu0 %2934
    %2936 = vadd.xlane.f32.xlu0 %v2914
    %v2937 = vpop.xlane.xlu0 %2936
    %2938 = vadd.xlane.f32.xlu0 %v2915
    %v2939 = vpop.xlane.xlu0 %2938
    %2940 = vadd.xlane.f32.xlu0 %v2916
    %v2941 = vpop.xlane.xlu0 %2940
    %2942 = vadd.xlane.f32.xlu0 %v2917
    %v2943 = vpop.xlane.xlu0 %2942
    %2944 = vadd.xlane.f32.xlu0 %v2918
    %v2945 = vpop.xlane.xlu0 %2944
    %2946 = vadd.xlane.f32.xlu0 %v2919
    %v2947 = vpop.xlane.xlu0 %2946
    %2948 = vadd.xlane.f32.xlu0 %v2920
    %v2949 = vpop.xlane.xlu0 %2948
    %2950 = vadd.xlane.f32.xlu0 %v2921
    %v2951 = vpop.xlane.xlu0 %2950
    %2952 = vadd.xlane.f32.xlu0 %v2922
    %v2953 = vpop.xlane.xlu0 %2952
    %2954 = vadd.xlane.f32.xlu0 %v2923
    %v2955 = vpop.xlane.xlu0 %2954
    %v2956 = vmax.f32 %v2925, 1e-24
    %v2957 = vmax.f32 %v2927, 1e-24
    %v2958 = vmax.f32 %v2929, 1e-24
    %v2959 = vmax.f32 %v2931, 1e-24
    %v2960 = vmax.f32 %v2933, 1e-24
    %v2961 = vmax.f32 %v2935, 1e-24
    %v2962 = vmax.f32 %v2937, 1e-24
    %v2963 = vmax.f32 %v2939, 1e-24
    %v2964 = vmax.f32 %v2941, 1e-24
    %v2965 = vmax.f32 %v2943, 1e-24
    %v2966 = vmax.f32 %v2945, 1e-24
    %v2967 = vmax.f32 %v2947, 1e-24
    %v2968 = vmax.f32 %v2949, 1e-24
    %v2969 = vmax.f32 %v2951, 1e-24
    %v2970 = vmax.f32 %v2953, 1e-24
    %v2971 = vmax.f32 %v2955, 1e-24
    %v2972 = vrsqrt.pop %v2956
    %v2973 = vrsqrt.pop %v2957
    %v2974 = vrsqrt.pop %v2958
    %v2975 = vrsqrt.pop %v2959
    %v2976 = vrsqrt.pop %v2960
    %v2977 = vrsqrt.pop %v2961
    %v2978 = vrsqrt.pop %v2962
    %v2979 = vrsqrt.pop %v2963
    %v2980 = vrsqrt.pop %v2964
    %v2981 = vrsqrt.pop %v2965
    %v2982 = vrsqrt.pop %v2966
    %v2983 = vrsqrt.pop %v2967
    %v2984 = vrsqrt.pop %v2968
    %v2985 = vrsqrt.pop %v2969
    %v2986 = vrsqrt.pop %v2970
    %v2987 = vrsqrt.pop %v2971
    %v2988 = vmul.f32 %v2846, %v2972
    %v2989 = vmul.f32 %v2849, %v2973
    %v2990 = vmul.f32 %v2854, %v2974
    %v2991 = vmul.f32 %v2857, %v2975
    %v2992 = vmul.f32 %v2862, %v2976
    %v2993 = vmul.f32 %v2865, %v2977
    %v2994 = vmul.f32 %v2870, %v2978
    %v2995 = vmul.f32 %v2873, %v2979
    %v2996 = vmul.f32 %v2878, %v2980
    %v2997 = vmul.f32 %v2881, %v2981
    %v2998 = vmul.f32 %v2886, %v2982
    %v2999 = vmul.f32 %v2889, %v2983
    %v3000 = vmul.f32 %v2894, %v2984
    %v3001 = vmul.f32 %v2897, %v2985
    %v3002 = vmul.f32 %v2902, %v2986
    %v3003 = vmul.f32 %v2905, %v2987
    %v3004 = vmax.f32 %v2988, 0.0
    %v3005 = vmax.f32 %v2989, 0.0
    %v3006 = vmax.f32 %v2990, 0.0
    %v3007 = vmax.f32 %v2991, 0.0
    %v3008 = vmax.f32 %v2992, 0.0
    %v3009 = vmax.f32 %v2993, 0.0
    %v3010 = vmax.f32 %v2994, 0.0
    %v3011 = vmax.f32 %v2995, 0.0
    %v3012 = vmax.f32 %v2996, 0.0
    %v3013 = vmax.f32 %v2997, 0.0
    %v3014 = vmax.f32 %v2998, 0.0
    %v3015 = vmax.f32 %v2999, 0.0
    %v3016 = vmax.f32 %v3000, 0.0
    %v3017 = vmax.f32 %v3001, 0.0
    %v3018 = vmax.f32 %v3002, 0.0
    %v3019 = vmax.f32 %v3003, 0.0
    %v3020 = vpack.c.bf16 %v3005, %v3004
    %v3021 = vpack.c.bf16 %v3007, %v3006
    %v3022 = vpack.c.bf16 %v3009, %v3008
    %v3023 = vpack.c.bf16 %v3011, %v3010
    %v3024 = vpack.c.bf16 %v3013, %v3012
    %v3025 = vpack.c.bf16 %v3015, %v3014
    %v3026 = vpack.c.bf16 %v3017, %v3016
    %v3027 = vpack.c.bf16 %v3019, %v3018
    %3028 = vmatprep.subr.bf16.mxu0 0
    %3029 = vmatpush1.bf16.msra.mxu0 %v3020
    %3030 = vmatprep.subr.bf16.mxu0 0
    %3031 = vmatpush1.bf16.msra.mxu0 %v3021
    %3032 = vmatprep.subr.bf16.mxu0 0
    %3033 = vmatpush1.bf16.msra.mxu0 %v3022
    %3034 = vmatprep.subr.bf16.mxu0 0
    %3035 = vmatpush1.bf16.msra.mxu0 %v3023
    %3036 = vmatprep.subr.bf16.mxu0 0
    %3037 = vmatpush1.bf16.msra.mxu0 %v3024
    %3038 = vmatprep.subr.bf16.mxu0 0
    %3039 = vmatpush1.bf16.msra.mxu0 %v3025
    %3040 = vmatprep.subr.bf16.mxu0 0
    %3041 = vmatpush1.bf16.msra.mxu0 %v3026
    %3042 = vmatprep.subr.bf16.mxu0 0
    %3043 = vmatpush1.bf16.msra.mxu0 %v3027
    %3044 = vmatprep.subr.bf16.mxu0 0
    %3045 = vmatpush1.bf16.msra.mxu0 0
    %3046 = vmatprep.subr.bf16.mxu0 0
    %3047 = vmatpush1.bf16.msra.mxu0 0
    %3048 = vmatprep.subr.bf16.mxu0 0
    %3049 = vmatpush1.bf16.msra.mxu0 0
    %3050 = vmatprep.subr.bf16.mxu0 0
    %3051 = vmatpush1.bf16.msra.mxu0 0
    %3052 = vmatprep.subr.bf16.mxu0 0
    %3053 = vmatpush1.bf16.msra.mxu0 0
    %3054 = vmatprep.subr.bf16.mxu0 0
    %3055 = vmatpush1.bf16.msra.mxu0 0
    %3056 = vmatprep.subr.bf16.mxu0 0
    %3057 = vmatpush1.bf16.msra.mxu0 0
    %3058 = vmatprep.subr.bf16.mxu0 0
    %3059 = vmatpush1.bf16.msra.mxu0 0
    %3060 = vmatprep.mubr.bf16.mxu0 0
    %3061 = vmatmul.mubr.bf16.gmra.mrb[0].mxu0 %v1984
    %v3062 = vpop.f32.mrb[0].mxu0
    %v3063 = vadd.f32 0.0, %v3062
    %v3064 = vpop.f32.mrb[0].mxu0
    %v3065 = vpop.f32.mrb[0].mxu0
    %v3066 = vadd.f32 0.0, %v3065
    %v3067 = vpop.f32.mrb[0].mxu0
    %3068 = vmatprep.mubr.bf16.mxu0 0
    %3069 = vmatmul.mubr.bf16.gmra.mrb[0].mxu0 %v1985
    %v3070 = vpop.f32.mrb[0].mxu0
    %v3071 = vadd.f32 0.0, %v3070
    %v3072 = vpop.f32.mrb[0].mxu0
    %v3073 = vpop.f32.mrb[0].mxu0
    %v3074 = vadd.f32 0.0, %v3073
    %v3075 = vpop.f32.mrb[0].mxu0
    %3076 = vmatprep.mubr.bf16.mxu0 0
    %3077 = vmatmul.mubr.bf16.gmra.mrb[0].mxu0 %v1986
    %v3078 = vpop.f32.mrb[0].mxu0
    %v3079 = vadd.f32 0.0, %v3078
    %v3080 = vpop.f32.mrb[0].mxu0
    %v3081 = vpop.f32.mrb[0].mxu0
    %v3082 = vadd.f32 0.0, %v3081
    %v3083 = vpop.f32.mrb[0].mxu0
    %3084 = vmatprep.mubr.bf16.mxu0 0
    %3085 = vmatmul.mubr.bf16.gmra.mrb[0].mxu0 %v1987
    %v3086 = vpop.f32.mrb[0].mxu0
    %v3087 = vadd.f32 0.0, %v3086
    %v3088 = vpop.f32.mrb[0].mxu0
    %v3089 = vpop.f32.mrb[0].mxu0
    %v3090 = vadd.f32 0.0, %v3089
    %v3091 = vpop.f32.mrb[0].mxu0
    %3092 = vmatprep.mubr.bf16.mxu0 0
    %3093 = vmatmul.mubr.bf16.gmra.mrb[0].mxu0 %v1988
    %v3094 = vpop.f32.mrb[0].mxu0
    %v3095 = vadd.f32 0.0, %v3094
    %v3096 = vpop.f32.mrb[0].mxu0
    %v3097 = vpop.f32.mrb[0].mxu0
    %v3098 = vadd.f32 0.0, %v3097
    %v3099 = vpop.f32.mrb[0].mxu0
    %3100 = vmatprep.mubr.bf16.mxu0 0
    %3101 = vmatmul.mubr.bf16.gmra.mrb[0].mxu0 %v1989
    %v3102 = vpop.f32.mrb[0].mxu0
    %v3103 = vadd.f32 0.0, %v3102
    %v3104 = vpop.f32.mrb[0].mxu0
    %v3105 = vpop.f32.mrb[0].mxu0
    %v3106 = vadd.f32 0.0, %v3105
    %v3107 = vpop.f32.mrb[0].mxu0
    %3108 = vmatprep.mubr.bf16.mxu0 0
    %3109 = vmatmul.mubr.bf16.gmra.mrb[0].mxu0 %v1990
    %v3110 = vpop.f32.mrb[0].mxu0
    %v3111 = vadd.f32 0.0, %v3110
    %v3112 = vpop.f32.mrb[0].mxu0
    %v3113 = vpop.f32.mrb[0].mxu0
    %v3114 = vadd.f32 0.0, %v3113
    %v3115 = vpop.f32.mrb[0].mxu0
    %3116 = vmatprep.mubr.bf16.mxu0 0
    %3117 = vmatmul.mubr.bf16.gmra.mrb[0].mxu0 %v1991
    %v3118 = vpop.f32.mrb[0].mxu0
    %v3119 = vadd.f32 0.0, %v3118
    %v3120 = vpop.f32.mrb[0].mxu0
    %v3121 = vpop.f32.mrb[0].mxu0
    %v3122 = vadd.f32 0.0, %v3121
    %v3123 = vpop.f32.mrb[0].mxu0
    %3124 = vdwg.mxu0
    %v3125 = vmul.f32 %v3063, %v2100
    %v3126 = vmul.f32 %v3066, %v2105
    %v3127 = vmul.f32 %v3071, %v2110
    %v3128 = vmul.f32 %v3074, %v2115
    %v3129 = vmul.f32 %v3079, %v2120
    %v3130 = vmul.f32 %v3082, %v2125
    %v3131 = vmul.f32 %v3087, %v2130
    %v3132 = vmul.f32 %v3090, %v2135
    %v3133 = vmul.f32 %v3095, %v2140
    %v3134 = vmul.f32 %v3098, %v2145
    %v3135 = vmul.f32 %v3103, %v2150
    %v3136 = vmul.f32 %v3106, %v2155
    %v3137 = vmul.f32 %v3111, %v2160
    %v3138 = vmul.f32 %v3114, %v2165
    %v3139 = vmul.f32 %v3119, %v2170
    %v3140 = vmul.f32 %v3122, %v2175
    %v3141 = vpack.c.bf16 %v3126, %v3125
    %v3142 = vpack.c.bf16 %v3128, %v3127
    %v3143 = vpack.c.bf16 %v3130, %v3129
    %v3144 = vpack.c.bf16 %v3132, %v3131
    %v3145 = vpack.c.bf16 %v3134, %v3133
    %v3146 = vpack.c.bf16 %v3136, %v3135
    %v3147 = vpack.c.bf16 %v3138, %v3137
    %v3148 = vpack.c.bf16 %v3140, %v3139
    %s3149 = scalar_lea.vmem [#allocation9], 256
    %v3150 = vld [vmem:[%s3149] sm:$0xf]
    %v3151 = vld [vmem:[%s3149 + $0x4] sm:$0xf]
    %v3152 = vld [vmem:[%s3149 + $0x8] sm:$0xf]
    %v3153 = vld [vmem:[%s3149 + $0xc] sm:$0xf]
    %v3154 = vld [vmem:[%s3149 + $0x10] sm:$0xf]
    %v3155 = vld [vmem:[%s3149 + $0x14] sm:$0xf]
    %v3156 = vld [vmem:[%s3149 + $0x18] sm:$0xf]
    %v3157 = vld [vmem:[%s3149 + $0x1c] sm:$0xf]
    %v3158 = vld [vmem:[%s3149 + $0x20] sm:$0xf]
    %v3159 = vld [vmem:[%s3149 + $0x24] sm:$0xf]
    %v3160 = vld [vmem:[%s3149 + $0x28] sm:$0xf]
    %v3161 = vld [vmem:[%s3149 + $0x2c] sm:$0xf]
    %v3162 = vld [vmem:[%s3149 + $0x30] sm:$0xf]
    %v3163 = vld [vmem:[%s3149 + $0x34] sm:$0xf]
    %v3164 = vld [vmem:[%s3149 + $0x38] sm:$0xf]
    %v3165 = vld [vmem:[%s3149 + $0x3c] sm:$0xf]
    %v3166 = vld [vmem:[%s3149 + $0x40] sm:$0xf]
    %v3167 = vld [vmem:[%s3149 + $0x44] sm:$0xf]
    %v3168 = vld [vmem:[%s3149 + $0x48] sm:$0xf]
    %v3169 = vld [vmem:[%s3149 + $0x4c] sm:$0xf]
    %v3170 = vld [vmem:[%s3149 + $0x50] sm:$0xf]
    %v3171 = vld [vmem:[%s3149 + $0x54] sm:$0xf]
    %v3172 = vld [vmem:[%s3149 + $0x58] sm:$0xf]
    %v3173 = vld [vmem:[%s3149 + $0x5c] sm:$0xf]
    %v3174 = vld [vmem:[%s3149 + $0x60] sm:$0xf]
    %v3175 = vld [vmem:[%s3149 + $0x64] sm:$0xf]
    %v3176 = vld [vmem:[%s3149 + $0x68] sm:$0xf]
    %v3177 = vld [vmem:[%s3149 + $0x6c] sm:$0xf]
    %v3178 = vld [vmem:[%s3149 + $0x70] sm:$0xf]
    %v3179 = vld [vmem:[%s3149 + $0x74] sm:$0xf]
    %v3180 = vld [vmem:[%s3149 + $0x78] sm:$0xf]
    %v3181 = vld [vmem:[%s3149 + $0x7c] sm:$0xf]
    %s3182 = scalar_lea.vmem %s16, 2
    %v3183 = vld [vmem:[%s3182] sm:$0x1]
    %v3185 = vlaneseq
    %v3186 = vshrl.u32 %v3185, 7
    %v3187 = vsub.s32 0, %v3186
    %v3188 = vrot.slane %v3183, %v3187
    %v3222 = vunpack.c.l.b16 %v3150
    %v3223 = vunpack.c.l.b16 %v3151
    %v3224 = vunpack.c.l.b16 %v3152
    %v3225 = vunpack.c.l.b16 %v3153
    %v3226 = vunpack.c.l.b16 %v3154
    %v3227 = vunpack.c.l.b16 %v3155
    %v3228 = vunpack.c.l.b16 %v3156
    %v3229 = vunpack.c.l.b16 %v3157
    %v3230 = vunpack.c.l.b16 %v3158
    %v3231 = vunpack.c.l.b16 %v3159
    %v3232 = vunpack.c.l.b16 %v3160
    %v3233 = vunpack.c.l.b16 %v3161
    %v3234 = vunpack.c.l.b16 %v3162
    %v3235 = vunpack.c.l.b16 %v3163
    %v3236 = vunpack.c.l.b16 %v3164
    %v3237 = vunpack.c.l.b16 %v3165
    %v3238 = vunpack.c.l.b16 %v3166
    %v3239 = vunpack.c.l.b16 %v3167
    %v3240 = vunpack.c.l.b16 %v3168
    %v3241 = vunpack.c.l.b16 %v3169
    %v3242 = vunpack.c.l.b16 %v3170
    %v3243 = vunpack.c.l.b16 %v3171
    %v3244 = vunpack.c.l.b16 %v3172
    %v3245 = vunpack.c.l.b16 %v3173
    %v3246 = vunpack.c.l.b16 %v3174
    %v3247 = vunpack.c.l.b16 %v3175
    %v3248 = vunpack.c.l.b16 %v3176
    %v3249 = vunpack.c.l.b16 %v3177
    %v3250 = vunpack.c.l.b16 %v3178
    %v3251 = vunpack.c.l.b16 %v3179
    %v3252 = vunpack.c.l.b16 %v3180
    %v3253 = vunpack.c.l.b16 %v3181
    %v3254 = vpack.c.b16 %v3223, %v3222
    %v3255 = vpack.c.b16 %v3225, %v3224
    %v3256 = vpack.c.b16 %v3227, %v3226
    %v3257 = vpack.c.b16 %v3229, %v3228
    %v3258 = vpack.c.b16 %v3231, %v3230
    %v3259 = vpack.c.b16 %v3233, %v3232
    %v3260 = vpack.c.b16 %v3235, %v3234
    %v3261 = vpack.c.b16 %v3237, %v3236
    %v3262 = vpack.c.b16 %v3239, %v3238
    %v3263 = vpack.c.b16 %v3241, %v3240
    %v3264 = vpack.c.b16 %v3243, %v3242
    %v3265 = vpack.c.b16 %v3245, %v3244
    %v3266 = vpack.c.b16 %v3247, %v3246
    %v3267 = vpack.c.b16 %v3249, %v3248
    %v3268 = vpack.c.b16 %v3251, %v3250
    %v3269 = vpack.c.b16 %v3253, %v3252
    %3286 = vmatprep.subr.bf16.mxu0 0
    %3287 = vmatpush1.bf16.msra.mxu0 %v3254
    %3288 = vmatprep.subr.bf16.mxu0 0
    %3289 = vmatpush1.bf16.msra.mxu0 %v3255
    %3290 = vmatprep.subr.bf16.mxu0 0
    %3291 = vmatpush1.bf16.msra.mxu0 %v3256
    %3292 = vmatprep.subr.bf16.mxu0 0
    %3293 = vmatpush1.bf16.msra.mxu0 %v3257
    %3294 = vmatprep.subr.bf16.mxu0 0
    %3295 = vmatpush1.bf16.msra.mxu0 %v3258
    %3296 = vmatprep.subr.bf16.mxu0 0
    %3297 = vmatpush1.bf16.msra.mxu0 %v3259
    %3298 = vmatprep.subr.bf16.mxu0 0
    %3299 = vmatpush1.bf16.msra.mxu0 %v3260
    %3300 = vmatprep.subr.bf16.mxu0 0
    %3301 = vmatpush1.bf16.msra.mxu0 %v3261
    %3302 = vmatprep.subr.bf16.mxu0 0
    %3303 = vmatpush1.bf16.msra.mxu0 %v3262
    %3304 = vmatprep.subr.bf16.mxu0 0
    %3305 = vmatpush1.bf16.msra.mxu0 %v3263
    %3306 = vmatprep.subr.bf16.mxu0 0
    %3307 = vmatpush1.bf16.msra.mxu0 %v3264
    %3308 = vmatprep.subr.bf16.mxu0 0
    %3309 = vmatpush1.bf16.msra.mxu0 %v3265
    %3310 = vmatprep.subr.bf16.mxu0 0
    %3311 = vmatpush1.bf16.msra.mxu0 %v3266
    %3312 = vmatprep.subr.bf16.mxu0 0
    %3313 = vmatpush1.bf16.msra.mxu0 %v3267
    %3314 = vmatprep.subr.bf16.mxu0 0
    %3315 = vmatpush1.bf16.msra.mxu0 %v3268
    %3316 = vmatprep.subr.bf16.mxu0 0
    %3317 = vmatpush1.bf16.msra.mxu0 %v3269
    %3318 = vmatprep.mubr.bf16.mxu0 %v3020
    %3319 = vmatmul.mubr.bf16.gmra.mrb[0].mxu0 %v3141
    %v3320 = vpop.f32.mrb[0].mxu0
    %v3321 = vadd.f32 %v3188, %v3320
    %v3322 = vpop.f32.mrb[0].mxu0
    %v3323 = vpop.f32.mrb[0].mxu0
    %v3324 = vadd.f32 %v3188, %v3323
    %v3325 = vpop.f32.mrb[0].mxu0
    %3326 = vmatprep.mubr.bf16.mxu0 %v3021
    %3327 = vmatmul.mubr.bf16.gmra.mrb[0].mxu0 %v3142
    %v3328 = vpop.f32.mrb[0].mxu0
    %v3329 = vadd.f32 %v3188, %v3328
    %v3330 = vpop.f32.mrb[0].mxu0
    %v3331 = vpop.f32.mrb[0].mxu0
    %v3332 = vadd.f32 %v3188, %v3331
    %v3333 = vpop.f32.mrb[0].mxu0
    %3334 = vmatprep.mubr.bf16.mxu0 %v3022
    %3335 = vmatmul.mubr.bf16.gmra.mrb[0].mxu0 %v3143
    %v3336 = vpop.f32.mrb[0].mxu0
    %v3337 = vadd.f32 %v3188, %v3336
    %v3338 = vpop.f32.mrb[0].mxu0
    %v3339 = vpop.f32.mrb[0].mxu0
    %v3340 = vadd.f32 %v3188, %v3339
    %v3341 = vpop.f32.mrb[0].mxu0
    %3342 = vmatprep.mubr.bf16.mxu0 %v3023
    %3343 = vmatmul.mubr.bf16.gmra.mrb[0].mxu0 %v3144
    %v3344 = vpop.f32.mrb[0].mxu0
    %v3345 = vadd.f32 %v3188, %v3344
    %v3346 = vpop.f32.mrb[0].mxu0
    %v3347 = vpop.f32.mrb[0].mxu0
    %v3348 = vadd.f32 %v3188, %v3347
    %v3349 = vpop.f32.mrb[0].mxu0
    %3350 = vmatprep.mubr.bf16.mxu0 %v3024
    %3351 = vmatmul.mubr.bf16.gmra.mrb[0].mxu0 %v3145
    %v3352 = vpop.f32.mrb[0].mxu0
    %v3353 = vadd.f32 %v3188, %v3352
    %v3354 = vpop.f32.mrb[0].mxu0
    %v3355 = vpop.f32.mrb[0].mxu0
    %v3356 = vadd.f32 %v3188, %v3355
    %v3357 = vpop.f32.mrb[0].mxu0
    %3358 = vmatprep.mubr.bf16.mxu0 %v3025
    %3359 = vmatmul.mubr.bf16.gmra.mrb[0].mxu0 %v3146
    %v3360 = vpop.f32.mrb[0].mxu0
    %v3361 = vadd.f32 %v3188, %v3360
    %v3362 = vpop.f32.mrb[0].mxu0
    %v3363 = vpop.f32.mrb[0].mxu0
    %v3364 = vadd.f32 %v3188, %v3363
    %v3365 = vpop.f32.mrb[0].mxu0
    %3366 = vmatprep.mubr.bf16.mxu0 %v3026
    %3367 = vmatmul.mubr.bf16.gmra.mrb[0].mxu0 %v3147
    %v3368 = vpop.f32.mrb[0].mxu0
    %v3369 = vadd.f32 %v3188, %v3368
    %v3370 = vpop.f32.mrb[0].mxu0
    %v3371 = vpop.f32.mrb[0].mxu0
    %v3372 = vadd.f32 %v3188, %v3371
    %v3373 = vpop.f32.mrb[0].mxu0
    %3374 = vmatprep.mubr.bf16.mxu0 %v3027
    %3375 = vmatmul.mubr.bf16.gmra.mrb[0].mxu0 %v3148
    %v3376 = vpop.f32.mrb[0].mxu0
    %v3377 = vadd.f32 %v3188, %v3376
    %v3378 = vpop.f32.mrb[0].mxu0
    %v3379 = vpop.f32.mrb[0].mxu0
    %v3380 = vadd.f32 %v3188, %v3379
    %v3381 = vpop.f32.mrb[0].mxu0
    %3382 = vdwg.mxu0
    %v3383 = vmul.f32 %v3321, %v3321
    %v3384 = vmul.f32 %v3324, %v3324
    %v3385 = vmul.f32 %v3329, %v3329
    %v3386 = vmul.f32 %v3332, %v3332
    %v3387 = vmul.f32 %v3337, %v3337
    %v3388 = vmul.f32 %v3340, %v3340
    %v3389 = vmul.f32 %v3345, %v3345
    %v3390 = vmul.f32 %v3348, %v3348
    %v3391 = vmul.f32 %v3353, %v3353
    %v3392 = vmul.f32 %v3356, %v3356
    %v3393 = vmul.f32 %v3361, %v3361
    %v3394 = vmul.f32 %v3364, %v3364
    %v3395 = vmul.f32 %v3369, %v3369
    %v3396 = vmul.f32 %v3372, %v3372
    %v3397 = vmul.f32 %v3377, %v3377
    %v3398 = vmul.f32 %v3380, %v3380
    %3399 = vadd.xlane.f32.xlu0 %v3383
    %v3400 = vpop.xlane.xlu0 %3399
    %3401 = vadd.xlane.f32.xlu0 %v3384
    %v3402 = vpop.xlane.xlu0 %3401
    %3403 = vadd.xlane.f32.xlu0 %v3385
    %v3404 = vpop.xlane.xlu0 %3403
    %3405 = vadd.xlane.f32.xlu0 %v3386
    %v3406 = vpop.xlane.xlu0 %3405
    %3407 = vadd.xlane.f32.xlu0 %v3387
    %v3408 = vpop.xlane.xlu0 %3407
    %3409 = vadd.xlane.f32.xlu0 %v3388
    %v3410 = vpop.xlane.xlu0 %3409
    %3411 = vadd.xlane.f32.xlu0 %v3389
    %v3412 = vpop.xlane.xlu0 %3411
    %3413 = vadd.xlane.f32.xlu0 %v3390
    %v3414 = vpop.xlane.xlu0 %3413
    %3415 = vadd.xlane.f32.xlu0 %v3391
    %v3416 = vpop.xlane.xlu0 %3415
    %3417 = vadd.xlane.f32.xlu0 %v3392
    %v3418 = vpop.xlane.xlu0 %3417
    %3419 = vadd.xlane.f32.xlu0 %v3393
    %v3420 = vpop.xlane.xlu0 %3419
    %3421 = vadd.xlane.f32.xlu0 %v3394
    %v3422 = vpop.xlane.xlu0 %3421
    %3423 = vadd.xlane.f32.xlu0 %v3395
    %v3424 = vpop.xlane.xlu0 %3423
    %3425 = vadd.xlane.f32.xlu0 %v3396
    %v3426 = vpop.xlane.xlu0 %3425
    %3427 = vadd.xlane.f32.xlu0 %v3397
    %v3428 = vpop.xlane.xlu0 %3427
    %3429 = vadd.xlane.f32.xlu0 %v3398
    %v3430 = vpop.xlane.xlu0 %3429
    %v3431 = vmax.f32 %v3400, 1e-24
    %v3432 = vmax.f32 %v3402, 1e-24
    %v3433 = vmax.f32 %v3404, 1e-24
    %v3434 = vmax.f32 %v3406, 1e-24
    %v3435 = vmax.f32 %v3408, 1e-24
    %v3436 = vmax.f32 %v3410, 1e-24
    %v3437 = vmax.f32 %v3412, 1e-24
    %v3438 = vmax.f32 %v3414, 1e-24
    %v3439 = vmax.f32 %v3416, 1e-24
    %v3440 = vmax.f32 %v3418, 1e-24
    %v3441 = vmax.f32 %v3420, 1e-24
    %v3442 = vmax.f32 %v3422, 1e-24
    %v3443 = vmax.f32 %v3424, 1e-24
    %v3444 = vmax.f32 %v3426, 1e-24
    %v3445 = vmax.f32 %v3428, 1e-24
    %v3446 = vmax.f32 %v3430, 1e-24
    %v3447 = vrsqrt.pop %v3431
    %v3448 = vrsqrt.pop %v3432
    %v3449 = vrsqrt.pop %v3433
    %v3450 = vrsqrt.pop %v3434
    %v3451 = vrsqrt.pop %v3435
    %v3452 = vrsqrt.pop %v3436
    %v3453 = vrsqrt.pop %v3437
    %v3454 = vrsqrt.pop %v3438
    %v3455 = vrsqrt.pop %v3439
    %v3456 = vrsqrt.pop %v3440
    %v3457 = vrsqrt.pop %v3441
    %v3458 = vrsqrt.pop %v3442
    %v3459 = vrsqrt.pop %v3443
    %v3460 = vrsqrt.pop %v3444
    %v3461 = vrsqrt.pop %v3445
    %v3462 = vrsqrt.pop %v3446
    %v3463 = vmul.f32 %v3321, %v3447
    %v3464 = vmul.f32 %v3324, %v3448
    %v3465 = vmul.f32 %v3329, %v3449
    %v3466 = vmul.f32 %v3332, %v3450
    %v3467 = vmul.f32 %v3337, %v3451
    %v3468 = vmul.f32 %v3340, %v3452
    %v3469 = vmul.f32 %v3345, %v3453
    %v3470 = vmul.f32 %v3348, %v3454
    %v3471 = vmul.f32 %v3353, %v3455
    %v3472 = vmul.f32 %v3356, %v3456
    %v3473 = vmul.f32 %v3361, %v3457
    %v3474 = vmul.f32 %v3364, %v3458
    %v3475 = vmul.f32 %v3369, %v3459
    %v3476 = vmul.f32 %v3372, %v3460
    %v3477 = vmul.f32 %v3377, %v3461
    %v3478 = vmul.f32 %v3380, %v3462
    %3479 = vmatprep.subr.mxu0 0.0
    %3480 = vmatpush1.msra.mxu0 %v3463
    %3481 = vmatprep.subr.mxu0 0.0
    %3482 = vmatpush1.msra.mxu0 %v3464
    %3483 = vmatprep.subr.mxu0 0.0
    %3484 = vmatpush1.msra.mxu0 %v3465
    %3485 = vmatprep.subr.mxu0 0.0
    %3486 = vmatpush1.msra.mxu0 %v3466
    %3487 = vmatprep.subr.mxu0 0.0
    %3488 = vmatpush1.msra.mxu0 %v3467
    %3489 = vmatprep.subr.mxu0 0.0
    %3490 = vmatpush1.msra.mxu0 %v3468
    %3491 = vmatprep.subr.mxu0 0.0
    %3492 = vmatpush1.msra.mxu0 %v3469
    %3493 = vmatprep.subr.mxu0 0.0
    %3494 = vmatpush1.msra.mxu0 %v3470
    %3495 = vmatprep.subr.mxu0 0.0
    %3496 = vmatpush1.msra.mxu0 %v3471
    %3497 = vmatprep.subr.mxu0 0.0
    %3498 = vmatpush1.msra.mxu0 %v3472
    %3499 = vmatprep.subr.mxu0 0.0
    %3500 = vmatpush1.msra.mxu0 %v3473
    %3501 = vmatprep.subr.mxu0 0.0
    %3502 = vmatpush1.msra.mxu0 %v3474
    %3503 = vmatprep.subr.mxu0 0.0
    %3504 = vmatpush1.msra.mxu0 %v3475
    %3505 = vmatprep.subr.mxu0 0.0
    %3506 = vmatpush1.msra.mxu0 %v3476
    %3507 = vmatprep.subr.mxu0 0.0
    %3508 = vmatpush1.msra.mxu0 %v3477
    %3509 = vmatprep.subr.mxu0 0.0
    %3510 = vmatpush1.msra.mxu0 %v3478
    %3511 = vmatprep.subr.mxu0 0.0
    %3512 = vmatpush1.msra.mxu0 0.0
    %3513 = vmatprep.subr.mxu0 0.0
    %3514 = vmatpush1.msra.mxu0 0.0
    %3515 = vmatprep.subr.mxu0 0.0
    %3516 = vmatpush1.msra.mxu0 0.0
    %3517 = vmatprep.subr.mxu0 0.0
    %3518 = vmatpush1.msra.mxu0 0.0
    %3519 = vmatprep.subr.mxu0 0.0
    %3520 = vmatpush1.msra.mxu0 0.0
    %3521 = vmatprep.subr.mxu0 0.0
    %3522 = vmatpush1.msra.mxu0 0.0
    %3523 = vmatprep.subr.mxu0 0.0
    %3524 = vmatpush1.msra.mxu0 0.0
    %3525 = vmatprep.subr.mxu0 0.0
    %3526 = vmatpush1.msra.mxu0 0.0
    %3527 = vmatprep.subr.mxu0 0.0
    %3528 = vmatpush1.msra.mxu0 0.0
    %3529 = vmatprep.subr.mxu0 0.0
    %3530 = vmatpush1.msra.mxu0 0.0
    %3531 = vmatprep.subr.mxu0 0.0
    %3532 = vmatpush1.msra.mxu0 0.0
    %3533 = vmatprep.subr.mxu0 0.0
    %3534 = vmatpush1.msra.mxu0 0.0
    %3535 = vmatprep.subr.mxu0 0.0
    %3536 = vmatpush1.msra.mxu0 0.0
    %3537 = vmatprep.subr.mxu0 0.0
    %3538 = vmatpush1.msra.mxu0 0.0
    %3539 = vmatprep.subr.mxu0 0.0
    %3540 = vmatpush1.msra.mxu0 0.0
    %3541 = vmatprep.subr.mxu0 0.0
    %3542 = vmatpush1.msra.mxu0 0.0
    %3543 = vmatprep.mubr.f32.mxu0 0.0
    %3544 = vmatmul.mubr.f32.gmra.mrb[0].mxu0 %v131
    %v3545 = vpop.f32.mrb[0].mxu0
    %v3546 = vadd.f32 0.0, %v3545
    %v3547 = vpop.f32.mrb[0].mxu0
    %3548 = vdwg.mxu0
    %v3549 = vld [vmem:[%s17] sm:$0x1]
    %v3551 = vlaneseq
    %v3552 = vshrl.u32 %v3551, 7
    %v3553 = vsub.s32 0, %v3552
    %v3554 = vrot.slane %v3549, %v3553
    %v3556 = vmul.f32 %v3546, %v3554
    %3557 = vadd.xlane.f32.xlu0 %v3556
    %v3558 = vpop.xlane.xlu0 %3557
    %v3559 = vld [vmem:[#allocation2] sm:$0x1]
    %v3561 = vlaneseq
    %v3562 = vshrl.u32 %v3561, 7
    %v3563 = vsub.s32 0, %v3562
    %v3564 = vrot.slane %v3559, %v3563
    %v3566 = vadd.f32 %v3558, %v3564
    %3568 = vset.pattern.permute.xlu0 0
    %3569 = vperm.xlu0 %3568, %v3566
    %v3570 = vpop.permute.xlu0 %3569
    %3572 = vst [vmem:[#allocation11] sm:$0xff] %v3570
    // Predicated region
    $region94: #{tpu_custom_call.1} parent=1 // pred_check
      _
    $region95: #{tpu_custom_call.1} parent=1 // pred_check_branch
      %3574 = sbr.rel (0) target = $region97
    $region96: #{tpu_custom_call.1} parent=1 // pred_region
      %s3576 = ssub.s32 128, 128
      %3577 = vsyncadd [#allocation5], %s3576
      %s3579 = sshll.u32 [#allocation11], 4
      %s3580 = int_to_ptr.vmem [resolvable:$true] %s3579
      %3582 = dma.vmem_to_hbm [thread:$0]  %s3580, 128, %s19, [#allocation5]
    $region97: #{tpu_custom_call.1} parent=1 // pred_fallthru
      _
    // Predicated region
    $region98: #{tpu_custom_call.1} parent=1 // pred_check
      _
    $region99: #{tpu_custom_call.1} parent=1 // pred_check_branch
      %3584 = sbr.rel (0) target = $region101
    $region100: #{tpu_custom_call.1} parent=1 // pred_region
      %3585 = dma.done [#allocation5], 128
    $region101: #{tpu_custom_call.1} parent=1 // pred_fallthru
      _
    %3586 = vsyncpa [#allocation4], 1
    %3587 = vsyncpa [#allocation7], 1
    %3588 = vsyncpa [#allocation10], 1
    %3589 = vsyncpa [#allocation5], 1

</llo_original>
